<compile_context>
chip_gen: v6e
topology: v6e:2x2x1
jax: 0.10.0
libtpu: 0.0.40
codegen_flags: <defaults>
</compile_context>

<pallas_src>
import math
import jax
import jax.numpy as jnp
from jax import lax
from jax.experimental import pallas as pl
from jax.experimental.pallas import tpu as pltpu

EMB = 128          # emb_size
HEADS = 4          # heads
HEAD = EMB // HEADS
FF = 4 * EMB       # ff_hidden_mult * emb_size
EPS = 1e-5         # nn.LayerNorm default eps
NEG = -1e30        # finite "minus infinity" for masking (avoids inf-inf NaNs)


def encoder_block_kernel(x_ref, maskb_ref, diag_ref,
                         wqkv_ref, wo_ref, w1_ref, w2_ref,
                         vec_ref, b1_ref, o_ref):
    bt, S, E = x_ref.shape
    M = bt * S
    hd = E // HEADS

    x = x_ref[...].reshape(M, E)                 # (M, E) f32, leading-dim reshape only
    x_bf = x.astype(jnp.bfloat16)

    # additive attention bias: block-diagonal (keeps packed samples independent)
    # + key-position mask, both 0 / -1e30, hoisted out of the head loop.
    bias = diag_ref[...] + maskb_ref[...]        # (M, M) + (1, M) -> (M, M)

    # --- fused Q/K/V projection: one bf16 MXU pass, f32 accumulation ---
    qkv = jnp.dot(x_bf, wqkv_ref[...], preferred_element_type=jnp.float32)   # (M, 3E)
    q = (qkv[:, 0:E] + vec_ref[0:1, :]) * (1.0 / math.sqrt(hd))
    k = qkv[:, E:2 * E] + vec_ref[1:2, :]
    v = qkv[:, 2 * E:3 * E] + vec_ref[2:3, :]

    # --- multi-head attention over the packed rows ---
    attended = jnp.zeros((M, E), jnp.float32)
    for h in range(HEADS):                       # static, unrolled (4 iters)
        lo, hi = h * hd, (h + 1) * hd
        qh = q[:, lo:hi].astype(jnp.bfloat16)    # (M, hd)
        kh = k[:, lo:hi].astype(jnp.bfloat16)
        vh = v[:, lo:hi].astype(jnp.bfloat16)
        # contract on last axes -> no explicit transpose of kh
        s = lax.dot_general(qh, kh, (((1,), (1,)), ((), ())),
                            preferred_element_type=jnp.float32)              # (M, M)
        s = s + bias
        m = jnp.max(s, axis=-1, keepdims=True)
        p = jnp.exp(s - m)
        denom = jnp.sum(p, axis=-1, keepdims=True)
        attn = p * pl.reciprocal(denom, approx=True)                         # EUP divide
        ctx_h = jnp.dot(attn.astype(jnp.bfloat16), vh,
                        preferred_element_type=jnp.float32)                  # (M, hd)
        # accumulate the output projection per head: no lane concatenate
        attended = attended + jnp.dot(ctx_h.astype(jnp.bfloat16),
                                      wo_ref[lo:hi, :],
                                      preferred_element_type=jnp.float32)
    attended = attended + vec_ref[3:4, :]        # output-layer bias

    # --- residual + LayerNorm 1 (f32) ---
    y = attended + x
    mu = jnp.mean(y, axis=-1, keepdims=True)
    var = jnp.mean((y - mu) ** 2, axis=-1, keepdims=True)
    y = (y - mu) * lax.rsqrt(var + EPS) * vec_ref[4:5, :] + vec_ref[5:6, :]

    # --- feed forward: Linear -> ReLU -> Linear (bf16 matmuls, f32 accum) ---
    h1 = jnp.dot(y.astype(jnp.bfloat16), w1_ref[...],
                 preferred_element_type=jnp.float32) + b1_ref[...]
    h1 = jnp.maximum(h1, 0.0)
    ff = jnp.dot(h1.astype(jnp.bfloat16), w2_ref[...],
                 preferred_element_type=jnp.float32) + vec_ref[6:7, :]

    # --- residual + LayerNorm 2 (f32) ---
    z = ff + y
    mu2 = jnp.mean(z, axis=-1, keepdims=True)
    var2 = jnp.mean((z - mu2) ** 2, axis=-1, keepdims=True)
    out = (z - mu2) * lax.rsqrt(var2 + EPS) * vec_ref[7:8, :] + vec_ref[8:9, :]

    o_ref[...] = out.reshape(bt, S, E).astype(o_ref.dtype)


def transformer_encoder_block(x, mask, params, block_batch=None):
    """x: [B, S, E] f32, mask: [B, 1, S] bool, params: 16 weight arrays (PyTorch layout)."""
    B, S, E = x.shape
    assert E == EMB
    (wq, bq, wk, bk, wv, bv, wo, bo, g1, beta1,
     w1, b1, w2, b2, g2, beta2) = params

    # batch tile: aim for ~128 MXU rows per grid step, must divide B.
    if block_batch is None:
        bt = max(1, min(B, 128 // max(1, S)))
        while B % bt:
            bt -= 1
    else:
        bt = block_batch
        assert B % bt == 0
    M = bt * S

    # --- host-side parameter fusion / packing ---
    wqkv = jnp.concatenate([wq, wk, wv], axis=1).astype(jnp.bfloat16)   # (E, 3E)
    wo_b = wo.astype(jnp.bfloat16)
    w1_b = w1.astype(jnp.bfloat16)
    w2_b = w2.astype(jnp.bfloat16)
    vec = jnp.concatenate([bq, bk, bv, bo, g1, beta1, b2, g2, beta2], axis=0)  # (9, E) f32
    b1_p = b1                                                            # (1, FF) f32

    # --- additive attention bias pieces (0 = keep, -1e30 = masked) ---
    maskf = mask.astype(jnp.float32).reshape(1, B * S)
    mask_bias = (1.0 - maskf) * NEG                                      # (1, B*S)
    diag = jnp.kron(jnp.eye(bt, dtype=jnp.float32),
                    jnp.ones((S, S), jnp.float32))
    diag_bias = (1.0 - diag) * NEG                                       # (M, M)

    def full_spec(shape):
        nd = len(shape)
        return pl.BlockSpec(shape, lambda b, nd=nd: (0,) * nd)

    in_specs = [
        pl.BlockSpec((bt, S, E), lambda b: (b, 0, 0)),    # x
        pl.BlockSpec((1, M), lambda b: (0, b)),           # per-column mask bias
        full_spec(diag_bias.shape),                       # block-diagonal bias
        full_spec(wqkv.shape), full_spec(wo_b.shape),
        full_spec(w1_b.shape), full_spec(w2_b.shape),
        full_spec(vec.shape), full_spec(b1_p.shape),
    ]

    return pl.pallas_call(
        encoder_block_kernel,
        out_shape=jax.ShapeDtypeStruct((B, S, E), jnp.float32),
        grid=(B // bt,),
        in_specs=in_specs,
        out_specs=pl.BlockSpec((bt, S, E), lambda b: (b, 0, 0)),
        compiler_params=pltpu.CompilerParams(
            dimension_semantics=("parallel",)),
    )(x, mask_bias, diag_bias, wqkv, wo_b, w1_b, w2_b, vec, b1_p)


def init_params(key):
    ks = jax.random.split(key, 8)
    scale = 0.02
    wq = scale * jax.random.normal(ks[0], (EMB, EMB), jnp.float32)
    wk = scale * jax.random.normal(ks[1], (EMB, EMB), jnp.float32)
    wv = scale * jax.random.normal(ks[2], (EMB, EMB), jnp.float32)
    wo = scale * jax.random.normal(ks[3], (EMB, EMB), jnp.float32)
    bq = 0.01 * jax.random.normal(ks[4], (1, EMB), jnp.float32)
    bk = jnp.zeros((1, EMB), jnp.float32)
    bv = 0.01 * jax.random.normal(ks[5], (1, EMB), jnp.float32)
    bo = jnp.zeros((1, EMB), jnp.float32)
    g1 = jnp.ones((1, EMB), jnp.float32)
    beta1 = jnp.zeros((1, EMB), jnp.float32)
    w1 = scale * jax.random.normal(ks[6], (EMB, FF), jnp.float32)
    b1 = jnp.zeros((1, FF), jnp.float32)
    w2 = scale * jax.random.normal(ks[7], (FF, EMB), jnp.float32)
    b2 = jnp.zeros((1, EMB), jnp.float32)
    g2 = jnp.ones((1, EMB), jnp.float32)
    beta2 = jnp.zeros((1, EMB), jnp.float32)
    return [wq, bq, wk, bk, wv, bv, wo, bo, g1, beta1, w1, b1, w2, b2, g2, beta2]


def reference(x, mask, params):
    """Pure-JAX f32 reference mirroring the PyTorch forward."""
    (wq, bq, wk, bk, wv, bv, wo, bo, g1, beta1,
     w1, b1, w2, b2, g2, beta2) = params
    B, S, E = x.shape
    q = x @ wq + bq
    k = x @ wk + bk
    v = x @ wv + bv

    def split(t):  # (B,S,E) -> (B,H,S,hd)
        return t.reshape(B, S, HEADS, HEAD).transpose(0, 2, 1, 3)

    q, k, v = split(q) / math.sqrt(HEAD), split(k), split(v)
    dot = jnp.einsum("bhqd,bhkd->bhqk", q, k)
    dot = jnp.where(mask[:, None, :, :], dot, -jnp.inf)
    attn = jax.nn.softmax(dot, axis=-1)
    ctx = jnp.einsum("bhqk,bhkd->bhqd", attn, v)
    ctx = ctx.transpose(0, 2, 1, 3).reshape(B, S, E)
    attended = ctx @ wo + bo

    def ln(t, g, b):
        mu = jnp.mean(t, axis=-1, keepdims=True)
        var = jnp.mean((t - mu) ** 2, axis=-1, keepdims=True)
        return (t - mu) * lax.rsqrt(var + EPS) * g + b

    y = ln(attended + x, g1, beta1)
    ff = jnp.maximum(y @ w1 + b1, 0.0) @ w2 + b2
    return ln(ff + y, g2, beta2)


if __name__ == "__main__":
    key = jax.random.PRNGKey(0)
    k_x, k_p = jax.random.split(key)

    B, S = 32, 8                                   # packed 16 samples/grid step, grid=(2,)
    x = jax.random.normal(k_x, (B, S, EMB), jnp.float32)
    mask = jnp.ones((B, 1, S), dtype=bool)
    mask = mask.at[: B // 2, :, S - 2:].set(False)  # mask a couple of key positions

    params = init_params(k_p)

    out = transformer_encoder_block(x, mask, params)
    out = jax.block_until_ready(out)

    ref = reference(x, mask, params)
    assert out.shape == (B, S, EMB)
    # bf16 matmuls + approx reciprocal vs f32 reference -> loosened tolerance
    assert jnp.allclose(out, ref, rtol=2e-2, atol=2e-2), "mismatch vs JAX reference"
    print("KERNEL_OK")
</pallas_src>

<mosaic_0001>
module attributes {stable_mosaic.version = 11 : i64} {
  func.func @encoder_block_kernel(%arg0: i32, %arg1: memref<16x8x128xf32, #tpu.memory_space<vmem>>, %arg2: memref<1x128xf32, #tpu.memory_space<vmem>>, %arg3: memref<128x128xf32, #tpu.memory_space<vmem>>, %arg4: memref<128x384xbf16, #tpu.memory_space<vmem>>, %arg5: memref<128x128xbf16, #tpu.memory_space<vmem>>, %arg6: memref<128x512xbf16, #tpu.memory_space<vmem>>, %arg7: memref<512x128xbf16, #tpu.memory_space<vmem>>, %arg8: memref<9x128xf32, #tpu.memory_space<vmem>>, %arg9: memref<1x512xf32, #tpu.memory_space<vmem>>, %arg10: memref<16x8x128xf32, #tpu.memory_space<vmem>>) attributes {dimension_semantics = [#tpu.dimension_semantics<parallel>], iteration_bounds = array<i64: 2>, scalar_prefetch = 0 : i64, scratch_operands = 0 : i64, tpu.core_type = #tpu.core_type<tc>, window_params = [{transform_indices = @transform_0, window_bounds = array<i64: 16, 8, 128>}, {transform_indices = @transform_1, window_bounds = array<i64: 1, 128>}, {pipeline_mode = #tpu.pipeline_mode<synchronous>, transform_indices = @transform_2, window_bounds = array<i64: 128, 128>}, {pipeline_mode = #tpu.pipeline_mode<synchronous>, transform_indices = @transform_3, window_bounds = array<i64: 128, 384>}, {pipeline_mode = #tpu.pipeline_mode<synchronous>, transform_indices = @transform_4, window_bounds = array<i64: 128, 128>}, {pipeline_mode = #tpu.pipeline_mode<synchronous>, transform_indices = @transform_5, window_bounds = array<i64: 128, 512>}, {pipeline_mode = #tpu.pipeline_mode<synchronous>, transform_indices = @transform_6, window_bounds = array<i64: 512, 128>}, {pipeline_mode = #tpu.pipeline_mode<synchronous>, transform_indices = @transform_7, window_bounds = array<i64: 9, 128>}, {pipeline_mode = #tpu.pipeline_mode<synchronous>, transform_indices = @transform_8, window_bounds = array<i64: 1, 512>}, {transform_indices = @transform_9, window_bounds = array<i64: 16, 8, 128>}]} {
    %c0 = arith.constant 0 : index
    %c0_0 = arith.constant 0 : index
    %c0_1 = arith.constant 0 : index
    %0 = vector.load %arg1[%c0, %c0_0, %c0_1] : memref<16x8x128xf32, #tpu.memory_space<vmem>>, vector<16x8x128xf32>
    %1 = vector.shape_cast %0 : vector<16x8x128xf32> to vector<128x128xf32>
    %2 = arith.truncf %1 : vector<128x128xf32> to vector<128x128xbf16>
    %c0_2 = arith.constant 0 : index
    %c0_3 = arith.constant 0 : index
    %3 = vector.load %arg3[%c0_2, %c0_3] : memref<128x128xf32, #tpu.memory_space<vmem>>, vector<128x128xf32>
    %c0_4 = arith.constant 0 : index
    %c0_5 = arith.constant 0 : index
    %4 = vector.load %arg2[%c0_4, %c0_5] : memref<1x128xf32, #tpu.memory_space<vmem>>, vector<1x128xf32>
    %5 = vector.broadcast %4 : vector<1x128xf32> to vector<128x128xf32>
    %6 = arith.addf %3, %5 : vector<128x128xf32>
    %c0_6 = arith.constant 0 : index
    %c0_7 = arith.constant 0 : index
    %7 = vector.load %arg4[%c0_6, %c0_7] : memref<128x384xbf16, #tpu.memory_space<vmem>>, vector<128x384xbf16>
    %cst = arith.constant dense<0.000000e+00> : vector<128x384xf32>
    %8 = tpu.matmul %2, %7, %cst {dimension_numbers = #tpu.dot_dimension_numbers<[1], [0], [0], [1], [0, 0, 1, 1], [], []>} : vector<128x128xbf16>, vector<128x384xbf16>, vector<128x384xf32> -> vector<128x384xf32>
    %9 = vector.extract_strided_slice %8 {offsets = [0, 0], sizes = [128, 128], strides = [1, 1]} : vector<128x384xf32> to vector<128x128xf32>
    %c0_8 = arith.constant 0 : index
    %c0_9 = arith.constant 0 : index
    %10 = vector.load %arg8[%c0_8, %c0_9] : memref<9x128xf32, #tpu.memory_space<vmem>>, vector<1x128xf32>
    %11 = vector.broadcast %10 : vector<1x128xf32> to vector<128x128xf32>
    %12 = arith.addf %9, %11 : vector<128x128xf32>
    %cst_10 = arith.constant 0.176776692 : f32
    %13 = vector.broadcast %cst_10 : f32 to vector<128x128xf32>
    %14 = arith.mulf %12, %13 : vector<128x128xf32>
    %15 = vector.extract_strided_slice %8 {offsets = [0, 128], sizes = [128, 128], strides = [1, 1]} : vector<128x384xf32> to vector<128x128xf32>
    %c1 = arith.constant 1 : index
    %c0_11 = arith.constant 0 : index
    %16 = vector.load %arg8[%c1, %c0_11] : memref<9x128xf32, #tpu.memory_space<vmem>>, vector<1x128xf32>
    %17 = vector.broadcast %16 : vector<1x128xf32> to vector<128x128xf32>
    %18 = arith.addf %15, %17 : vector<128x128xf32>
    %19 = vector.extract_strided_slice %8 {offsets = [0, 256], sizes = [128, 128], strides = [1, 1]} : vector<128x384xf32> to vector<128x128xf32>
    %c2 = arith.constant 2 : index
    %c0_12 = arith.constant 0 : index
    %20 = vector.load %arg8[%c2, %c0_12] : memref<9x128xf32, #tpu.memory_space<vmem>>, vector<1x128xf32>
    %21 = vector.broadcast %20 : vector<1x128xf32> to vector<128x128xf32>
    %22 = arith.addf %19, %21 : vector<128x128xf32>
    %cst_13 = arith.constant 0.000000e+00 : f32
    %23 = vector.broadcast %cst_13 : f32 to vector<128x128xf32>
    %24 = vector.extract_strided_slice %14 {offsets = [0, 0], sizes = [128, 32], strides = [1, 1]} : vector<128x128xf32> to vector<128x32xf32>
    %25 = arith.truncf %24 : vector<128x32xf32> to vector<128x32xbf16>
    %26 = vector.extract_strided_slice %18 {offsets = [0, 0], sizes = [128, 32], strides = [1, 1]} : vector<128x128xf32> to vector<128x32xf32>
    %27 = arith.truncf %26 : vector<128x32xf32> to vector<128x32xbf16>
    %28 = vector.extract_strided_slice %22 {offsets = [0, 0], sizes = [128, 32], strides = [1, 1]} : vector<128x128xf32> to vector<128x32xf32>
    %29 = arith.truncf %28 : vector<128x32xf32> to vector<128x32xbf16>
    %cst_14 = arith.constant dense<0.000000e+00> : vector<128x128xf32>
    %30 = tpu.matmul %25, %27, %cst_14 {dimension_numbers = #tpu.dot_dimension_numbers<[1], [1], [0], [0], [0, 0, 1, 0], [], []>} : vector<128x32xbf16>, vector<128x32xbf16>, vector<128x128xf32> -> vector<128x128xf32>
    %31 = arith.addf %30, %6 : vector<128x128xf32>
    %cst_15 = arith.constant dense<0xFF800000> : vector<128xf32>
    %32 = vector.multi_reduction <maximumf>, %31, %cst_15 [1] : vector<128x128xf32> to vector<128xf32>
    %33 = vector.shape_cast %32 : vector<128xf32> to vector<128x1xf32>
    %34 = vector.broadcast %33 : vector<128x1xf32> to vector<128x128xf32>
    %35 = arith.subf %31, %34 : vector<128x128xf32>
    %36 = math.exp %35 : vector<128x128xf32>
    %cst_16 = arith.constant dense<0.000000e+00> : vector<128xf32>
    %37 = vector.multi_reduction <add>, %36, %cst_16 [1] : vector<128x128xf32> to vector<128xf32>
    %38 = vector.shape_cast %37 : vector<128xf32> to vector<128x1xf32>
    %39 = tpu.reciprocal %38 {approx = true} : vector<128x1xf32> -> vector<128x1xf32>
    %40 = vector.broadcast %39 : vector<128x1xf32> to vector<128x128xf32>
    %41 = arith.mulf %36, %40 : vector<128x128xf32>
    %42 = arith.truncf %41 : vector<128x128xf32> to vector<128x128xbf16>
    %cst_17 = arith.constant dense<0.000000e+00> : vector<128x32xf32>
    %43 = tpu.matmul %42, %29, %cst_17 {dimension_numbers = #tpu.dot_dimension_numbers<[1], [0], [0], [1], [0, 0, 1, 1], [], []>} : vector<128x128xbf16>, vector<128x32xbf16>, vector<128x32xf32> -> vector<128x32xf32>
    %44 = arith.truncf %43 : vector<128x32xf32> to vector<128x32xbf16>
    %c0_18 = arith.constant 0 : index
    %c0_19 = arith.constant 0 : index
    %45 = vector.load %arg5[%c0_18, %c0_19] : memref<128x128xbf16, #tpu.memory_space<vmem>>, vector<32x128xbf16>
    %cst_20 = arith.constant dense<0.000000e+00> : vector<128x128xf32>
    %46 = tpu.matmul %44, %45, %cst_20 {dimension_numbers = #tpu.dot_dimension_numbers<[1], [0], [0], [1], [0, 0, 1, 1], [], []>} : vector<128x32xbf16>, vector<32x128xbf16>, vector<128x128xf32> -> vector<128x128xf32>
    %47 = arith.addf %23, %46 : vector<128x128xf32>
    %48 = vector.extract_strided_slice %14 {offsets = [0, 32], sizes = [128, 32], strides = [1, 1]} : vector<128x128xf32> to vector<128x32xf32>
    %49 = arith.truncf %48 : vector<128x32xf32> to vector<128x32xbf16>
    %50 = vector.extract_strided_slice %18 {offsets = [0, 32], sizes = [128, 32], strides = [1, 1]} : vector<128x128xf32> to vector<128x32xf32>
    %51 = arith.truncf %50 : vector<128x32xf32> to vector<128x32xbf16>
    %52 = vector.extract_strided_slice %22 {offsets = [0, 32], sizes = [128, 32], strides = [1, 1]} : vector<128x128xf32> to vector<128x32xf32>
    %53 = arith.truncf %52 : vector<128x32xf32> to vector<128x32xbf16>
    %cst_21 = arith.constant dense<0.000000e+00> : vector<128x128xf32>
    %54 = tpu.matmul %49, %51, %cst_21 {dimension_numbers = #tpu.dot_dimension_numbers<[1], [1], [0], [0], [0, 0, 1, 0], [], []>} : vector<128x32xbf16>, vector<128x32xbf16>, vector<128x128xf32> -> vector<128x128xf32>
    %55 = arith.addf %54, %6 : vector<128x128xf32>
    %cst_22 = arith.constant dense<0xFF800000> : vector<128xf32>
    %56 = vector.multi_reduction <maximumf>, %55, %cst_22 [1] : vector<128x128xf32> to vector<128xf32>
    %57 = vector.shape_cast %56 : vector<128xf32> to vector<128x1xf32>
    %58 = vector.broadcast %57 : vector<128x1xf32> to vector<128x128xf32>
    %59 = arith.subf %55, %58 : vector<128x128xf32>
    %60 = math.exp %59 : vector<128x128xf32>
    %cst_23 = arith.constant dense<0.000000e+00> : vector<128xf32>
    %61 = vector.multi_reduction <add>, %60, %cst_23 [1] : vector<128x128xf32> to vector<128xf32>
    %62 = vector.shape_cast %61 : vector<128xf32> to vector<128x1xf32>
    %63 = tpu.reciprocal %62 {approx = true} : vector<128x1xf32> -> vector<128x1xf32>
    %64 = vector.broadcast %63 : vector<128x1xf32> to vector<128x128xf32>
    %65 = arith.mulf %60, %64 : vector<128x128xf32>
    %66 = arith.truncf %65 : vector<128x128xf32> to vector<128x128xbf16>
    %cst_24 = arith.constant dense<0.000000e+00> : vector<128x32xf32>
    %67 = tpu.matmul %66, %53, %cst_24 {dimension_numbers = #tpu.dot_dimension_numbers<[1], [0], [0], [1], [0, 0, 1, 1], [], []>} : vector<128x128xbf16>, vector<128x32xbf16>, vector<128x32xf32> -> vector<128x32xf32>
    %68 = arith.truncf %67 : vector<128x32xf32> to vector<128x32xbf16>
    %c32 = arith.constant 32 : index
    %c0_25 = arith.constant 0 : index
    %69 = vector.load %arg5[%c32, %c0_25] : memref<128x128xbf16, #tpu.memory_space<vmem>>, vector<32x128xbf16>
    %cst_26 = arith.constant dense<0.000000e+00> : vector<128x128xf32>
    %70 = tpu.matmul %68, %69, %cst_26 {dimension_numbers = #tpu.dot_dimension_numbers<[1], [0], [0], [1], [0, 0, 1, 1], [], []>} : vector<128x32xbf16>, vector<32x128xbf16>, vector<128x128xf32> -> vector<128x128xf32>
    %71 = arith.addf %47, %70 : vector<128x128xf32>
    %72 = vector.extract_strided_slice %14 {offsets = [0, 64], sizes = [128, 32], strides = [1, 1]} : vector<128x128xf32> to vector<128x32xf32>
    %73 = arith.truncf %72 : vector<128x32xf32> to vector<128x32xbf16>
    %74 = vector.extract_strided_slice %18 {offsets = [0, 64], sizes = [128, 32], strides = [1, 1]} : vector<128x128xf32> to vector<128x32xf32>
    %75 = arith.truncf %74 : vector<128x32xf32> to vector<128x32xbf16>
    %76 = vector.extract_strided_slice %22 {offsets = [0, 64], sizes = [128, 32], strides = [1, 1]} : vector<128x128xf32> to vector<128x32xf32>
    %77 = arith.truncf %76 : vector<128x32xf32> to vector<128x32xbf16>
    %cst_27 = arith.constant dense<0.000000e+00> : vector<128x128xf32>
    %78 = tpu.matmul %73, %75, %cst_27 {dimension_numbers = #tpu.dot_dimension_numbers<[1], [1], [0], [0], [0, 0, 1, 0], [], []>} : vector<128x32xbf16>, vector<128x32xbf16>, vector<128x128xf32> -> vector<128x128xf32>
    %79 = arith.addf %78, %6 : vector<128x128xf32>
    %cst_28 = arith.constant dense<0xFF800000> : vector<128xf32>
    %80 = vector.multi_reduction <maximumf>, %79, %cst_28 [1] : vector<128x128xf32> to vector<128xf32>
    %81 = vector.shape_cast %80 : vector<128xf32> to vector<128x1xf32>
    %82 = vector.broadcast %81 : vector<128x1xf32> to vector<128x128xf32>
    %83 = arith.subf %79, %82 : vector<128x128xf32>
    %84 = math.exp %83 : vector<128x128xf32>
    %cst_29 = arith.constant dense<0.000000e+00> : vector<128xf32>
    %85 = vector.multi_reduction <add>, %84, %cst_29 [1] : vector<128x128xf32> to vector<128xf32>
    %86 = vector.shape_cast %85 : vector<128xf32> to vector<128x1xf32>
    %87 = tpu.reciprocal %86 {approx = true} : vector<128x1xf32> -> vector<128x1xf32>
    %88 = vector.broadcast %87 : vector<128x1xf32> to vector<128x128xf32>
    %89 = arith.mulf %84, %88 : vector<128x128xf32>
    %90 = arith.truncf %89 : vector<128x128xf32> to vector<128x128xbf16>
    %cst_30 = arith.constant dense<0.000000e+00> : vector<128x32xf32>
    %91 = tpu.matmul %90, %77, %cst_30 {dimension_numbers = #tpu.dot_dimension_numbers<[1], [0], [0], [1], [0, 0, 1, 1], [], []>} : vector<128x128xbf16>, vector<128x32xbf16>, vector<128x32xf32> -> vector<128x32xf32>
    %92 = arith.truncf %91 : vector<128x32xf32> to vector<128x32xbf16>
    %c64 = arith.constant 64 : index
    %c0_31 = arith.constant 0 : index
    %93 = vector.load %arg5[%c64, %c0_31] : memref<128x128xbf16, #tpu.memory_space<vmem>>, vector<32x128xbf16>
    %cst_32 = arith.constant dense<0.000000e+00> : vector<128x128xf32>
    %94 = tpu.matmul %92, %93, %cst_32 {dimension_numbers = #tpu.dot_dimension_numbers<[1], [0], [0], [1], [0, 0, 1, 1], [], []>} : vector<128x32xbf16>, vector<32x128xbf16>, vector<128x128xf32> -> vector<128x128xf32>
    %95 = arith.addf %71, %94 : vector<128x128xf32>
    %96 = vector.extract_strided_slice %14 {offsets = [0, 96], sizes = [128, 32], strides = [1, 1]} : vector<128x128xf32> to vector<128x32xf32>
    %97 = arith.truncf %96 : vector<128x32xf32> to vector<128x32xbf16>
    %98 = vector.extract_strided_slice %18 {offsets = [0, 96], sizes = [128, 32], strides = [1, 1]} : vector<128x128xf32> to vector<128x32xf32>
    %99 = arith.truncf %98 : vector<128x32xf32> to vector<128x32xbf16>
    %100 = vector.extract_strided_slice %22 {offsets = [0, 96], sizes = [128, 32], strides = [1, 1]} : vector<128x128xf32> to vector<128x32xf32>
    %101 = arith.truncf %100 : vector<128x32xf32> to vector<128x32xbf16>
    %cst_33 = arith.constant dense<0.000000e+00> : vector<128x128xf32>
    %102 = tpu.matmul %97, %99, %cst_33 {dimension_numbers = #tpu.dot_dimension_numbers<[1], [1], [0], [0], [0, 0, 1, 0], [], []>} : vector<128x32xbf16>, vector<128x32xbf16>, vector<128x128xf32> -> vector<128x128xf32>
    %103 = arith.addf %102, %6 : vector<128x128xf32>
    %cst_34 = arith.constant dense<0xFF800000> : vector<128xf32>
    %104 = vector.multi_reduction <maximumf>, %103, %cst_34 [1] : vector<128x128xf32> to vector<128xf32>
    %105 = vector.shape_cast %104 : vector<128xf32> to vector<128x1xf32>
    %106 = vector.broadcast %105 : vector<128x1xf32> to vector<128x128xf32>
    %107 = arith.subf %103, %106 : vector<128x128xf32>
    %108 = math.exp %107 : vector<128x128xf32>
    %cst_35 = arith.constant dense<0.000000e+00> : vector<128xf32>
    %109 = vector.multi_reduction <add>, %108, %cst_35 [1] : vector<128x128xf32> to vector<128xf32>
    %110 = vector.shape_cast %109 : vector<128xf32> to vector<128x1xf32>
    %111 = tpu.reciprocal %110 {approx = true} : vector<128x1xf32> -> vector<128x1xf32>
    %112 = vector.broadcast %111 : vector<128x1xf32> to vector<128x128xf32>
    %113 = arith.mulf %108, %112 : vector<128x128xf32>
    %114 = arith.truncf %113 : vector<128x128xf32> to vector<128x128xbf16>
    %cst_36 = arith.constant dense<0.000000e+00> : vector<128x32xf32>
    %115 = tpu.matmul %114, %101, %cst_36 {dimension_numbers = #tpu.dot_dimension_numbers<[1], [0], [0], [1], [0, 0, 1, 1], [], []>} : vector<128x128xbf16>, vector<128x32xbf16>, vector<128x32xf32> -> vector<128x32xf32>
    %116 = arith.truncf %115 : vector<128x32xf32> to vector<128x32xbf16>
    %c96 = arith.constant 96 : index
    %c0_37 = arith.constant 0 : index
    %117 = vector.load %arg5[%c96, %c0_37] : memref<128x128xbf16, #tpu.memory_space<vmem>>, vector<32x128xbf16>
    %cst_38 = arith.constant dense<0.000000e+00> : vector<128x128xf32>
    %118 = tpu.matmul %116, %117, %cst_38 {dimension_numbers = #tpu.dot_dimension_numbers<[1], [0], [0], [1], [0, 0, 1, 1], [], []>} : vector<128x32xbf16>, vector<32x128xbf16>, vector<128x128xf32> -> vector<128x128xf32>
    %119 = arith.addf %95, %118 : vector<128x128xf32>
    %c3 = arith.constant 3 : index
    %c0_39 = arith.constant 0 : index
    %120 = vector.load %arg8[%c3, %c0_39] : memref<9x128xf32, #tpu.memory_space<vmem>>, vector<1x128xf32>
    %121 = vector.broadcast %120 : vector<1x128xf32> to vector<128x128xf32>
    %122 = arith.addf %119, %121 : vector<128x128xf32>
    %123 = arith.addf %122, %1 : vector<128x128xf32>
    %cst_40 = arith.constant dense<0.000000e+00> : vector<128xf32>
    %124 = vector.multi_reduction <add>, %123, %cst_40 [1] : vector<128x128xf32> to vector<128xf32>
    %125 = vector.shape_cast %124 : vector<128xf32> to vector<128x1xf32>
    %cst_41 = arith.constant 1.280000e+02 : f32
    %126 = vector.broadcast %cst_41 : f32 to vector<128x1xf32>
    %127 = arith.divf %125, %126 : vector<128x1xf32>
    %128 = vector.broadcast %127 : vector<128x1xf32> to vector<128x128xf32>
    %129 = arith.subf %123, %128 : vector<128x128xf32>
    %130 = arith.mulf %129, %129 : vector<128x128xf32>
    %cst_42 = arith.constant dense<0.000000e+00> : vector<128xf32>
    %131 = vector.multi_reduction <add>, %130, %cst_42 [1] : vector<128x128xf32> to vector<128xf32>
    %132 = vector.shape_cast %131 : vector<128xf32> to vector<128x1xf32>
    %cst_43 = arith.constant 1.280000e+02 : f32
    %133 = vector.broadcast %cst_43 : f32 to vector<128x1xf32>
    %134 = arith.divf %132, %133 : vector<128x1xf32>
    %135 = vector.broadcast %127 : vector<128x1xf32> to vector<128x128xf32>
    %136 = arith.subf %123, %135 : vector<128x128xf32>
    %cst_44 = arith.constant 9.99999974E-6 : f32
    %137 = vector.broadcast %cst_44 : f32 to vector<128x1xf32>
    %138 = arith.addf %134, %137 : vector<128x1xf32>
    %139 = math.rsqrt %138 : vector<128x1xf32>
    %140 = vector.broadcast %139 : vector<128x1xf32> to vector<128x128xf32>
    %141 = arith.mulf %136, %140 : vector<128x128xf32>
    %c4 = arith.constant 4 : index
    %c0_45 = arith.constant 0 : index
    %142 = vector.load %arg8[%c4, %c0_45] : memref<9x128xf32, #tpu.memory_space<vmem>>, vector<1x128xf32>
    %143 = vector.broadcast %142 : vector<1x128xf32> to vector<128x128xf32>
    %144 = arith.mulf %141, %143 : vector<128x128xf32>
    %c5 = arith.constant 5 : index
    %c0_46 = arith.constant 0 : index
    %145 = vector.load %arg8[%c5, %c0_46] : memref<9x128xf32, #tpu.memory_space<vmem>>, vector<1x128xf32>
    %146 = vector.broadcast %145 : vector<1x128xf32> to vector<128x128xf32>
    %147 = arith.addf %144, %146 : vector<128x128xf32>
    %148 = arith.truncf %147 : vector<128x128xf32> to vector<128x128xbf16>
    %c0_47 = arith.constant 0 : index
    %c0_48 = arith.constant 0 : index
    %149 = vector.load %arg6[%c0_47, %c0_48] : memref<128x512xbf16, #tpu.memory_space<vmem>>, vector<128x512xbf16>
    %cst_49 = arith.constant dense<0.000000e+00> : vector<128x512xf32>
    %150 = tpu.matmul %148, %149, %cst_49 {dimension_numbers = #tpu.dot_dimension_numbers<[1], [0], [0], [1], [0, 0, 1, 1], [], []>} : vector<128x128xbf16>, vector<128x512xbf16>, vector<128x512xf32> -> vector<128x512xf32>
    %c0_50 = arith.constant 0 : index
    %c0_51 = arith.constant 0 : index
    %151 = vector.load %arg9[%c0_50, %c0_51] : memref<1x512xf32, #tpu.memory_space<vmem>>, vector<1x512xf32>
    %152 = vector.broadcast %151 : vector<1x512xf32> to vector<128x512xf32>
    %153 = arith.addf %150, %152 : vector<128x512xf32>
    %cst_52 = arith.constant 0.000000e+00 : f32
    %154 = vector.broadcast %cst_52 : f32 to vector<128x512xf32>
    %155 = arith.maximumf %153, %154 : vector<128x512xf32>
    %156 = arith.truncf %155 : vector<128x512xf32> to vector<128x512xbf16>
    %c0_53 = arith.constant 0 : index
    %c0_54 = arith.constant 0 : index
    %157 = vector.load %arg7[%c0_53, %c0_54] : memref<512x128xbf16, #tpu.memory_space<vmem>>, vector<512x128xbf16>
    %cst_55 = arith.constant dense<0.000000e+00> : vector<128x128xf32>
    %158 = tpu.matmul %156, %157, %cst_55 {dimension_numbers = #tpu.dot_dimension_numbers<[1], [0], [0], [1], [0, 0, 1, 1], [], []>} : vector<128x512xbf16>, vector<512x128xbf16>, vector<128x128xf32> -> vector<128x128xf32>
    %c6 = arith.constant 6 : index
    %c0_56 = arith.constant 0 : index
    %159 = vector.load %arg8[%c6, %c0_56] : memref<9x128xf32, #tpu.memory_space<vmem>>, vector<1x128xf32>
    %160 = vector.broadcast %159 : vector<1x128xf32> to vector<128x128xf32>
    %161 = arith.addf %158, %160 : vector<128x128xf32>
    %162 = arith.addf %161, %147 : vector<128x128xf32>
    %cst_57 = arith.constant dense<0.000000e+00> : vector<128xf32>
    %163 = vector.multi_reduction <add>, %162, %cst_57 [1] : vector<128x128xf32> to vector<128xf32>
    %164 = vector.shape_cast %163 : vector<128xf32> to vector<128x1xf32>
    %cst_58 = arith.constant 1.280000e+02 : f32
    %165 = vector.broadcast %cst_58 : f32 to vector<128x1xf32>
    %166 = arith.divf %164, %165 : vector<128x1xf32>
    %167 = vector.broadcast %166 : vector<128x1xf32> to vector<128x128xf32>
    %168 = arith.subf %162, %167 : vector<128x128xf32>
    %169 = arith.mulf %168, %168 : vector<128x128xf32>
    %cst_59 = arith.constant dense<0.000000e+00> : vector<128xf32>
    %170 = vector.multi_reduction <add>, %169, %cst_59 [1] : vector<128x128xf32> to vector<128xf32>
    %171 = vector.shape_cast %170 : vector<128xf32> to vector<128x1xf32>
    %cst_60 = arith.constant 1.280000e+02 : f32
    %172 = vector.broadcast %cst_60 : f32 to vector<128x1xf32>
    %173 = arith.divf %171, %172 : vector<128x1xf32>
    %174 = vector.broadcast %166 : vector<128x1xf32> to vector<128x128xf32>
    %175 = arith.subf %162, %174 : vector<128x128xf32>
    %cst_61 = arith.constant 9.99999974E-6 : f32
    %176 = vector.broadcast %cst_61 : f32 to vector<128x1xf32>
    %177 = arith.addf %173, %176 : vector<128x1xf32>
    %178 = math.rsqrt %177 : vector<128x1xf32>
    %179 = vector.broadcast %178 : vector<128x1xf32> to vector<128x128xf32>
    %180 = arith.mulf %175, %179 : vector<128x128xf32>
    %c7 = arith.constant 7 : index
    %c0_62 = arith.constant 0 : index
    %181 = vector.load %arg8[%c7, %c0_62] : memref<9x128xf32, #tpu.memory_space<vmem>>, vector<1x128xf32>
    %182 = vector.broadcast %181 : vector<1x128xf32> to vector<128x128xf32>
    %183 = arith.mulf %180, %182 : vector<128x128xf32>
    %c8 = arith.constant 8 : index
    %c0_63 = arith.constant 0 : index
    %184 = vector.load %arg8[%c8, %c0_63] : memref<9x128xf32, #tpu.memory_space<vmem>>, vector<1x128xf32>
    %185 = vector.broadcast %184 : vector<1x128xf32> to vector<128x128xf32>
    %186 = arith.addf %183, %185 : vector<128x128xf32>
    %187 = vector.shape_cast %186 : vector<128x128xf32> to vector<16x8x128xf32>
    %c0_64 = arith.constant 0 : index
    %c0_65 = arith.constant 0 : index
    %c0_66 = arith.constant 0 : index
    %188 = vector.load %arg10[%c0_64, %c0_65, %c0_66] : memref<16x8x128xf32, #tpu.memory_space<vmem>>, vector<16x8x128xf32>
    tpu.vector_store %arg10[%c0_64, %c0_65, %c0_66], %187 {strides = array<i32>} : memref<16x8x128xf32, #tpu.memory_space<vmem>>, vector<16x8x128xf32>,
    return
  }
  func.func @transform_0(%arg0: i32) -> (i32, i32, i32) {
    %c0_i32 = arith.constant 0 : i32
    %c0_i32_0 = arith.constant 0 : i32
    %c0_i32_1 = arith.constant 0 : i32
    return %arg0, %c0_i32, %c0_i32_0 : i32, i32, i32
  }
  func.func @transform_1(%arg0: i32) -> (i32, i32) {
    %c0_i32 = arith.constant 0 : i32
    %c0_i32_0 = arith.constant 0 : i32
    return %c0_i32, %arg0 : i32, i32
  }
  func.func @transform_2(%arg0: i32) -> (i32, i32) {
    %c0_i32 = arith.constant 0 : i32
    %c0_i32_0 = arith.constant 0 : i32
    %c0_i32_1 = arith.constant 0 : i32
    return %c0_i32, %c0_i32_0 : i32, i32
  }
  func.func @transform_3(%arg0: i32) -> (i32, i32) {
    %c0_i32 = arith.constant 0 : i32
    %c0_i32_0 = arith.constant 0 : i32
    %c0_i32_1 = arith.constant 0 : i32
    return %c0_i32, %c0_i32_0 : i32, i32
  }
  func.func @transform_4(%arg0: i32) -> (i32, i32) {
    %c0_i32 = arith.constant 0 : i32
    %c0_i32_0 = arith.constant 0 : i32
    %c0_i32_1 = arith.constant 0 : i32
    return %c0_i32, %c0_i32_0 : i32, i32
  }
  func.func @transform_5(%arg0: i32) -> (i32, i32) {
    %c0_i32 = arith.constant 0 : i32
    %c0_i32_0 = arith.constant 0 : i32
    %c0_i32_1 = arith.constant 0 : i32
    return %c0_i32, %c0_i32_0 : i32, i32
  }
  func.func @transform_6(%arg0: i32) -> (i32, i32) {
    %c0_i32 = arith.constant 0 : i32
    %c0_i32_0 = arith.constant 0 : i32
    %c0_i32_1 = arith.constant 0 : i32
    return %c0_i32, %c0_i32_0 : i32, i32
  }
  func.func @transform_7(%arg0: i32) -> (i32, i32) {
    %c0_i32 = arith.constant 0 : i32
    %c0_i32_0 = arith.constant 0 : i32
    %c0_i32_1 = arith.constant 0 : i32
    return %c0_i32, %c0_i32_0 : i32, i32
  }
  func.func @transform_8(%arg0: i32) -> (i32, i32) {
    %c0_i32 = arith.constant 0 : i32
    %c0_i32_0 = arith.constant 0 : i32
    %c0_i32_1 = arith.constant 0 : i32
    return %c0_i32, %c0_i32_0 : i32, i32
  }
  func.func @transform_9(%arg0: i32) -> (i32, i32, i32) {
    %c0_i32 = arith.constant 0 : i32
    %c0_i32_0 = arith.constant 0 : i32
    %c0_i32_1 = arith.constant 0 : i32
    return %arg0, %c0_i32, %c0_i32_0 : i32, i32, i32
  }
}

</mosaic_0001>

<llo_original>
// kernel: tpu_custom_call.1
$region0: #{tpu_custom_call.1}
  #allocation0 [shape = 'u32[]', space=smem, size = 0x4, offset = 0x4, fixed_abs, tag = 'smem constant byte address 0x4 - core index']
  #allocation1 [shape = 'u32[144,128]{1,0:T(1,128)}', space=vmem, size = 0x12000, scoped, tag = 'internal scratch']
  %s0 = inlined_call_operand.hbm [shape: f32[32,8,128], index: 0, kind: input, shape index: {}]
  %s1 = inlined_call_operand.hbm [shape: f32[1,256], index: 1, kind: input, shape index: {}]
  %s2 = inlined_call_operand.hbm [shape: f32[128,128], index: 2, kind: input, shape index: {}]
  %s3 = inlined_call_operand.hbm [shape: bf16[128,384], index: 3, kind: input, shape index: {}]
  %s4 = inlined_call_operand.hbm [shape: bf16[128,128], index: 4, kind: input, shape index: {}]
  %s5 = inlined_call_operand.hbm [shape: bf16[128,512], index: 5, kind: input, shape index: {}]
  %s6 = inlined_call_operand.hbm [shape: bf16[512,128], index: 6, kind: input, shape index: {}]
  %s7 = inlined_call_operand.hbm [shape: f32[9,128], index: 7, kind: input, shape index: {}]
  %s8 = inlined_call_operand.vmem [shape: f32[1,512], index: 8, kind: input, shape index: {}]
  %s9 = inlined_call_operand.hbm [shape: f32[32,8,128], index: 9, kind: output, shape index: {}]
  %s10 = sld [smem:[#allocation0]]
  $region101: #{tpu_custom_call.1} parent=0
    _
  %s12 = ssub.s32 1, %s10
  %s13 = scalar_select 0, %s12, %s10
  $region1: #{tpu_custom_call.1} parent=0
    #allocation2 [shape = 'u8[131072]{0}', space=vmem, size = 0x20000, scoped, tag = 'input window, operand 0']
    #allocation3 [shape = 's32[2]{0}', space=sflag, size = 0x8, scoped, tag = 'scoped memory for tpu_custom_call.1']
    #allocation4 [shape = 's32[2]{0}', space=sflag, size = 0x8, scoped, tag = 'scoped memory for tpu_custom_call.1']
    #allocation5 [shape = 'u8[1024]{0}', space=vmem, size = 0x400, scoped, tag = 'input window, operand 1']
    #allocation6 [shape = 's32[2]{0}', space=sflag, size = 0x8, scoped, tag = 'scoped memory for tpu_custom_call.1']
    #allocation7 [shape = 'u8[65536]{0}', space=vmem, size = 0x10000, scoped, tag = 'input window, operand 2, single buffered']
    #allocation8 [shape = 'u8[98304]{0}', space=vmem, size = 0x18000, scoped, tag = 'input window, operand 3, single buffered']
    #allocation9 [shape = 's32[1]{0}', space=sflag, size = 0x4, scoped, tag = 'scoped memory for tpu_custom_call.1']
    #allocation10 [shape = 'u8[32768]{0}', space=vmem, size = 0x8000, scoped, tag = 'input window, operand 4, single buffered']
    #allocation11 [shape = 'u8[131072]{0}', space=vmem, size = 0x20000, scoped, tag = 'input window, operand 5, single buffered']
    #allocation12 [shape = 's32[1]{0}', space=sflag, size = 0x4, scoped, tag = 'scoped memory for tpu_custom_call.1']
    #allocation13 [shape = 'u8[131072]{0}', space=vmem, size = 0x20000, scoped, tag = 'input window, operand 6, single buffered']
    #allocation14 [shape = 'u8[8192]{0}', space=vmem, size = 0x2000, scoped, tag = 'input window, operand 7, single buffered']
    #allocation15 [shape = 's32[1]{0}', space=sflag, size = 0x4, scoped, tag = 'scoped memory for tpu_custom_call.1']
    #allocation16 [shape = 'u8[131072]{0}', space=vmem, size = 0x20000, scoped, tag = 'output window, operand 0']
    %14 = vsyncpa [#allocation3], 0
    %s15 = scalar_lea.sflag [#allocation3], 1
    %16 = vsyncpa %s15, 0
    %17 = vsyncpa [#allocation6], 0
    %s18 = scalar_lea.sflag [#allocation6], 1
    %19 = vsyncpa %s18, 0
    %20 = vsyncpa [#allocation9], 0
    %21 = vsyncpa [#allocation12], 0
    %22 = vsyncpa [#allocation15], 0
    %23 = vsyncpa [#allocation4], 0
    %s24 = scalar_lea.sflag [#allocation4], 1
    %25 = vsyncpa %s24, 0
    loop: start=0, step=1, limit=4
    $region2: #{tpu_custom_call.1} parent=1 // loop_pre_header
      _
    $region3: #{tpu_custom_call.1} parent=1 // loop_header
      %s27 = sphi 0, %s31
      %p28 = scmp.ge.s32.totalorder %s27, 4
      %s37 = sphi 0, %s39
      %s40 = sphi 0, %s37
      %s41 = sphi 0, %s40
      %s57 = sphi 0, %s41
      %s63 = sphi 0, %s65
      %s66 = sphi 0, %s63
      %s67 = sphi 0, %s66
      %s83 = sphi 0, %s67
      %s87 = sphi 0, %s87
      %s89 = sphi 0, %s87
      %s90 = sphi 0, %s89
      %s104 = sphi 0, %s90
      %s108 = sphi 0, %s108
      %s110 = sphi 0, %s108
      %s111 = sphi 0, %s110
      %s125 = sphi 0, %s111
      %s129 = sphi 0, %s129
      %s131 = sphi 0, %s129
      %s132 = sphi 0, %s131
      %s146 = sphi 0, %s132
      %s150 = sphi 0, %s150
      %s152 = sphi 0, %s150
      %s153 = sphi 0, %s152
      %s167 = sphi 0, %s153
      %s171 = sphi 0, %s171
      %s173 = sphi 0, %s171
      %s174 = sphi 0, %s173
      %s188 = sphi 0, %s174
      %s192 = sphi 0, %s192
      %s194 = sphi 0, %s192
      %s195 = sphi 0, %s194
      %s209 = sphi 0, %s195
      %s213 = sphi 0, %s213
      %s215 = sphi 0, %s213
      %s216 = sphi 0, %s215
      %s230 = sphi 0, %s216
      %s236 = sphi 0, %s238
      %s239 = sphi 0, %s236
      %s240 = sphi 0, %s239
      %s256 = sphi 0, %s240
    $region4: #{tpu_custom_call.1} parent=1 // loop_header_branch
      %30 = sbr.rel (%p28) target = $region8
    $region5: #{tpu_custom_call.1} parent=1 // loop_body
      %s32 = ssub.s32 %s27, 1
      %s33 = ssub.s32 %s27, 2
      %s34 = sadd.s32 %s27, 1
      %s35 = ssub.s32 %s27, %s34
      %p36 = scmp.eq.s32.totalorder %s35, 0
      %s38 = sadd.s32 %s37, 1
      %s39 = scalar_select %p36, %s37, %s38
      %p42 = pneg %p36
      %p43 = scmp.eq.s32.totalorder %s27, 1
      %p44 = por %p42, %p43
      %p45 = scmp.ne.s32.totalorder %s37, %s40
      %p46 = scmp.eq.s32.totalorder %s27, 0
      %p47 = por %p45, %p46
      %p48 = scmp.ne.s32.totalorder %s37, %s40
      %p49 = scmp.eq.s32.totalorder %s32, 1
      %p50 = por %p48, %p49
      %p51 = scmp.ne.s32.totalorder %s40, %s41
      %p52 = scmp.eq.s32.totalorder %s32, 0
      %p53 = por %p51, %p52
      %p54 = scmp.ne.s32.totalorder %s40, %s41
      %p55 = scmp.eq.s32.totalorder %s33, 1
      %p56 = por %p54, %p55
      %p58 = scmp.ne.s32.totalorder %s41, %s57
      %p59 = scmp.eq.s32.totalorder %s33, 0
      %p60 = por %p58, %p59
      %s61 = ssub.s32 %s27, %s34
      %p62 = scmp.eq.s32.totalorder %s61, 0
      %s64 = sadd.s32 %s63, 1
      %s65 = scalar_select %p62, %s63, %s64
      %p68 = pneg %p62
      %p69 = scmp.eq.s32.totalorder %s27, 1
      %p70 = por %p68, %p69
      %p71 = scmp.ne.s32.totalorder %s63, %s66
      %p72 = scmp.eq.s32.totalorder %s27, 0
      %p73 = por %p71, %p72
      %p74 = scmp.ne.s32.totalorder %s63, %s66
      %p75 = scmp.eq.s32.totalorder %s32, 1
      %p76 = por %p74, %p75
      %p77 = scmp.ne.s32.totalorder %s66, %s67
      %p78 = scmp.eq.s32.totalorder %s32, 0
      %p79 = por %p77, %p78
      %p80 = scmp.ne.s32.totalorder %s66, %s67
      %p81 = scmp.eq.s32.totalorder %s33, 1
      %p82 = por %p80, %p81
      %p84 = scmp.ne.s32.totalorder %s67, %s83
      %p85 = scmp.eq.s32.totalorder %s33, 0
      %p86 = por %p84, %p85
      %s88 = sadd.s32 %s87, 1
      %p91 = scmp.eq.s32.totalorder %s27, 1
      %p92 = scmp.ne.s32.totalorder %s87, %s89
      %p93 = scmp.eq.s32.totalorder %s27, 0
      %p94 = por %p92, %p93
      %p95 = scmp.ne.s32.totalorder %s87, %s89
      %p96 = scmp.eq.s32.totalorder %s32, 1
      %p97 = por %p95, %p96
      %p98 = scmp.ne.s32.totalorder %s89, %s90
      %p99 = scmp.eq.s32.totalorder %s32, 0
      %p100 = por %p98, %p99
      %p101 = scmp.ne.s32.totalorder %s89, %s90
      %p102 = scmp.eq.s32.totalorder %s33, 1
      %p103 = por %p101, %p102
      %p105 = scmp.ne.s32.totalorder %s90, %s104
      %p106 = scmp.eq.s32.totalorder %s33, 0
      %p107 = por %p105, %p106
      %s109 = sadd.s32 %s108, 1
      %p112 = scmp.eq.s32.totalorder %s27, 1
      %p113 = scmp.ne.s32.totalorder %s108, %s110
      %p114 = scmp.eq.s32.totalorder %s27, 0
      %p115 = por %p113, %p114
      %p116 = scmp.ne.s32.totalorder %s108, %s110
      %p117 = scmp.eq.s32.totalorder %s32, 1
      %p118 = por %p116, %p117
      %p119 = scmp.ne.s32.totalorder %s110, %s111
      %p120 = scmp.eq.s32.totalorder %s32, 0
      %p121 = por %p119, %p120
      %p122 = scmp.ne.s32.totalorder %s110, %s111
      %p123 = scmp.eq.s32.totalorder %s33, 1
      %p124 = por %p122, %p123
      %p126 = scmp.ne.s32.totalorder %s111, %s125
      %p127 = scmp.eq.s32.totalorder %s33, 0
      %p128 = por %p126, %p127
      %s130 = sadd.s32 %s129, 1
      %p133 = scmp.eq.s32.totalorder %s27, 1
      %p134 = scmp.ne.s32.totalorder %s129, %s131
      %p135 = scmp.eq.s32.totalorder %s27, 0
      %p136 = por %p134, %p135
      %p137 = scmp.ne.s32.totalorder %s129, %s131
      %p138 = scmp.eq.s32.totalorder %s32, 1
      %p139 = por %p137, %p138
      %p140 = scmp.ne.s32.totalorder %s131, %s132
      %p141 = scmp.eq.s32.totalorder %s32, 0
      %p142 = por %p140, %p141
      %p143 = scmp.ne.s32.totalorder %s131, %s132
      %p144 = scmp.eq.s32.totalorder %s33, 1
      %p145 = por %p143, %p144
      %p147 = scmp.ne.s32.totalorder %s132, %s146
      %p148 = scmp.eq.s32.totalorder %s33, 0
      %p149 = por %p147, %p148
      %s151 = sadd.s32 %s150, 1
      %p154 = scmp.eq.s32.totalorder %s27, 1
      %p155 = scmp.ne.s32.totalorder %s150, %s152
      %p156 = scmp.eq.s32.totalorder %s27, 0
      %p157 = por %p155, %p156
      %p158 = scmp.ne.s32.totalorder %s150, %s152
      %p159 = scmp.eq.s32.totalorder %s32, 1
      %p160 = por %p158, %p159
      %p161 = scmp.ne.s32.totalorder %s152, %s153
      %p162 = scmp.eq.s32.totalorder %s32, 0
      %p163 = por %p161, %p162
      %p164 = scmp.ne.s32.totalorder %s152, %s153
      %p165 = scmp.eq.s32.totalorder %s33, 1
      %p166 = por %p164, %p165
      %p168 = scmp.ne.s32.totalorder %s153, %s167
      %p169 = scmp.eq.s32.totalorder %s33, 0
      %p170 = por %p168, %p169
      %s172 = sadd.s32 %s171, 1
      %p175 = scmp.eq.s32.totalorder %s27, 1
      %p176 = scmp.ne.s32.totalorder %s171, %s173
      %p177 = scmp.eq.s32.totalorder %s27, 0
      %p178 = por %p176, %p177
      %p179 = scmp.ne.s32.totalorder %s171, %s173
      %p180 = scmp.eq.s32.totalorder %s32, 1
      %p181 = por %p179, %p180
      %p182 = scmp.ne.s32.totalorder %s173, %s174
      %p183 = scmp.eq.s32.totalorder %s32, 0
      %p184 = por %p182, %p183
      %p185 = scmp.ne.s32.totalorder %s173, %s174
      %p186 = scmp.eq.s32.totalorder %s33, 1
      %p187 = por %p185, %p186
      %p189 = scmp.ne.s32.totalorder %s174, %s188
      %p190 = scmp.eq.s32.totalorder %s33, 0
      %p191 = por %p189, %p190
      %s193 = sadd.s32 %s192, 1
      %p196 = scmp.eq.s32.totalorder %s27, 1
      %p197 = scmp.ne.s32.totalorder %s192, %s194
      %p198 = scmp.eq.s32.totalorder %s27, 0
      %p199 = por %p197, %p198
      %p200 = scmp.ne.s32.totalorder %s192, %s194
      %p201 = scmp.eq.s32.totalorder %s32, 1
      %p202 = por %p200, %p201
      %p203 = scmp.ne.s32.totalorder %s194, %s195
      %p204 = scmp.eq.s32.totalorder %s32, 0
      %p205 = por %p203, %p204
      %p206 = scmp.ne.s32.totalorder %s194, %s195
      %p207 = scmp.eq.s32.totalorder %s33, 1
      %p208 = por %p206, %p207
      %p210 = scmp.ne.s32.totalorder %s195, %s209
      %p211 = scmp.eq.s32.totalorder %s33, 0
      %p212 = por %p210, %p211
      %s214 = sadd.s32 %s213, 1
      %p217 = scmp.eq.s32.totalorder %s27, 1
      %p218 = scmp.ne.s32.totalorder %s213, %s215
      %p219 = scmp.eq.s32.totalorder %s27, 0
      %p220 = por %p218, %p219
      %p221 = scmp.ne.s32.totalorder %s213, %s215
      %p222 = scmp.eq.s32.totalorder %s32, 1
      %p223 = por %p221, %p222
      %p224 = scmp.ne.s32.totalorder %s215, %s216
      %p225 = scmp.eq.s32.totalorder %s32, 0
      %p226 = por %p224, %p225
      %p227 = scmp.ne.s32.totalorder %s215, %s216
      %p228 = scmp.eq.s32.totalorder %s33, 1
      %p229 = por %p227, %p228
      %p231 = scmp.ne.s32.totalorder %s216, %s230
      %p232 = scmp.eq.s32.totalorder %s33, 0
      %p233 = por %p231, %p232
      %s234 = ssub.s32 %s27, %s34
      %p235 = scmp.eq.s32.totalorder %s234, 0
      %s237 = sadd.s32 %s236, 1
      %s238 = scalar_select %p235, %s236, %s237
      %p241 = pneg %p235
      %p242 = scmp.eq.s32.totalorder %s27, 1
      %p243 = por %p241, %p242
      %p244 = scmp.ne.s32.totalorder %s236, %s239
      %p245 = scmp.eq.s32.totalorder %s27, 0
      %p246 = por %p244, %p245
      %p247 = scmp.ne.s32.totalorder %s236, %s239
      %p248 = scmp.eq.s32.totalorder %s32, 1
      %p249 = por %p247, %p248
      %p250 = scmp.ne.s32.totalorder %s239, %s240
      %p251 = scmp.eq.s32.totalorder %s32, 0
      %p252 = por %p250, %p251
      %p253 = scmp.ne.s32.totalorder %s239, %s240
      %p254 = scmp.eq.s32.totalorder %s33, 1
      %p255 = por %p253, %p254
      %p257 = scmp.ne.s32.totalorder %s240, %s256
      %p258 = scmp.eq.s32.totalorder %s33, 0
      %p259 = por %p257, %p258
      %p260 = scmp.le.s32.totalorder 1, %s27
      %p261 = scmp.lt.s32.totalorder %s27, 3
      %p262 = pnand %p260, %p261
      %p263 = pneg %p262
      // Predicated region
      $region9: #{tpu_custom_call.1} parent=5 // pred_check
        _
      $region10: #{tpu_custom_call.1} parent=5 // pred_check_branch
        %265 = sbr.rel (%p262) target = $region12
      $region11: #{tpu_custom_call.1} parent=5 // pred_region
        %s266 = ssub.s32 %s27, 1
        // Predicated region
        $region13: #{tpu_custom_call.1} parent=11 // pred_check
          %p267 = pneg %p100
        $region14: #{tpu_custom_call.1} parent=11 // pred_check_branch
          %269 = sbr.rel (%p267) target = $region16
        $region15: #{tpu_custom_call.1} parent=11 // pred_region
          %s271 = ssub.s32 2048, 2048
          %272 = vsyncadd [#allocation6], %s271
          %s273 = sshll.u32 [#allocation7], 4
          %s274 = int_to_ptr.vmem [resolvable:$true] %s273
          %279 = dma.hbm_to_vmem [thread:$0]  %s2, 2048, %s274, [#allocation6], 128, 128, 8
        $region16: #{tpu_custom_call.1} parent=11 // pred_fallthru
          _
        // Predicated region
        $region17: #{tpu_custom_call.1} parent=11 // pred_check
          %p280 = pneg %p121
        $region18: #{tpu_custom_call.1} parent=11 // pred_check_branch
          %282 = sbr.rel (%p280) target = $region20
        $region19: #{tpu_custom_call.1} parent=11 // pred_region
          %s284 = ssub.s32 3072, 3072
          %285 = vsyncadd [#allocation9], %s284
          %s286 = sshll.u32 [#allocation8], 4
          %s287 = int_to_ptr.vmem [resolvable:$true] %s286
          %292 = dma.hbm_to_vmem [thread:$0]  %s3, 3072, %s287, [#allocation9], 192, 192, 12
        $region20: #{tpu_custom_call.1} parent=11 // pred_fallthru
          _
        // Predicated region
        $region21: #{tpu_custom_call.1} parent=11 // pred_check
          %p293 = pneg %p142
        $region22: #{tpu_custom_call.1} parent=11 // pred_check_branch
          %295 = sbr.rel (%p293) target = $region24
        $region23: #{tpu_custom_call.1} parent=11 // pred_region
          %s297 = ssub.s32 1024, 1024
          %298 = vsyncadd [#allocation9], %s297
          %s299 = sshll.u32 [#allocation10], 4
          %s300 = int_to_ptr.vmem [resolvable:$true] %s299
          %305 = dma.hbm_to_vmem [thread:$0]  %s4, 1024, %s300, [#allocation9], 64, 64, 4
        $region24: #{tpu_custom_call.1} parent=11 // pred_fallthru
          _
        // Predicated region
        $region25: #{tpu_custom_call.1} parent=11 // pred_check
          %p306 = pneg %p163
        $region26: #{tpu_custom_call.1} parent=11 // pred_check_branch
          %308 = sbr.rel (%p306) target = $region28
        $region27: #{tpu_custom_call.1} parent=11 // pred_region
          %s310 = ssub.s32 4096, 4096
          %311 = vsyncadd [#allocation12], %s310
          %s312 = sshll.u32 [#allocation11], 4
          %s313 = int_to_ptr.vmem [resolvable:$true] %s312
          %318 = dma.hbm_to_vmem [thread:$0]  %s5, 4096, %s313, [#allocation12], 256, 256, 16
        $region28: #{tpu_custom_call.1} parent=11 // pred_fallthru
          _
        // Predicated region
        $region29: #{tpu_custom_call.1} parent=11 // pred_check
          %p319 = pneg %p184
        $region30: #{tpu_custom_call.1} parent=11 // pred_check_branch
          %321 = sbr.rel (%p319) target = $region32
        $region31: #{tpu_custom_call.1} parent=11 // pred_region
          %s323 = ssub.s32 4096, 4096
          %324 = vsyncadd [#allocation12], %s323
          %s325 = sshll.u32 [#allocation13], 4
          %s326 = int_to_ptr.vmem [resolvable:$true] %s325
          %331 = dma.hbm_to_vmem [thread:$0]  %s6, 4096, %s326, [#allocation12], 64, 64, 4
        $region32: #{tpu_custom_call.1} parent=11 // pred_fallthru
          _
        // Predicated region
        $region33: #{tpu_custom_call.1} parent=11 // pred_check
          %p332 = pneg %p205
        $region34: #{tpu_custom_call.1} parent=11 // pred_check_branch
          %334 = sbr.rel (%p332) target = $region36
        $region35: #{tpu_custom_call.1} parent=11 // pred_region
          %s336 = ssub.s32 256, 256
          %337 = vsyncadd [#allocation15], %s336
          %s338 = sshll.u32 [#allocation14], 4
          %s339 = int_to_ptr.vmem [resolvable:$true] %s338
          %344 = dma.hbm_to_vmem [thread:$0]  %s7, 256, %s339, [#allocation15], 128, 128, 8
        $region36: #{tpu_custom_call.1} parent=11 // pred_fallthru
          _
        // Predicated region
        $region37: #{tpu_custom_call.1} parent=11 // pred_check
          %p345 = pneg %p226
        $region38: #{tpu_custom_call.1} parent=11 // pred_check_branch
          %347 = sbr.rel (%p345) target = $region40
        $region39: #{tpu_custom_call.1} parent=11 // pred_region
          _
        $region40: #{tpu_custom_call.1} parent=11 // pred_fallthru
          _
      $region12: #{tpu_custom_call.1} parent=5 // pred_fallthru
        _
      %p348 = scmp.lt.s32.totalorder %s27, 2
      // Predicated region
      $region41: #{tpu_custom_call.1} parent=5 // pred_check
        %p349 = pneg %p348
      $region42: #{tpu_custom_call.1} parent=5 // pred_check_branch
        %351 = sbr.rel (%p349) target = $region44
      $region43: #{tpu_custom_call.1} parent=5 // pred_region
        // Predicated region
        $region45: #{tpu_custom_call.1} parent=43 // pred_check
          %p352 = pneg %p47
        $region46: #{tpu_custom_call.1} parent=43 // pred_check_branch
          %354 = sbr.rel (%p352) target = $region48
        $region47: #{tpu_custom_call.1} parent=43 // pred_region
          %s355 = sand.u32 %s37, 1
          %s356 = scalar_lea.sflag [#allocation3], %s355
          %s357 = sand.u32 %s37, 1
          %s358 = smul.addr %s357, 128
          %s359 = scalar_lea.vmem [#allocation2], %s358
          %s360 = smul.u32 16, %s27
          %s362 = ssub.s32 2048, 2048
          %363 = vsyncadd %s356, %s362
          %s364 = smul.addr %s360, 128
          %s365 = scalar_lea.hbm %s0, %s364
          %s366 = sshll.u32 %s359, 4
          %s367 = int_to_ptr.vmem [resolvable:$true] %s366
          %372 = dma.hbm_to_vmem [thread:$0]  %s365, 2048, %s367, %s356, 128, 128, 8
        $region48: #{tpu_custom_call.1} parent=43 // pred_fallthru
          _
        // Predicated region
        $region49: #{tpu_custom_call.1} parent=43 // pred_check
          %p373 = pneg %p73
        $region50: #{tpu_custom_call.1} parent=43 // pred_check_branch
          %375 = sbr.rel (%p373) target = $region52
        $region51: #{tpu_custom_call.1} parent=43 // pred_region
          %s376 = sand.u32 %s27, 1
          %s377 = scalar_lea.sflag [#allocation6], %s376
          %s378 = sand.u32 %s63, 1
          %s379 = scalar_lea.vmem [#allocation5], %s378
          %s381 = ssub.s32 16, 16
          %382 = vsyncadd %s377, %s381
          %s383 = smul.addr %s27, 16
          %s384 = scalar_lea.hbm %s1, %s383
          %s386 = sshll.u32 %s379, 4
          %s387 = int_to_ptr.vmem [resolvable:$true] %s386
          %389 = dma.hbm_to_vmem [thread:$0]  %s384, 16, %s387, %s377
        $region52: #{tpu_custom_call.1} parent=43 // pred_fallthru
          _
      $region44: #{tpu_custom_call.1} parent=5 // pred_fallthru
        _
      %p390 = scmp.le.s32.totalorder 1, %s27
      %p391 = scmp.lt.s32.totalorder %s27, 3
      %p392 = pnand %p390, %p391
      %p393 = pneg %p392
      // Predicated region
      $region53: #{tpu_custom_call.1} parent=5 // pred_check
        _
      $region54: #{tpu_custom_call.1} parent=5 // pred_check_branch
        %395 = sbr.rel (%p392) target = $region56
      $region55: #{tpu_custom_call.1} parent=5 // pred_region
        %s396 = ssub.s32 %s27, 1
        %s397 = sand.u32 %s40, 1
        %s398 = scalar_lea.sflag [#allocation3], %s397
        %s399 = sand.u32 %s40, 1
        %s400 = smul.addr %s399, 128
        %s401 = scalar_lea.vmem [#allocation2], %s400
        // Predicated region
        $region57: #{tpu_custom_call.1} parent=55 // pred_check
          %p402 = pneg %p53
        $region58: #{tpu_custom_call.1} parent=55 // pred_check_branch
          %404 = sbr.rel (%p402) target = $region60
        $region59: #{tpu_custom_call.1} parent=55 // pred_region
          %405 = dma.done %s398, 2048
        $region60: #{tpu_custom_call.1} parent=55 // pred_fallthru
          _
        %s406 = sand.u32 %s32, 1
        %s407 = scalar_lea.sflag [#allocation6], %s406
        %s408 = sand.u32 %s66, 1
        %s409 = scalar_lea.vmem [#allocation5], %s408
        // Predicated region
        $region61: #{tpu_custom_call.1} parent=55 // pred_check
          %p410 = pneg %p79
        $region62: #{tpu_custom_call.1} parent=55 // pred_check_branch
          %412 = sbr.rel (%p410) target = $region64
        $region63: #{tpu_custom_call.1} parent=55 // pred_region
          %413 = dma.done %s407, 16
        $region64: #{tpu_custom_call.1} parent=55 // pred_fallthru
          _
        // Predicated region
        $region65: #{tpu_custom_call.1} parent=55 // pred_check
          %p414 = pneg %p100
        $region66: #{tpu_custom_call.1} parent=55 // pred_check_branch
          %416 = sbr.rel (%p414) target = $region68
        $region67: #{tpu_custom_call.1} parent=55 // pred_region
          %417 = dma.done [#allocation6], 2048
        $region68: #{tpu_custom_call.1} parent=55 // pred_fallthru
          _
        // Predicated region
        $region69: #{tpu_custom_call.1} parent=55 // pred_check
          %p418 = pneg %p121
        $region70: #{tpu_custom_call.1} parent=55 // pred_check_branch
          %420 = sbr.rel (%p418) target = $region72
        $region71: #{tpu_custom_call.1} parent=55 // pred_region
          %421 = dma.done [#allocation9], 3072
        $region72: #{tpu_custom_call.1} parent=55 // pred_fallthru
          _
        // Predicated region
        $region73: #{tpu_custom_call.1} parent=55 // pred_check
          %p422 = pneg %p142
        $region74: #{tpu_custom_call.1} parent=55 // pred_check_branch
          %424 = sbr.rel (%p422) target = $region76
        $region75: #{tpu_custom_call.1} parent=55 // pred_region
          %425 = dma.done [#allocation9], 1024
        $region76: #{tpu_custom_call.1} parent=55 // pred_fallthru
          _
        // Predicated region
        $region77: #{tpu_custom_call.1} parent=55 // pred_check
          %p426 = pneg %p163
        $region78: #{tpu_custom_call.1} parent=55 // pred_check_branch
          %428 = sbr.rel (%p426) target = $region80
        $region79: #{tpu_custom_call.1} parent=55 // pred_region
          %429 = dma.done [#allocation12], 4096
        $region80: #{tpu_custom_call.1} parent=55 // pred_fallthru
          _
        // Predicated region
        $region81: #{tpu_custom_call.1} parent=55 // pred_check
          %p430 = pneg %p184
        $region82: #{tpu_custom_call.1} parent=55 // pred_check_branch
          %432 = sbr.rel (%p430) target = $region84
        $region83: #{tpu_custom_call.1} parent=55 // pred_region
          %433 = dma.done [#allocation12], 4096
        $region84: #{tpu_custom_call.1} parent=55 // pred_fallthru
          _
        // Predicated region
        $region85: #{tpu_custom_call.1} parent=55 // pred_check
          %p434 = pneg %p205
        $region86: #{tpu_custom_call.1} parent=55 // pred_check_branch
          %436 = sbr.rel (%p434) target = $region88
        $region87: #{tpu_custom_call.1} parent=55 // pred_region
          %437 = dma.done [#allocation15], 256
        $region88: #{tpu_custom_call.1} parent=55 // pred_fallthru
          _
        %s438 = sand.u32 %s40, 1
        %s439 = scalar_lea.sflag [#allocation3], %s438
        %s440 = sand.u32 %s40, 1
        %s441 = smul.addr %s440, 128
        %s442 = scalar_lea.vmem [#allocation2], %s441
        %p443 = pneg %p53
        %p444 = pneg %p50
        %s445 = sand.u32 %s32, 1
        %s446 = scalar_lea.sflag [#allocation6], %s445
        %s447 = sand.u32 %s66, 1
        %s448 = scalar_lea.vmem [#allocation5], %s447
        %p449 = pneg %p79
        %p450 = pneg %p76
        %p451 = pneg %p100
        %p452 = pneg %p97
        %p453 = pneg %p121
        %p454 = pneg %p118
        %p455 = pneg %p142
        %p456 = pneg %p139
        %p457 = pneg %p163
        %p458 = pneg %p160
        %p459 = pneg %p184
        %p460 = pneg %p181
        %p461 = pneg %p205
        %p462 = pneg %p202
        %p463 = pneg %p226
        %p464 = pneg %p223
        %p465 = pneg %p252
        %p466 = pneg %p249
        %s467 = sand.u32 %s239, 1
        %s468 = scalar_lea.sflag [#allocation4], %s467
        %s469 = sand.u32 %s239, 1
        %s470 = smul.addr %s469, 128
        %s471 = scalar_lea.vmem [#allocation16], %s470
        %s472 = smul.u32 16, %s32
        %s473 = smul.u32 16, %s32
        %v475 = vld [vmem:[%s401] sm:$0xff]
        %v476 = vld [vmem:[%s401 + $0x8] sm:$0xff]
        %v477 = vld [vmem:[%s401 + $0x10] sm:$0xff]
        %v478 = vld [vmem:[%s401 + $0x18] sm:$0xff]
        %v479 = vld [vmem:[%s401 + $0x20] sm:$0xff]
        %v480 = vld [vmem:[%s401 + $0x28] sm:$0xff]
        %v481 = vld [vmem:[%s401 + $0x30] sm:$0xff]
        %v482 = vld [vmem:[%s401 + $0x38] sm:$0xff]
        %v483 = vld [vmem:[%s401 + $0x40] sm:$0xff]
        %v484 = vld [vmem:[%s401 + $0x48] sm:$0xff]
        %v485 = vld [vmem:[%s401 + $0x50] sm:$0xff]
        %v486 = vld [vmem:[%s401 + $0x58] sm:$0xff]
        %v487 = vld [vmem:[%s401 + $0x60] sm:$0xff]
        %v488 = vld [vmem:[%s401 + $0x68] sm:$0xff]
        %v489 = vld [vmem:[%s401 + $0x70] sm:$0xff]
        %v490 = vld [vmem:[%s401 + $0x78] sm:$0xff]
        %v491 = vpack.c.bf16 %v476, %v475
        %v492 = vpack.c.bf16 %v478, %v477
        %v493 = vpack.c.bf16 %v480, %v479
        %v494 = vpack.c.bf16 %v482, %v481
        %v495 = vpack.c.bf16 %v484, %v483
        %v496 = vpack.c.bf16 %v486, %v485
        %v497 = vpack.c.bf16 %v488, %v487
        %v498 = vpack.c.bf16 %v490, %v489
        %v499 = vld [vmem:[#allocation7] sm:$0xff]
        %v500 = vld [vmem:[#allocation7 + $0x8] sm:$0xff]
        %v501 = vld [vmem:[#allocation7 + $0x10] sm:$0xff]
        %v502 = vld [vmem:[#allocation7 + $0x18] sm:$0xff]
        %v503 = vld [vmem:[#allocation7 + $0x20] sm:$0xff]
        %v504 = vld [vmem:[#allocation7 + $0x28] sm:$0xff]
        %v505 = vld [vmem:[#allocation7 + $0x30] sm:$0xff]
        %v506 = vld [vmem:[#allocation7 + $0x38] sm:$0xff]
        %v507 = vld [vmem:[#allocation7 + $0x40] sm:$0xff]
        %v508 = vld [vmem:[#allocation7 + $0x48] sm:$0xff]
        %v509 = vld [vmem:[#allocation7 + $0x50] sm:$0xff]
        %v510 = vld [vmem:[#allocation7 + $0x58] sm:$0xff]
        %v511 = vld [vmem:[#allocation7 + $0x60] sm:$0xff]
        %v512 = vld [vmem:[#allocation7 + $0x68] sm:$0xff]
        %v513 = vld [vmem:[#allocation7 + $0x70] sm:$0xff]
        %v514 = vld [vmem:[#allocation7 + $0x78] sm:$0xff]
        %v515 = vld [vmem:[%s409] sm:$0x1]
        %v517 = vlaneseq
        %v518 = vshrl.u32 %v517, 7
        %v519 = vsub.s32 0, %v518
        %v520 = vrot.slane %v515, %v519
        %v522 = vadd.f32 %v499, %v520
        %v523 = vadd.f32 %v500, %v520
        %v524 = vadd.f32 %v501, %v520
        %v525 = vadd.f32 %v502, %v520
        %v526 = vadd.f32 %v503, %v520
        %v527 = vadd.f32 %v504, %v520
        %v528 = vadd.f32 %v505, %v520
        %v529 = vadd.f32 %v506, %v520
        %v530 = vadd.f32 %v507, %v520
        %v531 = vadd.f32 %v508, %v520
        %v532 = vadd.f32 %v509, %v520
        %v533 = vadd.f32 %v510, %v520
        %v534 = vadd.f32 %v511, %v520
        %v535 = vadd.f32 %v512, %v520
        %v536 = vadd.f32 %v513, %v520
        %v537 = vadd.f32 %v514, %v520
        %v538 = vld [vmem:[#allocation8] sm:$0xff]
        %v539 = vld [vmem:[#allocation8 + $0x8] sm:$0xf]
        %v540 = vld [vmem:[#allocation8 + $0xc] sm:$0xff]
        %v541 = vld [vmem:[#allocation8 + $0x14] sm:$0xf]
        %v542 = vld [vmem:[#allocation8 + $0x18] sm:$0xff]
        %v543 = vld [vmem:[#allocation8 + $0x20] sm:$0xf]
        %v544 = vld [vmem:[#allocation8 + $0x24] sm:$0xff]
        %v545 = vld [vmem:[#allocation8 + $0x2c] sm:$0xf]
        %v546 = vld [vmem:[#allocation8 + $0x30] sm:$0xff]
        %v547 = vld [vmem:[#allocation8 + $0x38] sm:$0xf]
        %v548 = vld [vmem:[#allocation8 + $0x3c] sm:$0xff]
        %v549 = vld [vmem:[#allocation8 + $0x44] sm:$0xf]
        %v550 = vld [vmem:[#allocation8 + $0x48] sm:$0xff]
        %v551 = vld [vmem:[#allocation8 + $0x50] sm:$0xf]
        %v552 = vld [vmem:[#allocation8 + $0x54] sm:$0xff]
        %v553 = vld [vmem:[#allocation8 + $0x5c] sm:$0xf]
        %v554 = vld [vmem:[#allocation8 + $0x60] sm:$0xff]
        %v555 = vld [vmem:[#allocation8 + $0x68] sm:$0xf]
        %v556 = vld [vmem:[#allocation8 + $0x6c] sm:$0xff]
        %v557 = vld [vmem:[#allocation8 + $0x74] sm:$0xf]
        %v558 = vld [vmem:[#allocation8 + $0x78] sm:$0xff]
        %v559 = vld [vmem:[#allocation8 + $0x80] sm:$0xf]
        %v560 = vld [vmem:[#allocation8 + $0x84] sm:$0xff]
        %v561 = vld [vmem:[#allocation8 + $0x8c] sm:$0xf]
        %v562 = vld [vmem:[#allocation8 + $0x90] sm:$0xff]
        %v563 = vld [vmem:[#allocation8 + $0x98] sm:$0xf]
        %v564 = vld [vmem:[#allocation8 + $0x9c] sm:$0xff]
        %v565 = vld [vmem:[#allocation8 + $0xa4] sm:$0xf]
        %v566 = vld [vmem:[#allocation8 + $0xa8] sm:$0xff]
        %v567 = vld [vmem:[#allocation8 + $0xb0] sm:$0xf]
        %v568 = vld [vmem:[#allocation8 + $0xb4] sm:$0xff]
        %v569 = vld [vmem:[#allocation8 + $0xbc] sm:$0xf]
        %v602 = vunpack.c.l.b16 %v538
        %v603 = vunpack.c.h.b16 %v538
        %v604 = vunpack.c.l.b16 %v539
        %v605 = vunpack.c.l.b16 %v540
        %v606 = vunpack.c.h.b16 %v540
        %v607 = vunpack.c.l.b16 %v541
        %v608 = vunpack.c.l.b16 %v542
        %v609 = vunpack.c.h.b16 %v542
        %v610 = vunpack.c.l.b16 %v543
        %v611 = vunpack.c.l.b16 %v544
        %v612 = vunpack.c.h.b16 %v544
        %v613 = vunpack.c.l.b16 %v545
        %v614 = vunpack.c.l.b16 %v546
        %v615 = vunpack.c.h.b16 %v546
        %v616 = vunpack.c.l.b16 %v547
        %v617 = vunpack.c.l.b16 %v548
        %v618 = vunpack.c.h.b16 %v548
        %v619 = vunpack.c.l.b16 %v549
        %v620 = vunpack.c.l.b16 %v550
        %v621 = vunpack.c.h.b16 %v550
        %v622 = vunpack.c.l.b16 %v551
        %v623 = vunpack.c.l.b16 %v552
        %v624 = vunpack.c.h.b16 %v552
        %v625 = vunpack.c.l.b16 %v553
        %v626 = vunpack.c.l.b16 %v554
        %v627 = vunpack.c.h.b16 %v554
        %v628 = vunpack.c.l.b16 %v555
        %v629 = vunpack.c.l.b16 %v556
        %v630 = vunpack.c.h.b16 %v556
        %v631 = vunpack.c.l.b16 %v557
        %v632 = vunpack.c.l.b16 %v558
        %v633 = vunpack.c.h.b16 %v558
        %v634 = vunpack.c.l.b16 %v559
        %v635 = vunpack.c.l.b16 %v560
        %v636 = vunpack.c.h.b16 %v560
        %v637 = vunpack.c.l.b16 %v561
        %v638 = vunpack.c.l.b16 %v562
        %v639 = vunpack.c.h.b16 %v562
        %v640 = vunpack.c.l.b16 %v563
        %v641 = vunpack.c.l.b16 %v564
        %v642 = vunpack.c.h.b16 %v564
        %v643 = vunpack.c.l.b16 %v565
        %v644 = vunpack.c.l.b16 %v566
        %v645 = vunpack.c.h.b16 %v566
        %v646 = vunpack.c.l.b16 %v567
        %v647 = vunpack.c.l.b16 %v568
        %v648 = vunpack.c.h.b16 %v568
        %v649 = vunpack.c.l.b16 %v569
        %v650 = vpack.c.b16 %v605, %v602
        %v651 = vpack.c.b16 %v606, %v603
        %v652 = vpack.c.b16 %v607, %v604
        %v653 = vpack.c.b16 %v611, %v608
        %v654 = vpack.c.b16 %v612, %v609
        %v655 = vpack.c.b16 %v613, %v610
        %v656 = vpack.c.b16 %v617, %v614
        %v657 = vpack.c.b16 %v618, %v615
        %v658 = vpack.c.b16 %v619, %v616
        %v659 = vpack.c.b16 %v623, %v620
        %v660 = vpack.c.b16 %v624, %v621
        %v661 = vpack.c.b16 %v625, %v622
        %v662 = vpack.c.b16 %v629, %v626
        %v663 = vpack.c.b16 %v630, %v627
        %v664 = vpack.c.b16 %v631, %v628
        %v665 = vpack.c.b16 %v635, %v632
        %v666 = vpack.c.b16 %v636, %v633
        %v667 = vpack.c.b16 %v637, %v634
        %v668 = vpack.c.b16 %v641, %v638
        %v669 = vpack.c.b16 %v642, %v639
        %v670 = vpack.c.b16 %v643, %v640
        %v671 = vpack.c.b16 %v647, %v644
        %v672 = vpack.c.b16 %v648, %v645
        %v673 = vpack.c.b16 %v649, %v646
        %698 = vmatprep.subr.bf16.mxu0 %v672
        %699 = vmatpush1.bf16.msra.mxu0 %v671
        %700 = vmatprep.subr.bf16.mxu0 %v669
        %701 = vmatpush1.bf16.msra.mxu0 %v668
        %702 = vmatprep.subr.bf16.mxu0 %v666
        %703 = vmatpush1.bf16.msra.mxu0 %v665
        %704 = vmatprep.subr.bf16.mxu0 %v663
        %705 = vmatpush1.bf16.msra.mxu0 %v662
        %706 = vmatprep.subr.bf16.mxu0 %v660
        %707 = vmatpush1.bf16.msra.mxu0 %v659
        %708 = vmatprep.subr.bf16.mxu0 %v657
        %709 = vmatpush1.bf16.msra.mxu0 %v656
        %710 = vmatprep.subr.bf16.mxu0 %v654
        %711 = vmatpush1.bf16.msra.mxu0 %v653
        %712 = vmatprep.subr.bf16.mxu0 %v651
        %713 = vmatpush1.bf16.msra.mxu0 %v650
        %714 = vmatprep.subr.bf16.mxu0 0
        %715 = vmatpush2.bf16.msra.mxu0 0
        %716 = vmatprep.subr.bf16.mxu0 0
        %717 = vmatpush2.bf16.msra.mxu0 0
        %718 = vmatprep.subr.bf16.mxu0 0
        %719 = vmatpush2.bf16.msra.mxu0 0
        %720 = vmatprep.subr.bf16.mxu0 0
        %721 = vmatpush2.bf16.msra.mxu0 0
        %722 = vmatprep.subr.bf16.mxu0 0
        %723 = vmatpush2.bf16.msra.mxu0 0
        %724 = vmatprep.subr.bf16.mxu0 0
        %725 = vmatpush2.bf16.msra.mxu0 0
        %726 = vmatprep.subr.bf16.mxu0 0
        %727 = vmatpush2.bf16.msra.mxu0 0
        %728 = vmatprep.subr.bf16.mxu0 0
        %729 = vmatpush2.bf16.msra.mxu0 0
        %730 = vmatprep.mubr.bf16.mxu0 0
        %731 = vmatmul.mubr.bf16.gmra.mxu0 %v491
        %v732 = vpop.f32.mrf.mxu0
        %v733 = vadd.f32 0.0, %v732
        %v734 = vpop.f32.mrf.mxu0
        %v735 = vadd.f32 0.0, %v734
        %v736 = vpop.f32.mrf.mxu0
        %v737 = vadd.f32 0.0, %v736
        %v738 = vpop.f32.mrf.mxu0
        %v739 = vadd.f32 0.0, %v738
        %740 = vmatprep.mubr.bf16.mxu0 0
        %741 = vmatmul.mubr.bf16.gmra.mxu0 %v492
        %v742 = vpop.f32.mrf.mxu0
        %v743 = vadd.f32 0.0, %v742
        %v744 = vpop.f32.mrf.mxu0
        %v745 = vadd.f32 0.0, %v744
        %v746 = vpop.f32.mrf.mxu0
        %v747 = vadd.f32 0.0, %v746
        %v748 = vpop.f32.mrf.mxu0
        %v749 = vadd.f32 0.0, %v748
        %750 = vmatprep.mubr.bf16.mxu0 0
        %751 = vmatmul.mubr.bf16.gmra.mxu0 %v493
        %v752 = vpop.f32.mrf.mxu0
        %v753 = vadd.f32 0.0, %v752
        %v754 = vpop.f32.mrf.mxu0
        %v755 = vadd.f32 0.0, %v754
        %v756 = vpop.f32.mrf.mxu0
        %v757 = vadd.f32 0.0, %v756
        %v758 = vpop.f32.mrf.mxu0
        %v759 = vadd.f32 0.0, %v758
        %760 = vmatprep.mubr.bf16.mxu0 0
        %761 = vmatmul.mubr.bf16.gmra.mxu0 %v494
        %v762 = vpop.f32.mrf.mxu0
        %v763 = vadd.f32 0.0, %v762
        %v764 = vpop.f32.mrf.mxu0
        %v765 = vadd.f32 0.0, %v764
        %v766 = vpop.f32.mrf.mxu0
        %v767 = vadd.f32 0.0, %v766
        %v768 = vpop.f32.mrf.mxu0
        %v769 = vadd.f32 0.0, %v768
        %770 = vmatprep.mubr.bf16.mxu0 0
        %771 = vmatmul.mubr.bf16.gmra.mxu0 %v495
        %v772 = vpop.f32.mrf.mxu0
        %v773 = vadd.f32 0.0, %v772
        %v774 = vpop.f32.mrf.mxu0
        %v775 = vadd.f32 0.0, %v774
        %v776 = vpop.f32.mrf.mxu0
        %v777 = vadd.f32 0.0, %v776
        %v778 = vpop.f32.mrf.mxu0
        %v779 = vadd.f32 0.0, %v778
        %780 = vmatprep.mubr.bf16.mxu0 0
        %781 = vmatmul.mubr.bf16.gmra.mxu0 %v496
        %v782 = vpop.f32.mrf.mxu0
        %v783 = vadd.f32 0.0, %v782
        %v784 = vpop.f32.mrf.mxu0
        %v785 = vadd.f32 0.0, %v784
        %v786 = vpop.f32.mrf.mxu0
        %v787 = vadd.f32 0.0, %v786
        %v788 = vpop.f32.mrf.mxu0
        %v789 = vadd.f32 0.0, %v788
        %790 = vmatprep.mubr.bf16.mxu0 0
        %791 = vmatmul.mubr.bf16.gmra.mxu0 %v497
        %v792 = vpop.f32.mrf.mxu0
        %v793 = vadd.f32 0.0, %v792
        %v794 = vpop.f32.mrf.mxu0
        %v795 = vadd.f32 0.0, %v794
        %v796 = vpop.f32.mrf.mxu0
        %v797 = vadd.f32 0.0, %v796
        %v798 = vpop.f32.mrf.mxu0
        %v799 = vadd.f32 0.0, %v798
        %800 = vmatprep.mubr.bf16.mxu0 0
        %801 = vmatmul.mubr.bf16.gmra.mxu0 %v498
        %v802 = vpop.f32.mrf.mxu0
        %v803 = vadd.f32 0.0, %v802
        %v804 = vpop.f32.mrf.mxu0
        %v805 = vadd.f32 0.0, %v804
        %v806 = vpop.f32.mrf.mxu0
        %v807 = vadd.f32 0.0, %v806
        %v808 = vpop.f32.mrf.mxu0
        %v809 = vadd.f32 0.0, %v808
        %810 = vdwg.mxu0
        %811 = vmatprep.subr.bf16.mxu0 0
        %812 = vmatpush1.bf16.msra.mxu0 %v673
        %813 = vmatprep.subr.bf16.mxu0 0
        %814 = vmatpush1.bf16.msra.mxu0 %v670
        %815 = vmatprep.subr.bf16.mxu0 0
        %816 = vmatpush1.bf16.msra.mxu0 %v667
        %817 = vmatprep.subr.bf16.mxu0 0
        %818 = vmatpush1.bf16.msra.mxu0 %v664
        %819 = vmatprep.subr.bf16.mxu0 0
        %820 = vmatpush1.bf16.msra.mxu0 %v661
        %821 = vmatprep.subr.bf16.mxu0 0
        %822 = vmatpush1.bf16.msra.mxu0 %v658
        %823 = vmatprep.subr.bf16.mxu0 0
        %824 = vmatpush1.bf16.msra.mxu0 %v655
        %825 = vmatprep.subr.bf16.mxu0 0
        %826 = vmatpush1.bf16.msra.mxu0 %v652
        %827 = vmatprep.subr.bf16.mxu0 0
        %828 = vmatpush2.bf16.msra.mxu0 0
        %829 = vmatprep.subr.bf16.mxu0 0
        %830 = vmatpush2.bf16.msra.mxu0 0
        %831 = vmatprep.subr.bf16.mxu0 0
        %832 = vmatpush2.bf16.msra.mxu0 0
        %833 = vmatprep.subr.bf16.mxu0 0
        %834 = vmatpush2.bf16.msra.mxu0 0
        %835 = vmatprep.subr.bf16.mxu0 0
        %836 = vmatpush2.bf16.msra.mxu0 0
        %837 = vmatprep.subr.bf16.mxu0 0
        %838 = vmatpush2.bf16.msra.mxu0 0
        %839 = vmatprep.subr.bf16.mxu0 0
        %840 = vmatpush2.bf16.msra.mxu0 0
        %841 = vmatprep.subr.bf16.mxu0 0
        %842 = vmatpush2.bf16.msra.mxu0 0
        %843 = vmatprep.mubr.bf16.mxu0 0
        %844 = vmatmul.mubr.bf16.gmra.mxu0 %v491
        %v845 = vpop.f32.mrf.mxu0
        %v846 = vadd.f32 0.0, %v845
        %v847 = vpop.f32.mrf.mxu0
        %v848 = vpop.f32.mrf.mxu0
        %v849 = vadd.f32 0.0, %v848
        %v850 = vpop.f32.mrf.mxu0
        %851 = vmatprep.mubr.bf16.mxu0 0
        %852 = vmatmul.mubr.bf16.gmra.mxu0 %v492
        %v853 = vpop.f32.mrf.mxu0
        %v854 = vadd.f32 0.0, %v853
        %v855 = vpop.f32.mrf.mxu0
        %v856 = vpop.f32.mrf.mxu0
        %v857 = vadd.f32 0.0, %v856
        %v858 = vpop.f32.mrf.mxu0
        %859 = vmatprep.mubr.bf16.mxu0 0
        %860 = vmatmul.mubr.bf16.gmra.mxu0 %v493
        %v861 = vpop.f32.mrf.mxu0
        %v862 = vadd.f32 0.0, %v861
        %v863 = vpop.f32.mrf.mxu0
        %v864 = vpop.f32.mrf.mxu0
        %v865 = vadd.f32 0.0, %v864
        %v866 = vpop.f32.mrf.mxu0
        %867 = vmatprep.mubr.bf16.mxu0 0
        %868 = vmatmul.mubr.bf16.gmra.mxu0 %v494
        %v869 = vpop.f32.mrf.mxu0
        %v870 = vadd.f32 0.0, %v869
        %v871 = vpop.f32.mrf.mxu0
        %v872 = vpop.f32.mrf.mxu0
        %v873 = vadd.f32 0.0, %v872
        %v874 = vpop.f32.mrf.mxu0
        %875 = vmatprep.mubr.bf16.mxu0 0
        %876 = vmatmul.mubr.bf16.gmra.mxu0 %v495
        %v877 = vpop.f32.mrf.mxu0
        %v878 = vadd.f32 0.0, %v877
        %v879 = vpop.f32.mrf.mxu0
        %v880 = vpop.f32.mrf.mxu0
        %v881 = vadd.f32 0.0, %v880
        %v882 = vpop.f32.mrf.mxu0
        %883 = vmatprep.mubr.bf16.mxu0 0
        %884 = vmatmul.mubr.bf16.gmra.mxu0 %v496
        %v885 = vpop.f32.mrf.mxu0
        %v886 = vadd.f32 0.0, %v885
        %v887 = vpop.f32.mrf.mxu0
        %v888 = vpop.f32.mrf.mxu0
        %v889 = vadd.f32 0.0, %v888
        %v890 = vpop.f32.mrf.mxu0
        %891 = vmatprep.mubr.bf16.mxu0 0
        %892 = vmatmul.mubr.bf16.gmra.mxu0 %v497
        %v893 = vpop.f32.mrf.mxu0
        %v894 = vadd.f32 0.0, %v893
        %v895 = vpop.f32.mrf.mxu0
        %v896 = vpop.f32.mrf.mxu0
        %v897 = vadd.f32 0.0, %v896
        %v898 = vpop.f32.mrf.mxu0
        %899 = vmatprep.mubr.bf16.mxu0 0
        %900 = vmatmul.mubr.bf16.gmra.mxu0 %v498
        %v901 = vpop.f32.mrf.mxu0
        %v902 = vadd.f32 0.0, %v901
        %v903 = vpop.f32.mrf.mxu0
        %v904 = vpop.f32.mrf.mxu0
        %v905 = vadd.f32 0.0, %v904
        %v906 = vpop.f32.mrf.mxu0
        %907 = vdwg.mxu0
        %v908 = vld [vmem:[#allocation14] sm:$0x1]
        %v909 = vlaneseq
        %v910 = vshrl.u32 %v909, 7
        %v911 = vsub.s32 0, %v910
        %v912 = vrot.slane %v908, %v911
        %v913 = vadd.f32 %v733, %v912
        %v914 = vadd.f32 %v737, %v912
        %v915 = vadd.f32 %v743, %v912
        %v916 = vadd.f32 %v747, %v912
        %v917 = vadd.f32 %v753, %v912
        %v918 = vadd.f32 %v757, %v912
        %v919 = vadd.f32 %v763, %v912
        %v920 = vadd.f32 %v767, %v912
        %v921 = vadd.f32 %v773, %v912
        %v922 = vadd.f32 %v777, %v912
        %v923 = vadd.f32 %v783, %v912
        %v924 = vadd.f32 %v787, %v912
        %v925 = vadd.f32 %v793, %v912
        %v926 = vadd.f32 %v797, %v912
        %v927 = vadd.f32 %v803, %v912
        %v928 = vadd.f32 %v807, %v912
        %v929 = vmul.f32 %v913, 0.17677669
        %v930 = vmul.f32 %v914, 0.17677669
        %v931 = vmul.f32 %v915, 0.17677669
        %v932 = vmul.f32 %v916, 0.17677669
        %v933 = vmul.f32 %v917, 0.17677669
        %v934 = vmul.f32 %v918, 0.17677669
        %v935 = vmul.f32 %v919, 0.17677669
        %v936 = vmul.f32 %v920, 0.17677669
        %v937 = vmul.f32 %v921, 0.17677669
        %v938 = vmul.f32 %v922, 0.17677669
        %v939 = vmul.f32 %v923, 0.17677669
        %v940 = vmul.f32 %v924, 0.17677669
        %v941 = vmul.f32 %v925, 0.17677669
        %v942 = vmul.f32 %v926, 0.17677669
        %v943 = vmul.f32 %v927, 0.17677669
        %v944 = vmul.f32 %v928, 0.17677669
        %v945 = vld [vmem:[#allocation14 + $0x1] sm:$0x1]
        %v946 = vlaneseq
        %v947 = vshrl.u32 %v946, 7
        %v948 = vsub.s32 0, %v947
        %v949 = vrot.slane %v945, %v948
        %v950 = vadd.f32 %v735, %v949
        %v951 = vadd.f32 %v739, %v949
        %v952 = vadd.f32 %v745, %v949
        %v953 = vadd.f32 %v749, %v949
        %v954 = vadd.f32 %v755, %v949
        %v955 = vadd.f32 %v759, %v949
        %v956 = vadd.f32 %v765, %v949
        %v957 = vadd.f32 %v769, %v949
        %v958 = vadd.f32 %v775, %v949
        %v959 = vadd.f32 %v779, %v949
        %v960 = vadd.f32 %v785, %v949
        %v961 = vadd.f32 %v789, %v949
        %v962 = vadd.f32 %v795, %v949
        %v963 = vadd.f32 %v799, %v949
        %v964 = vadd.f32 %v805, %v949
        %v965 = vadd.f32 %v809, %v949
        %v966 = vld [vmem:[#allocation14 + $0x2] sm:$0x1]
        %v967 = vlaneseq
        %v968 = vshrl.u32 %v967, 7
        %v969 = vsub.s32 0, %v968
        %v970 = vrot.slane %v966, %v969
        %v971 = vadd.f32 %v846, %v970
        %v972 = vadd.f32 %v849, %v970
        %v973 = vadd.f32 %v854, %v970
        %v974 = vadd.f32 %v857, %v970
        %v975 = vadd.f32 %v862, %v970
        %v976 = vadd.f32 %v865, %v970
        %v977 = vadd.f32 %v870, %v970
        %v978 = vadd.f32 %v873, %v970
        %v979 = vadd.f32 %v878, %v970
        %v980 = vadd.f32 %v881, %v970
        %v981 = vadd.f32 %v886, %v970
        %v982 = vadd.f32 %v889, %v970
        %v983 = vadd.f32 %v894, %v970
        %v984 = vadd.f32 %v897, %v970
        %v985 = vadd.f32 %v902, %v970
        %v986 = vadd.f32 %v905, %v970
        %v987 = vpack.c.bf16 %v930, %v929
        %v988 = vpack.c.bf16 %v932, %v931
        %v989 = vpack.c.bf16 %v934, %v933
        %v990 = vpack.c.bf16 %v936, %v935
        %v991 = vpack.c.bf16 %v938, %v937
        %v992 = vpack.c.bf16 %v940, %v939
        %v993 = vpack.c.bf16 %v942, %v941
        %v994 = vpack.c.bf16 %v944, %v943
        %v995 = vpack.c.bf16 %v951, %v950
        %v996 = vpack.c.bf16 %v953, %v952
        %v997 = vpack.c.bf16 %v955, %v954
        %v998 = vpack.c.bf16 %v957, %v956
        %v999 = vpack.c.bf16 %v959, %v958
        %v1000 = vpack.c.bf16 %v961, %v960
        %v1001 = vpack.c.bf16 %v963, %v962
        %v1002 = vpack.c.bf16 %v965, %v964
        %v1003 = vpack.c.bf16 %v972, %v971
        %v1004 = vpack.c.bf16 %v974, %v973
        %v1005 = vpack.c.bf16 %v976, %v975
        %v1006 = vpack.c.bf16 %v978, %v977
        %v1007 = vpack.c.bf16 %v980, %v979
        %v1008 = vpack.c.bf16 %v982, %v981
        %v1009 = vpack.c.bf16 %v984, %v983
        %v1010 = vpack.c.bf16 %v986, %v985
        %vm1011 = vcmask 261120
        %v1013 = vsel %vm1011, %v987, 0
        %v1016 = vsel %vm1011, %v988, 0
        %v1019 = vsel %vm1011, %v989, 0
        %v1022 = vsel %vm1011, %v990, 0
        %v1025 = vsel %vm1011, %v991, 0
        %v1028 = vsel %vm1011, %v992, 0
        %v1031 = vsel %vm1011, %v993, 0
        %v1034 = vsel %vm1011, %v994, 0
        %v1037 = vsel %vm1011, %v995, 0
        %v1040 = vsel %vm1011, %v996, 0
        %v1043 = vsel %vm1011, %v997, 0
        %v1046 = vsel %vm1011, %v998, 0
        %v1049 = vsel %vm1011, %v999, 0
        %v1052 = vsel %vm1011, %v1000, 0
        %v1055 = vsel %vm1011, %v1001, 0
        %v1058 = vsel %vm1011, %v1002, 0
        %1060 = vmatprep.subr.bf16.mxu0 0
        %1061 = vmatpush1.bf16.xpose.msra.mxu0 %v1058
        %1062 = vmatprep.subr.bf16.mxu0 0
        %1063 = vmatpush1.bf16.xpose.msra.mxu0 %v1055
        %1064 = vmatprep.subr.bf16.mxu0 0
        %1065 = vmatpush1.bf16.xpose.msra.mxu0 %v1052
        %1066 = vmatprep.subr.bf16.mxu0 0
        %1067 = vmatpush1.bf16.xpose.msra.mxu0 %v1049
        %1068 = vmatprep.subr.bf16.mxu0 0
        %1069 = vmatpush1.bf16.xpose.msra.mxu0 %v1046
        %1070 = vmatprep.subr.bf16.mxu0 0
        %1071 = vmatpush1.bf16.xpose.msra.mxu0 %v1043
        %1072 = vmatprep.subr.bf16.mxu0 0
        %1073 = vmatpush1.bf16.xpose.msra.mxu0 %v1040
        %1074 = vmatprep.subr.bf16.mxu0 0
        %1075 = vmatpush1.bf16.xpose.msra.mxu0 %v1037
        %1076 = vmatprep.subr.bf16.mxu0 0
        %1077 = vmatpush2.bf16.xpose.msra.mxu0 0
        %1078 = vmatprep.subr.bf16.mxu0 0
        %1079 = vmatpush2.bf16.xpose.msra.mxu0 0
        %1080 = vmatprep.subr.bf16.mxu0 0
        %1081 = vmatpush2.bf16.xpose.msra.mxu0 0
        %1082 = vmatprep.subr.bf16.mxu0 0
        %1083 = vmatpush2.bf16.xpose.msra.mxu0 0
        %1084 = vmatprep.subr.bf16.mxu0 0
        %1085 = vmatpush2.bf16.xpose.msra.mxu0 0
        %1086 = vmatprep.subr.bf16.mxu0 0
        %1087 = vmatpush2.bf16.xpose.msra.mxu0 0
        %1088 = vmatprep.subr.bf16.mxu0 0
        %1089 = vmatpush2.bf16.xpose.msra.mxu0 0
        %1090 = vmatprep.subr.bf16.mxu0 0
        %1091 = vmatpush2.bf16.xpose.msra.mxu0 0
        %1092 = vmatprep.mubr.bf16.mxu0 0
        %1093 = vmatmul.mubr.bf16.gmra.mxu0 %v1013
        %v1094 = vpop.f32.mrf.mxu0
        %v1095 = vadd.f32 %v522, %v1094
        %v1096 = vpop.f32.mrf.mxu0
        %v1097 = vpop.f32.mrf.mxu0
        %v1098 = vadd.f32 %v523, %v1097
        %v1099 = vpop.f32.mrf.mxu0
        %1100 = vmatprep.mubr.bf16.mxu0 0
        %1101 = vmatmul.mubr.bf16.gmra.mxu0 %v1016
        %v1102 = vpop.f32.mrf.mxu0
        %v1103 = vadd.f32 %v524, %v1102
        %v1104 = vpop.f32.mrf.mxu0
        %v1105 = vpop.f32.mrf.mxu0
        %v1106 = vadd.f32 %v525, %v1105
        %v1107 = vpop.f32.mrf.mxu0
        %1108 = vmatprep.mubr.bf16.mxu0 0
        %1109 = vmatmul.mubr.bf16.gmra.mxu0 %v1019
        %v1110 = vpop.f32.mrf.mxu0
        %v1111 = vadd.f32 %v526, %v1110
        %v1112 = vpop.f32.mrf.mxu0
        %v1113 = vpop.f32.mrf.mxu0
        %v1114 = vadd.f32 %v527, %v1113
        %v1115 = vpop.f32.mrf.mxu0
        %1116 = vmatprep.mubr.bf16.mxu0 0
        %1117 = vmatmul.mubr.bf16.gmra.mxu0 %v1022
        %v1118 = vpop.f32.mrf.mxu0
        %v1119 = vadd.f32 %v528, %v1118
        %v1120 = vpop.f32.mrf.mxu0
        %v1121 = vpop.f32.mrf.mxu0
        %v1122 = vadd.f32 %v529, %v1121
        %v1123 = vpop.f32.mrf.mxu0
        %1124 = vmatprep.mubr.bf16.mxu0 0
        %1125 = vmatmul.mubr.bf16.gmra.mxu0 %v1025
        %v1126 = vpop.f32.mrf.mxu0
        %v1127 = vadd.f32 %v530, %v1126
        %v1128 = vpop.f32.mrf.mxu0
        %v1129 = vpop.f32.mrf.mxu0
        %v1130 = vadd.f32 %v531, %v1129
        %v1131 = vpop.f32.mrf.mxu0
        %1132 = vmatprep.mubr.bf16.mxu0 0
        %1133 = vmatmul.mubr.bf16.gmra.mxu0 %v1028
        %v1134 = vpop.f32.mrf.mxu0
        %v1135 = vadd.f32 %v532, %v1134
        %v1136 = vpop.f32.mrf.mxu0
        %v1137 = vpop.f32.mrf.mxu0
        %v1138 = vadd.f32 %v533, %v1137
        %v1139 = vpop.f32.mrf.mxu0
        %1140 = vmatprep.mubr.bf16.mxu0 0
        %1141 = vmatmul.mubr.bf16.gmra.mxu0 %v1031
        %v1142 = vpop.f32.mrf.mxu0
        %v1143 = vadd.f32 %v534, %v1142
        %v1144 = vpop.f32.mrf.mxu0
        %v1145 = vpop.f32.mrf.mxu0
        %v1146 = vadd.f32 %v535, %v1145
        %v1147 = vpop.f32.mrf.mxu0
        %1148 = vmatprep.mubr.bf16.mxu0 0
        %1149 = vmatmul.mubr.bf16.gmra.mxu0 %v1034
        %v1150 = vpop.f32.mrf.mxu0
        %v1151 = vadd.f32 %v536, %v1150
        %v1152 = vpop.f32.mrf.mxu0
        %v1153 = vpop.f32.mrf.mxu0
        %v1154 = vadd.f32 %v537, %v1153
        %v1155 = vpop.f32.mrf.mxu0
        %1156 = vdwg.mxu0
        %1157 = vmax.xlane.f32.xlu0 %v1095
        %v1158 = vpop.xlane.xlu0 %1157
        %1159 = vmax.xlane.f32.xlu0 %v1098
        %v1160 = vpop.xlane.xlu0 %1159
        %1161 = vmax.xlane.f32.xlu0 %v1103
        %v1162 = vpop.xlane.xlu0 %1161
        %1163 = vmax.xlane.f32.xlu0 %v1106
        %v1164 = vpop.xlane.xlu0 %1163
        %1165 = vmax.xlane.f32.xlu0 %v1111
        %v1166 = vpop.xlane.xlu0 %1165
        %1167 = vmax.xlane.f32.xlu0 %v1114
        %v1168 = vpop.xlane.xlu0 %1167
        %1169 = vmax.xlane.f32.xlu0 %v1119
        %v1170 = vpop.xlane.xlu0 %1169
        %1171 = vmax.xlane.f32.xlu0 %v1122
        %v1172 = vpop.xlane.xlu0 %1171
        %1173 = vmax.xlane.f32.xlu0 %v1127
        %v1174 = vpop.xlane.xlu0 %1173
        %1175 = vmax.xlane.f32.xlu0 %v1130
        %v1176 = vpop.xlane.xlu0 %1175
        %1177 = vmax.xlane.f32.xlu0 %v1135
        %v1178 = vpop.xlane.xlu0 %1177
        %1179 = vmax.xlane.f32.xlu0 %v1138
        %v1180 = vpop.xlane.xlu0 %1179
        %1181 = vmax.xlane.f32.xlu0 %v1143
        %v1182 = vpop.xlane.xlu0 %1181
        %1183 = vmax.xlane.f32.xlu0 %v1146
        %v1184 = vpop.xlane.xlu0 %1183
        %1185 = vmax.xlane.f32.xlu0 %v1151
        %v1186 = vpop.xlane.xlu0 %1185
        %1187 = vmax.xlane.f32.xlu0 %v1154
        %v1188 = vpop.xlane.xlu0 %1187
        %v1189 = vsub.f32 %v1095, %v1158
        %v1190 = vsub.f32 %v1098, %v1160
        %v1191 = vsub.f32 %v1103, %v1162
        %v1192 = vsub.f32 %v1106, %v1164
        %v1193 = vsub.f32 %v1111, %v1166
        %v1194 = vsub.f32 %v1114, %v1168
        %v1195 = vsub.f32 %v1119, %v1170
        %v1196 = vsub.f32 %v1122, %v1172
        %v1197 = vsub.f32 %v1127, %v1174
        %v1198 = vsub.f32 %v1130, %v1176
        %v1199 = vsub.f32 %v1135, %v1178
        %v1200 = vsub.f32 %v1138, %v1180
        %v1201 = vsub.f32 %v1143, %v1182
        %v1202 = vsub.f32 %v1146, %v1184
        %v1203 = vsub.f32 %v1151, %v1186
        %v1204 = vsub.f32 %v1154, %v1188
        %v1205 = vmul.f32 %v1189, 1.442695
        %v1206 = vpow.pop %v1205
        %v1207 = vmul.f32 %v1190, 1.442695
        %v1208 = vpow.pop %v1207
        %v1209 = vmul.f32 %v1191, 1.442695
        %v1210 = vpow.pop %v1209
        %v1211 = vmul.f32 %v1192, 1.442695
        %v1212 = vpow.pop %v1211
        %v1213 = vmul.f32 %v1193, 1.442695
        %v1214 = vpow.pop %v1213
        %v1215 = vmul.f32 %v1194, 1.442695
        %v1216 = vpow.pop %v1215
        %v1217 = vmul.f32 %v1195, 1.442695
        %v1218 = vpow.pop %v1217
        %v1219 = vmul.f32 %v1196, 1.442695
        %v1220 = vpow.pop %v1219
        %v1221 = vmul.f32 %v1197, 1.442695
        %v1222 = vpow.pop %v1221
        %v1223 = vmul.f32 %v1198, 1.442695
        %v1224 = vpow.pop %v1223
        %v1225 = vmul.f32 %v1199, 1.442695
        %v1226 = vpow.pop %v1225
        %v1227 = vmul.f32 %v1200, 1.442695
        %v1228 = vpow.pop %v1227
        %v1229 = vmul.f32 %v1201, 1.442695
        %v1230 = vpow.pop %v1229
        %v1231 = vmul.f32 %v1202, 1.442695
        %v1232 = vpow.pop %v1231
        %v1233 = vmul.f32 %v1203, 1.442695
        %v1234 = vpow.pop %v1233
        %v1235 = vmul.f32 %v1204, 1.442695
        %v1236 = vpow.pop %v1235
        %1237 = vadd.xlane.f32.xlu0 %v1206
        %v1238 = vpop.xlane.xlu0 %1237
        %1239 = vadd.xlane.f32.xlu0 %v1208
        %v1240 = vpop.xlane.xlu0 %1239
        %1241 = vadd.xlane.f32.xlu0 %v1210
        %v1242 = vpop.xlane.xlu0 %1241
        %1243 = vadd.xlane.f32.xlu0 %v1212
        %v1244 = vpop.xlane.xlu0 %1243
        %1245 = vadd.xlane.f32.xlu0 %v1214
        %v1246 = vpop.xlane.xlu0 %1245
        %1247 = vadd.xlane.f32.xlu0 %v1216
        %v1248 = vpop.xlane.xlu0 %1247
        %1249 = vadd.xlane.f32.xlu0 %v1218
        %v1250 = vpop.xlane.xlu0 %1249
        %1251 = vadd.xlane.f32.xlu0 %v1220
        %v1252 = vpop.xlane.xlu0 %1251
        %1253 = vadd.xlane.f32.xlu0 %v1222
        %v1254 = vpop.xlane.xlu0 %1253
        %1255 = vadd.xlane.f32.xlu0 %v1224
        %v1256 = vpop.xlane.xlu0 %1255
        %1257 = vadd.xlane.f32.xlu0 %v1226
        %v1258 = vpop.xlane.xlu0 %1257
        %1259 = vadd.xlane.f32.xlu0 %v1228
        %v1260 = vpop.xlane.xlu0 %1259
        %1261 = vadd.xlane.f32.xlu0 %v1230
        %v1262 = vpop.xlane.xlu0 %1261
        %1263 = vadd.xlane.f32.xlu0 %v1232
        %v1264 = vpop.xlane.xlu0 %1263
        %1265 = vadd.xlane.f32.xlu0 %v1234
        %v1266 = vpop.xlane.xlu0 %1265
        %1267 = vadd.xlane.f32.xlu0 %v1236
        %v1268 = vpop.xlane.xlu0 %1267
        %v1269 = vrcp.pop %v1238
        %v1270 = vrcp.pop %v1240
        %v1271 = vrcp.pop %v1242
        %v1272 = vrcp.pop %v1244
        %v1273 = vrcp.pop %v1246
        %v1274 = vrcp.pop %v1248
        %v1275 = vrcp.pop %v1250
        %v1276 = vrcp.pop %v1252
        %v1277 = vrcp.pop %v1254
        %v1278 = vrcp.pop %v1256
        %v1279 = vrcp.pop %v1258
        %v1280 = vrcp.pop %v1260
        %v1281 = vrcp.pop %v1262
        %v1282 = vrcp.pop %v1264
        %v1283 = vrcp.pop %v1266
        %v1284 = vrcp.pop %v1268
        %v1285 = vmul.f32 %v1206, %v1269
        %v1286 = vmul.f32 %v1208, %v1270
        %v1287 = vmul.f32 %v1210, %v1271
        %v1288 = vmul.f32 %v1212, %v1272
        %v1289 = vmul.f32 %v1214, %v1273
        %v1290 = vmul.f32 %v1216, %v1274
        %v1291 = vmul.f32 %v1218, %v1275
        %v1292 = vmul.f32 %v1220, %v1276
        %v1293 = vmul.f32 %v1222, %v1277
        %v1294 = vmul.f32 %v1224, %v1278
        %v1295 = vmul.f32 %v1226, %v1279
        %v1296 = vmul.f32 %v1228, %v1280
        %v1297 = vmul.f32 %v1230, %v1281
        %v1298 = vmul.f32 %v1232, %v1282
        %v1299 = vmul.f32 %v1234, %v1283
        %v1300 = vmul.f32 %v1236, %v1284
        %v1301 = vpack.c.bf16 %v1286, %v1285
        %v1302 = vpack.c.bf16 %v1288, %v1287
        %v1303 = vpack.c.bf16 %v1290, %v1289
        %v1304 = vpack.c.bf16 %v1292, %v1291
        %v1305 = vpack.c.bf16 %v1294, %v1293
        %v1306 = vpack.c.bf16 %v1296, %v1295
        %v1307 = vpack.c.bf16 %v1298, %v1297
        %v1308 = vpack.c.bf16 %v1300, %v1299
        %1309 = vmatprep.subr.bf16.mxu0 0
        %1310 = vmatpush1.bf16.msra.mxu0 %v1010
        %1311 = vmatprep.subr.bf16.mxu0 0
        %1312 = vmatpush1.bf16.msra.mxu0 %v1009
        %1313 = vmatprep.subr.bf16.mxu0 0
        %1314 = vmatpush1.bf16.msra.mxu0 %v1008
        %1315 = vmatprep.subr.bf16.mxu0 0
        %1316 = vmatpush1.bf16.msra.mxu0 %v1007
        %1317 = vmatprep.subr.bf16.mxu0 0
        %1318 = vmatpush1.bf16.msra.mxu0 %v1006
        %1319 = vmatprep.subr.bf16.mxu0 0
        %1320 = vmatpush1.bf16.msra.mxu0 %v1005
        %1321 = vmatprep.subr.bf16.mxu0 0
        %1322 = vmatpush1.bf16.msra.mxu0 %v1004
        %1323 = vmatprep.subr.bf16.mxu0 0
        %1324 = vmatpush1.bf16.msra.mxu0 %v1003
        %1325 = vmatprep.subr.bf16.mxu0 0
        %1326 = vmatpush2.bf16.msra.mxu0 0
        %1327 = vmatprep.subr.bf16.mxu0 0
        %1328 = vmatpush2.bf16.msra.mxu0 0
        %1329 = vmatprep.subr.bf16.mxu0 0
        %1330 = vmatpush2.bf16.msra.mxu0 0
        %1331 = vmatprep.subr.bf16.mxu0 0
        %1332 = vmatpush2.bf16.msra.mxu0 0
        %1333 = vmatprep.subr.bf16.mxu0 0
        %1334 = vmatpush2.bf16.msra.mxu0 0
        %1335 = vmatprep.subr.bf16.mxu0 0
        %1336 = vmatpush2.bf16.msra.mxu0 0
        %1337 = vmatprep.subr.bf16.mxu0 0
        %1338 = vmatpush2.bf16.msra.mxu0 0
        %1339 = vmatprep.subr.bf16.mxu0 0
        %1340 = vmatpush2.bf16.msra.mxu0 0
        %1341 = vmatprep.mubr.bf16.mxu0 0
        %1342 = vmatmul.mubr.bf16.gmra.mxu0 %v1301
        %v1343 = vpop.f32.mrf.mxu0
        %v1344 = vadd.f32 0.0, %v1343
        %v1345 = vpop.f32.mrf.mxu0
        %v1346 = vpop.f32.mrf.mxu0
        %v1347 = vadd.f32 0.0, %v1346
        %v1348 = vpop.f32.mrf.mxu0
        %1349 = vmatprep.mubr.bf16.mxu0 0
        %1350 = vmatmul.mubr.bf16.gmra.mxu0 %v1302
        %v1351 = vpop.f32.mrf.mxu0
        %v1352 = vadd.f32 0.0, %v1351
        %v1353 = vpop.f32.mrf.mxu0
        %v1354 = vpop.f32.mrf.mxu0
        %v1355 = vadd.f32 0.0, %v1354
        %v1356 = vpop.f32.mrf.mxu0
        %1357 = vmatprep.mubr.bf16.mxu0 0
        %1358 = vmatmul.mubr.bf16.gmra.mxu0 %v1303
        %v1359 = vpop.f32.mrf.mxu0
        %v1360 = vadd.f32 0.0, %v1359
        %v1361 = vpop.f32.mrf.mxu0
        %v1362 = vpop.f32.mrf.mxu0
        %v1363 = vadd.f32 0.0, %v1362
        %v1364 = vpop.f32.mrf.mxu0
        %1365 = vmatprep.mubr.bf16.mxu0 0
        %1366 = vmatmul.mubr.bf16.gmra.mxu0 %v1304
        %v1367 = vpop.f32.mrf.mxu0
        %v1368 = vadd.f32 0.0, %v1367
        %v1369 = vpop.f32.mrf.mxu0
        %v1370 = vpop.f32.mrf.mxu0
        %v1371 = vadd.f32 0.0, %v1370
        %v1372 = vpop.f32.mrf.mxu0
        %1373 = vmatprep.mubr.bf16.mxu0 0
        %1374 = vmatmul.mubr.bf16.gmra.mxu0 %v1305
        %v1375 = vpop.f32.mrf.mxu0
        %v1376 = vadd.f32 0.0, %v1375
        %v1377 = vpop.f32.mrf.mxu0
        %v1378 = vpop.f32.mrf.mxu0
        %v1379 = vadd.f32 0.0, %v1378
        %v1380 = vpop.f32.mrf.mxu0
        %1381 = vmatprep.mubr.bf16.mxu0 0
        %1382 = vmatmul.mubr.bf16.gmra.mxu0 %v1306
        %v1383 = vpop.f32.mrf.mxu0
        %v1384 = vadd.f32 0.0, %v1383
        %v1385 = vpop.f32.mrf.mxu0
        %v1386 = vpop.f32.mrf.mxu0
        %v1387 = vadd.f32 0.0, %v1386
        %v1388 = vpop.f32.mrf.mxu0
        %1389 = vmatprep.mubr.bf16.mxu0 0
        %1390 = vmatmul.mubr.bf16.gmra.mxu0 %v1307
        %v1391 = vpop.f32.mrf.mxu0
        %v1392 = vadd.f32 0.0, %v1391
        %v1393 = vpop.f32.mrf.mxu0
        %v1394 = vpop.f32.mrf.mxu0
        %v1395 = vadd.f32 0.0, %v1394
        %v1396 = vpop.f32.mrf.mxu0
        %1397 = vmatprep.mubr.bf16.mxu0 0
        %1398 = vmatmul.mubr.bf16.gmra.mxu0 %v1308
        %v1399 = vpop.f32.mrf.mxu0
        %v1400 = vadd.f32 0.0, %v1399
        %v1401 = vpop.f32.mrf.mxu0
        %v1402 = vpop.f32.mrf.mxu0
        %v1403 = vadd.f32 0.0, %v1402
        %v1404 = vpop.f32.mrf.mxu0
        %1405 = vdwg.mxu0
        %v1406 = vpack.c.bf16 %v1347, %v1344
        %v1407 = vpack.c.bf16 %v1355, %v1352
        %v1408 = vpack.c.bf16 %v1363, %v1360
        %v1409 = vpack.c.bf16 %v1371, %v1368
        %v1410 = vpack.c.bf16 %v1379, %v1376
        %v1411 = vpack.c.bf16 %v1387, %v1384
        %v1412 = vpack.c.bf16 %v1395, %v1392
        %v1413 = vpack.c.bf16 %v1403, %v1400
        %v1414 = vld [vmem:[#allocation10] sm:$0xf]
        %v1415 = vld [vmem:[#allocation10 + $0x4] sm:$0xf]
        %v1416 = vld [vmem:[#allocation10 + $0x8] sm:$0xf]
        %v1417 = vld [vmem:[#allocation10 + $0xc] sm:$0xf]
        %1426 = vrot.lane.b32.xlu0 %v987, 96
        %v1427 = vpop.permute.xlu0 %1426
        %1428 = vrot.lane.b32.xlu0 %v988, 96
        %v1429 = vpop.permute.xlu0 %1428
        %1430 = vrot.lane.b32.xlu0 %v989, 96
        %v1431 = vpop.permute.xlu0 %1430
        %1432 = vrot.lane.b32.xlu0 %v990, 96
        %v1433 = vpop.permute.xlu0 %1432
        %1434 = vrot.lane.b32.xlu0 %v991, 96
        %v1435 = vpop.permute.xlu0 %1434
        %1436 = vrot.lane.b32.xlu0 %v992, 96
        %v1437 = vpop.permute.xlu0 %1436
        %1438 = vrot.lane.b32.xlu0 %v993, 96
        %v1439 = vpop.permute.xlu0 %1438
        %1440 = vrot.lane.b32.xlu0 %v994, 96
        %v1441 = vpop.permute.xlu0 %1440
        %1450 = vrot.lane.b32.xlu0 %v995, 96
        %v1451 = vpop.permute.xlu0 %1450
        %1452 = vrot.lane.b32.xlu0 %v996, 96
        %v1453 = vpop.permute.xlu0 %1452
        %1454 = vrot.lane.b32.xlu0 %v997, 96
        %v1455 = vpop.permute.xlu0 %1454
        %1456 = vrot.lane.b32.xlu0 %v998, 96
        %v1457 = vpop.permute.xlu0 %1456
        %1458 = vrot.lane.b32.xlu0 %v999, 96
        %v1459 = vpop.permute.xlu0 %1458
        %1460 = vrot.lane.b32.xlu0 %v1000, 96
        %v1461 = vpop.permute.xlu0 %1460
        %1462 = vrot.lane.b32.xlu0 %v1001, 96
        %v1463 = vpop.permute.xlu0 %1462
        %1464 = vrot.lane.b32.xlu0 %v1002, 96
        %v1465 = vpop.permute.xlu0 %1464
        %v1467 = vsel %vm1011, %v1427, 0
        %v1470 = vsel %vm1011, %v1429, 0
        %v1473 = vsel %vm1011, %v1431, 0
        %v1476 = vsel %vm1011, %v1433, 0
        %v1479 = vsel %vm1011, %v1435, 0
        %v1482 = vsel %vm1011, %v1437, 0
        %v1485 = vsel %vm1011, %v1439, 0
        %v1488 = vsel %vm1011, %v1441, 0
        %v1491 = vsel %vm1011, %v1451, 0
        %v1494 = vsel %vm1011, %v1453, 0
        %v1497 = vsel %vm1011, %v1455, 0
        %v1500 = vsel %vm1011, %v1457, 0
        %v1503 = vsel %vm1011, %v1459, 0
        %v1506 = vsel %vm1011, %v1461, 0
        %v1509 = vsel %vm1011, %v1463, 0
        %v1512 = vsel %vm1011, %v1465, 0
        %1514 = vmatprep.subr.bf16.mxu0 0
        %1515 = vmatpush1.bf16.xpose.msra.mxu0 %v1512
        %1516 = vmatprep.subr.bf16.mxu0 0
        %1517 = vmatpush1.bf16.xpose.msra.mxu0 %v1509
        %1518 = vmatprep.subr.bf16.mxu0 0
        %1519 = vmatpush1.bf16.xpose.msra.mxu0 %v1506
        %1520 = vmatprep.subr.bf16.mxu0 0
        %1521 = vmatpush1.bf16.xpose.msra.mxu0 %v1503
        %1522 = vmatprep.subr.bf16.mxu0 0
        %1523 = vmatpush1.bf16.xpose.msra.mxu0 %v1500
        %1524 = vmatprep.subr.bf16.mxu0 0
        %1525 = vmatpush1.bf16.xpose.msra.mxu0 %v1497
        %1526 = vmatprep.subr.bf16.mxu0 0
        %1527 = vmatpush1.bf16.xpose.msra.mxu0 %v1494
        %1528 = vmatprep.subr.bf16.mxu0 0
        %1529 = vmatpush1.bf16.xpose.msra.mxu0 %v1491
        %1530 = vmatprep.subr.bf16.mxu0 0
        %1531 = vmatpush2.bf16.xpose.msra.mxu0 0
        %1532 = vmatprep.subr.bf16.mxu0 0
        %1533 = vmatpush2.bf16.xpose.msra.mxu0 0
        %1534 = vmatprep.subr.bf16.mxu0 0
        %1535 = vmatpush2.bf16.xpose.msra.mxu0 0
        %1536 = vmatprep.subr.bf16.mxu0 0
        %1537 = vmatpush2.bf16.xpose.msra.mxu0 0
        %1538 = vmatprep.subr.bf16.mxu0 0
        %1539 = vmatpush2.bf16.xpose.msra.mxu0 0
        %1540 = vmatprep.subr.bf16.mxu0 0
        %1541 = vmatpush2.bf16.xpose.msra.mxu0 0
        %1542 = vmatprep.subr.bf16.mxu0 0
        %1543 = vmatpush2.bf16.xpose.msra.mxu0 0
        %1544 = vmatprep.subr.bf16.mxu0 0
        %1545 = vmatpush2.bf16.xpose.msra.mxu0 0
        %1546 = vmatprep.mubr.bf16.mxu0 0
        %1547 = vmatmul.mubr.bf16.gmra.mxu0 %v1467
        %v1548 = vpop.f32.mrf.mxu0
        %v1549 = vadd.f32 %v522, %v1548
        %v1550 = vpop.f32.mrf.mxu0
        %v1551 = vpop.f32.mrf.mxu0
        %v1552 = vadd.f32 %v523, %v1551
        %v1553 = vpop.f32.mrf.mxu0
        %1554 = vmatprep.mubr.bf16.mxu0 0
        %1555 = vmatmul.mubr.bf16.gmra.mxu0 %v1470
        %v1556 = vpop.f32.mrf.mxu0
        %v1557 = vadd.f32 %v524, %v1556
        %v1558 = vpop.f32.mrf.mxu0
        %v1559 = vpop.f32.mrf.mxu0
        %v1560 = vadd.f32 %v525, %v1559
        %v1561 = vpop.f32.mrf.mxu0
        %1562 = vmatprep.mubr.bf16.mxu0 0
        %1563 = vmatmul.mubr.bf16.gmra.mxu0 %v1473
        %v1564 = vpop.f32.mrf.mxu0
        %v1565 = vadd.f32 %v526, %v1564
        %v1566 = vpop.f32.mrf.mxu0
        %v1567 = vpop.f32.mrf.mxu0
        %v1568 = vadd.f32 %v527, %v1567
        %v1569 = vpop.f32.mrf.mxu0
        %1570 = vmatprep.mubr.bf16.mxu0 0
        %1571 = vmatmul.mubr.bf16.gmra.mxu0 %v1476
        %v1572 = vpop.f32.mrf.mxu0
        %v1573 = vadd.f32 %v528, %v1572
        %v1574 = vpop.f32.mrf.mxu0
        %v1575 = vpop.f32.mrf.mxu0
        %v1576 = vadd.f32 %v529, %v1575
        %v1577 = vpop.f32.mrf.mxu0
        %1578 = vmatprep.mubr.bf16.mxu0 0
        %1579 = vmatmul.mubr.bf16.gmra.mxu0 %v1479
        %v1580 = vpop.f32.mrf.mxu0
        %v1581 = vadd.f32 %v530, %v1580
        %v1582 = vpop.f32.mrf.mxu0
        %v1583 = vpop.f32.mrf.mxu0
        %v1584 = vadd.f32 %v531, %v1583
        %v1585 = vpop.f32.mrf.mxu0
        %1586 = vmatprep.mubr.bf16.mxu0 0
        %1587 = vmatmul.mubr.bf16.gmra.mxu0 %v1482
        %v1588 = vpop.f32.mrf.mxu0
        %v1589 = vadd.f32 %v532, %v1588
        %v1590 = vpop.f32.mrf.mxu0
        %v1591 = vpop.f32.mrf.mxu0
        %v1592 = vadd.f32 %v533, %v1591
        %v1593 = vpop.f32.mrf.mxu0
        %1594 = vmatprep.mubr.bf16.mxu0 0
        %1595 = vmatmul.mubr.bf16.gmra.mxu0 %v1485
        %v1596 = vpop.f32.mrf.mxu0
        %v1597 = vadd.f32 %v534, %v1596
        %v1598 = vpop.f32.mrf.mxu0
        %v1599 = vpop.f32.mrf.mxu0
        %v1600 = vadd.f32 %v535, %v1599
        %v1601 = vpop.f32.mrf.mxu0
        %1602 = vmatprep.mubr.bf16.mxu0 0
        %1603 = vmatmul.mubr.bf16.gmra.mxu0 %v1488
        %v1604 = vpop.f32.mrf.mxu0
        %v1605 = vadd.f32 %v536, %v1604
        %v1606 = vpop.f32.mrf.mxu0
        %v1607 = vpop.f32.mrf.mxu0
        %v1608 = vadd.f32 %v537, %v1607
        %v1609 = vpop.f32.mrf.mxu0
        %1610 = vdwg.mxu0
        %1611 = vmax.xlane.f32.xlu0 %v1549
        %v1612 = vpop.xlane.xlu0 %1611
        %1613 = vmax.xlane.f32.xlu0 %v1552
        %v1614 = vpop.xlane.xlu0 %1613
        %1615 = vmax.xlane.f32.xlu0 %v1557
        %v1616 = vpop.xlane.xlu0 %1615
        %1617 = vmax.xlane.f32.xlu0 %v1560
        %v1618 = vpop.xlane.xlu0 %1617
        %1619 = vmax.xlane.f32.xlu0 %v1565
        %v1620 = vpop.xlane.xlu0 %1619
        %1621 = vmax.xlane.f32.xlu0 %v1568
        %v1622 = vpop.xlane.xlu0 %1621
        %1623 = vmax.xlane.f32.xlu0 %v1573
        %v1624 = vpop.xlane.xlu0 %1623
        %1625 = vmax.xlane.f32.xlu0 %v1576
        %v1626 = vpop.xlane.xlu0 %1625
        %1627 = vmax.xlane.f32.xlu0 %v1581
        %v1628 = vpop.xlane.xlu0 %1627
        %1629 = vmax.xlane.f32.xlu0 %v1584
        %v1630 = vpop.xlane.xlu0 %1629
        %1631 = vmax.xlane.f32.xlu0 %v1589
        %v1632 = vpop.xlane.xlu0 %1631
        %1633 = vmax.xlane.f32.xlu0 %v1592
        %v1634 = vpop.xlane.xlu0 %1633
        %1635 = vmax.xlane.f32.xlu0 %v1597
        %v1636 = vpop.xlane.xlu0 %1635
        %1637 = vmax.xlane.f32.xlu0 %v1600
        %v1638 = vpop.xlane.xlu0 %1637
        %1639 = vmax.xlane.f32.xlu0 %v1605
        %v1640 = vpop.xlane.xlu0 %1639
        %1641 = vmax.xlane.f32.xlu0 %v1608
        %v1642 = vpop.xlane.xlu0 %1641
        %v1643 = vsub.f32 %v1549, %v1612
        %v1644 = vsub.f32 %v1552, %v1614
        %v1645 = vsub.f32 %v1557, %v1616
        %v1646 = vsub.f32 %v1560, %v1618
        %v1647 = vsub.f32 %v1565, %v1620
        %v1648 = vsub.f32 %v1568, %v1622
        %v1649 = vsub.f32 %v1573, %v1624
        %v1650 = vsub.f32 %v1576, %v1626
        %v1651 = vsub.f32 %v1581, %v1628
        %v1652 = vsub.f32 %v1584, %v1630
        %v1653 = vsub.f32 %v1589, %v1632
        %v1654 = vsub.f32 %v1592, %v1634
        %v1655 = vsub.f32 %v1597, %v1636
        %v1656 = vsub.f32 %v1600, %v1638
        %v1657 = vsub.f32 %v1605, %v1640
        %v1658 = vsub.f32 %v1608, %v1642
        %v1659 = vmul.f32 %v1643, 1.442695
        %v1660 = vpow.pop %v1659
        %v1661 = vmul.f32 %v1644, 1.442695
        %v1662 = vpow.pop %v1661
        %v1663 = vmul.f32 %v1645, 1.442695
        %v1664 = vpow.pop %v1663
        %v1665 = vmul.f32 %v1646, 1.442695
        %v1666 = vpow.pop %v1665
        %v1667 = vmul.f32 %v1647, 1.442695
        %v1668 = vpow.pop %v1667
        %v1669 = vmul.f32 %v1648, 1.442695
        %v1670 = vpow.pop %v1669
        %v1671 = vmul.f32 %v1649, 1.442695
        %v1672 = vpow.pop %v1671
        %v1673 = vmul.f32 %v1650, 1.442695
        %v1674 = vpow.pop %v1673
        %v1675 = vmul.f32 %v1651, 1.442695
        %v1676 = vpow.pop %v1675
        %v1677 = vmul.f32 %v1652, 1.442695
        %v1678 = vpow.pop %v1677
        %v1679 = vmul.f32 %v1653, 1.442695
        %v1680 = vpow.pop %v1679
        %v1681 = vmul.f32 %v1654, 1.442695
        %v1682 = vpow.pop %v1681
        %v1683 = vmul.f32 %v1655, 1.442695
        %v1684 = vpow.pop %v1683
        %v1685 = vmul.f32 %v1656, 1.442695
        %v1686 = vpow.pop %v1685
        %v1687 = vmul.f32 %v1657, 1.442695
        %v1688 = vpow.pop %v1687
        %v1689 = vmul.f32 %v1658, 1.442695
        %v1690 = vpow.pop %v1689
        %1691 = vadd.xlane.f32.xlu0 %v1660
        %v1692 = vpop.xlane.xlu0 %1691
        %1693 = vadd.xlane.f32.xlu0 %v1662
        %v1694 = vpop.xlane.xlu0 %1693
        %1695 = vadd.xlane.f32.xlu0 %v1664
        %v1696 = vpop.xlane.xlu0 %1695
        %1697 = vadd.xlane.f32.xlu0 %v1666
        %v1698 = vpop.xlane.xlu0 %1697
        %1699 = vadd.xlane.f32.xlu0 %v1668
        %v1700 = vpop.xlane.xlu0 %1699
        %1701 = vadd.xlane.f32.xlu0 %v1670
        %v1702 = vpop.xlane.xlu0 %1701
        %1703 = vadd.xlane.f32.xlu0 %v1672
        %v1704 = vpop.xlane.xlu0 %1703
        %1705 = vadd.xlane.f32.xlu0 %v1674
        %v1706 = vpop.xlane.xlu0 %1705
        %1707 = vadd.xlane.f32.xlu0 %v1676
        %v1708 = vpop.xlane.xlu0 %1707
        %1709 = vadd.xlane.f32.xlu0 %v1678
        %v1710 = vpop.xlane.xlu0 %1709
        %1711 = vadd.xlane.f32.xlu0 %v1680
        %v1712 = vpop.xlane.xlu0 %1711
        %1713 = vadd.xlane.f32.xlu0 %v1682
        %v1714 = vpop.xlane.xlu0 %1713
        %1715 = vadd.xlane.f32.xlu0 %v1684
        %v1716 = vpop.xlane.xlu0 %1715
        %1717 = vadd.xlane.f32.xlu0 %v1686
        %v1718 = vpop.xlane.xlu0 %1717
        %1719 = vadd.xlane.f32.xlu0 %v1688
        %v1720 = vpop.xlane.xlu0 %1719
        %1721 = vadd.xlane.f32.xlu0 %v1690
        %v1722 = vpop.xlane.xlu0 %1721
        %v1723 = vrcp.pop %v1692
        %v1724 = vrcp.pop %v1694
        %v1725 = vrcp.pop %v1696
        %v1726 = vrcp.pop %v1698
        %v1727 = vrcp.pop %v1700
        %v1728 = vrcp.pop %v1702
        %v1729 = vrcp.pop %v1704
        %v1730 = vrcp.pop %v1706
        %v1731 = vrcp.pop %v1708
        %v1732 = vrcp.pop %v1710
        %v1733 = vrcp.pop %v1712
        %v1734 = vrcp.pop %v1714
        %v1735 = vrcp.pop %v1716
        %v1736 = vrcp.pop %v1718
        %v1737 = vrcp.pop %v1720
        %v1738 = vrcp.pop %v1722
        %v1739 = vmul.f32 %v1660, %v1723
        %v1740 = vmul.f32 %v1662, %v1724
        %v1741 = vmul.f32 %v1664, %v1725
        %v1742 = vmul.f32 %v1666, %v1726
        %v1743 = vmul.f32 %v1668, %v1727
        %v1744 = vmul.f32 %v1670, %v1728
        %v1745 = vmul.f32 %v1672, %v1729
        %v1746 = vmul.f32 %v1674, %v1730
        %v1747 = vmul.f32 %v1676, %v1731
        %v1748 = vmul.f32 %v1678, %v1732
        %v1749 = vmul.f32 %v1680, %v1733
        %v1750 = vmul.f32 %v1682, %v1734
        %v1751 = vmul.f32 %v1684, %v1735
        %v1752 = vmul.f32 %v1686, %v1736
        %v1753 = vmul.f32 %v1688, %v1737
        %v1754 = vmul.f32 %v1690, %v1738
        %v1755 = vpack.c.bf16 %v1740, %v1739
        %v1756 = vpack.c.bf16 %v1742, %v1741
        %v1757 = vpack.c.bf16 %v1744, %v1743
        %v1758 = vpack.c.bf16 %v1746, %v1745
        %v1759 = vpack.c.bf16 %v1748, %v1747
        %v1760 = vpack.c.bf16 %v1750, %v1749
        %v1761 = vpack.c.bf16 %v1752, %v1751
        %v1762 = vpack.c.bf16 %v1754, %v1753
        %1771 = vrot.lane.b32.xlu0 %v1003, 96
        %v1772 = vpop.permute.xlu0 %1771
        %1773 = vrot.lane.b32.xlu0 %v1004, 96
        %v1774 = vpop.permute.xlu0 %1773
        %1775 = vrot.lane.b32.xlu0 %v1005, 96
        %v1776 = vpop.permute.xlu0 %1775
        %1777 = vrot.lane.b32.xlu0 %v1006, 96
        %v1778 = vpop.permute.xlu0 %1777
        %1779 = vrot.lane.b32.xlu0 %v1007, 96
        %v1780 = vpop.permute.xlu0 %1779
        %1781 = vrot.lane.b32.xlu0 %v1008, 96
        %v1782 = vpop.permute.xlu0 %1781
        %1783 = vrot.lane.b32.xlu0 %v1009, 96
        %v1784 = vpop.permute.xlu0 %1783
        %1785 = vrot.lane.b32.xlu0 %v1010, 96
        %v1786 = vpop.permute.xlu0 %1785
        %1795 = vmatprep.subr.bf16.mxu0 0
        %1796 = vmatpush1.bf16.msra.mxu0 %v1786
        %1797 = vmatprep.subr.bf16.mxu0 0
        %1798 = vmatpush1.bf16.msra.mxu0 %v1784
        %1799 = vmatprep.subr.bf16.mxu0 0
        %1800 = vmatpush1.bf16.msra.mxu0 %v1782
        %1801 = vmatprep.subr.bf16.mxu0 0
        %1802 = vmatpush1.bf16.msra.mxu0 %v1780
        %1803 = vmatprep.subr.bf16.mxu0 0
        %1804 = vmatpush1.bf16.msra.mxu0 %v1778
        %1805 = vmatprep.subr.bf16.mxu0 0
        %1806 = vmatpush1.bf16.msra.mxu0 %v1776
        %1807 = vmatprep.subr.bf16.mxu0 0
        %1808 = vmatpush1.bf16.msra.mxu0 %v1774
        %1809 = vmatprep.subr.bf16.mxu0 0
        %1810 = vmatpush1.bf16.msra.mxu0 %v1772
        %1811 = vmatprep.subr.bf16.mxu0 0
        %1812 = vmatpush2.bf16.msra.mxu0 0
        %1813 = vmatprep.subr.bf16.mxu0 0
        %1814 = vmatpush2.bf16.msra.mxu0 0
        %1815 = vmatprep.subr.bf16.mxu0 0
        %1816 = vmatpush2.bf16.msra.mxu0 0
        %1817 = vmatprep.subr.bf16.mxu0 0
        %1818 = vmatpush2.bf16.msra.mxu0 0
        %1819 = vmatprep.subr.bf16.mxu0 0
        %1820 = vmatpush2.bf16.msra.mxu0 0
        %1821 = vmatprep.subr.bf16.mxu0 0
        %1822 = vmatpush2.bf16.msra.mxu0 0
        %1823 = vmatprep.subr.bf16.mxu0 0
        %1824 = vmatpush2.bf16.msra.mxu0 0
        %1825 = vmatprep.subr.bf16.mxu0 0
        %1826 = vmatpush2.bf16.msra.mxu0 0
        %1827 = vmatprep.mubr.bf16.mxu0 0
        %1828 = vmatmul.mubr.bf16.gmra.mxu0 %v1755
        %v1829 = vpop.f32.mrf.mxu0
        %v1830 = vadd.f32 0.0, %v1829
        %v1831 = vpop.f32.mrf.mxu0
        %v1832 = vpop.f32.mrf.mxu0
        %v1833 = vadd.f32 0.0, %v1832
        %v1834 = vpop.f32.mrf.mxu0
        %1835 = vmatprep.mubr.bf16.mxu0 0
        %1836 = vmatmul.mubr.bf16.gmra.mxu0 %v1756
        %v1837 = vpop.f32.mrf.mxu0
        %v1838 = vadd.f32 0.0, %v1837
        %v1839 = vpop.f32.mrf.mxu0
        %v1840 = vpop.f32.mrf.mxu0
        %v1841 = vadd.f32 0.0, %v1840
        %v1842 = vpop.f32.mrf.mxu0
        %1843 = vmatprep.mubr.bf16.mxu0 0
        %1844 = vmatmul.mubr.bf16.gmra.mxu0 %v1757
        %v1845 = vpop.f32.mrf.mxu0
        %v1846 = vadd.f32 0.0, %v1845
        %v1847 = vpop.f32.mrf.mxu0
        %v1848 = vpop.f32.mrf.mxu0
        %v1849 = vadd.f32 0.0, %v1848
        %v1850 = vpop.f32.mrf.mxu0
        %1851 = vmatprep.mubr.bf16.mxu0 0
        %1852 = vmatmul.mubr.bf16.gmra.mxu0 %v1758
        %v1853 = vpop.f32.mrf.mxu0
        %v1854 = vadd.f32 0.0, %v1853
        %v1855 = vpop.f32.mrf.mxu0
        %v1856 = vpop.f32.mrf.mxu0
        %v1857 = vadd.f32 0.0, %v1856
        %v1858 = vpop.f32.mrf.mxu0
        %1859 = vmatprep.mubr.bf16.mxu0 0
        %1860 = vmatmul.mubr.bf16.gmra.mxu0 %v1759
        %v1861 = vpop.f32.mrf.mxu0
        %v1862 = vadd.f32 0.0, %v1861
        %v1863 = vpop.f32.mrf.mxu0
        %v1864 = vpop.f32.mrf.mxu0
        %v1865 = vadd.f32 0.0, %v1864
        %v1866 = vpop.f32.mrf.mxu0
        %1867 = vmatprep.mubr.bf16.mxu0 0
        %1868 = vmatmul.mubr.bf16.gmra.mxu0 %v1760
        %v1869 = vpop.f32.mrf.mxu0
        %v1870 = vadd.f32 0.0, %v1869
        %v1871 = vpop.f32.mrf.mxu0
        %v1872 = vpop.f32.mrf.mxu0
        %v1873 = vadd.f32 0.0, %v1872
        %v1874 = vpop.f32.mrf.mxu0
        %1875 = vmatprep.mubr.bf16.mxu0 0
        %1876 = vmatmul.mubr.bf16.gmra.mxu0 %v1761
        %v1877 = vpop.f32.mrf.mxu0
        %v1878 = vadd.f32 0.0, %v1877
        %v1879 = vpop.f32.mrf.mxu0
        %v1880 = vpop.f32.mrf.mxu0
        %v1881 = vadd.f32 0.0, %v1880
        %v1882 = vpop.f32.mrf.mxu0
        %1883 = vmatprep.mubr.bf16.mxu0 0
        %1884 = vmatmul.mubr.bf16.gmra.mxu0 %v1762
        %v1885 = vpop.f32.mrf.mxu0
        %v1886 = vadd.f32 0.0, %v1885
        %v1887 = vpop.f32.mrf.mxu0
        %v1888 = vpop.f32.mrf.mxu0
        %v1889 = vadd.f32 0.0, %v1888
        %v1890 = vpop.f32.mrf.mxu0
        %1891 = vdwg.mxu0
        %v1892 = vpack.c.bf16 %v1833, %v1830
        %v1893 = vpack.c.bf16 %v1841, %v1838
        %v1894 = vpack.c.bf16 %v1849, %v1846
        %v1895 = vpack.c.bf16 %v1857, %v1854
        %v1896 = vpack.c.bf16 %v1865, %v1862
        %v1897 = vpack.c.bf16 %v1873, %v1870
        %v1898 = vpack.c.bf16 %v1881, %v1878
        %v1899 = vpack.c.bf16 %v1889, %v1886
        %v1900 = vld [vmem:[#allocation10 + $0x10] sm:$0xf]
        %v1901 = vld [vmem:[#allocation10 + $0x14] sm:$0xf]
        %v1902 = vld [vmem:[#allocation10 + $0x18] sm:$0xf]
        %v1903 = vld [vmem:[#allocation10 + $0x1c] sm:$0xf]
        %v1908 = vunpack.c.l.b16 %v1900
        %v1909 = vunpack.c.l.b16 %v1901
        %v1910 = vunpack.c.l.b16 %v1902
        %v1911 = vunpack.c.l.b16 %v1903
        %v1912 = vpack.c.b16 %v1909, %v1908
        %v1913 = vpack.c.b16 %v1911, %v1910
        %v1917 = vsel %vm1011, %v1892, 0
        %v1920 = vsel %vm1011, %v1893, 0
        %v1923 = vsel %vm1011, %v1894, 0
        %v1926 = vsel %vm1011, %v1895, 0
        %v1929 = vsel %vm1011, %v1896, 0
        %v1932 = vsel %vm1011, %v1897, 0
        %v1935 = vsel %vm1011, %v1898, 0
        %v1938 = vsel %vm1011, %v1899, 0
        %1940 = vmatprep.subr.bf16.mxu0 0
        %1941 = vmatpush1.bf16.msra.mxu0 0
        %1942 = vmatprep.subr.bf16.mxu0 0
        %1943 = vmatpush1.bf16.msra.mxu0 0
        %1944 = vmatprep.subr.bf16.mxu0 0
        %1945 = vmatpush1.bf16.msra.mxu0 0
        %1946 = vmatprep.subr.bf16.mxu0 0
        %1947 = vmatpush1.bf16.msra.mxu0 0
        %1948 = vmatprep.subr.bf16.mxu0 0
        %1949 = vmatpush1.bf16.msra.mxu0 0
        %1950 = vmatprep.subr.bf16.mxu0 0
        %1951 = vmatpush1.bf16.msra.mxu0 0
        %1952 = vmatprep.subr.bf16.mxu0 0
        %1953 = vmatpush1.bf16.msra.mxu0 %v1913
        %1954 = vmatprep.subr.bf16.mxu0 0
        %1955 = vmatpush1.bf16.msra.mxu0 %v1912
        %1956 = vmatprep.subr.bf16.mxu0 0
        %1957 = vmatpush2.bf16.msra.mxu0 0
        %1958 = vmatprep.subr.bf16.mxu0 0
        %1959 = vmatpush2.bf16.msra.mxu0 0
        %1960 = vmatprep.subr.bf16.mxu0 0
        %1961 = vmatpush2.bf16.msra.mxu0 0
        %1962 = vmatprep.subr.bf16.mxu0 0
        %1963 = vmatpush2.bf16.msra.mxu0 0
        %1964 = vmatprep.subr.bf16.mxu0 0
        %1965 = vmatpush2.bf16.msra.mxu0 0
        %1966 = vmatprep.subr.bf16.mxu0 0
        %1967 = vmatpush2.bf16.msra.mxu0 0
        %1968 = vmatprep.subr.bf16.mxu0 0
        %1969 = vmatpush2.bf16.msra.mxu0 0
        %1970 = vmatprep.subr.bf16.mxu0 0
        %1971 = vmatpush2.bf16.msra.mxu0 0
        %1972 = vmatprep.mubr.bf16.mxu0 0
        %1973 = vmatmul.mubr.bf16.gmra.mxu0 %v1917
        %v1974 = vpop.f32.mrf.mxu0
        %v1975 = vadd.f32 0.0, %v1974
        %v1976 = vpop.f32.mrf.mxu0
        %v1977 = vpop.f32.mrf.mxu0
        %v1978 = vadd.f32 0.0, %v1977
        %v1979 = vpop.f32.mrf.mxu0
        %1980 = vmatprep.mubr.bf16.mxu0 0
        %1981 = vmatmul.mubr.bf16.gmra.mxu0 %v1920
        %v1982 = vpop.f32.mrf.mxu0
        %v1983 = vadd.f32 0.0, %v1982
        %v1984 = vpop.f32.mrf.mxu0
        %v1985 = vpop.f32.mrf.mxu0
        %v1986 = vadd.f32 0.0, %v1985
        %v1987 = vpop.f32.mrf.mxu0
        %1988 = vmatprep.mubr.bf16.mxu0 0
        %1989 = vmatmul.mubr.bf16.gmra.mxu0 %v1923
        %v1990 = vpop.f32.mrf.mxu0
        %v1991 = vadd.f32 0.0, %v1990
        %v1992 = vpop.f32.mrf.mxu0
        %v1993 = vpop.f32.mrf.mxu0
        %v1994 = vadd.f32 0.0, %v1993
        %v1995 = vpop.f32.mrf.mxu0
        %1996 = vmatprep.mubr.bf16.mxu0 0
        %1997 = vmatmul.mubr.bf16.gmra.mxu0 %v1926
        %v1998 = vpop.f32.mrf.mxu0
        %v1999 = vadd.f32 0.0, %v1998
        %v2000 = vpop.f32.mrf.mxu0
        %v2001 = vpop.f32.mrf.mxu0
        %v2002 = vadd.f32 0.0, %v2001
        %v2003 = vpop.f32.mrf.mxu0
        %2004 = vmatprep.mubr.bf16.mxu0 0
        %2005 = vmatmul.mubr.bf16.gmra.mxu0 %v1929
        %v2006 = vpop.f32.mrf.mxu0
        %v2007 = vadd.f32 0.0, %v2006
        %v2008 = vpop.f32.mrf.mxu0
        %v2009 = vpop.f32.mrf.mxu0
        %v2010 = vadd.f32 0.0, %v2009
        %v2011 = vpop.f32.mrf.mxu0
        %2012 = vmatprep.mubr.bf16.mxu0 0
        %2013 = vmatmul.mubr.bf16.gmra.mxu0 %v1932
        %v2014 = vpop.f32.mrf.mxu0
        %v2015 = vadd.f32 0.0, %v2014
        %v2016 = vpop.f32.mrf.mxu0
        %v2017 = vpop.f32.mrf.mxu0
        %v2018 = vadd.f32 0.0, %v2017
        %v2019 = vpop.f32.mrf.mxu0
        %2020 = vmatprep.mubr.bf16.mxu0 0
        %2021 = vmatmul.mubr.bf16.gmra.mxu0 %v1935
        %v2022 = vpop.f32.mrf.mxu0
        %v2023 = vadd.f32 0.0, %v2022
        %v2024 = vpop.f32.mrf.mxu0
        %v2025 = vpop.f32.mrf.mxu0
        %v2026 = vadd.f32 0.0, %v2025
        %v2027 = vpop.f32.mrf.mxu0
        %2028 = vmatprep.mubr.bf16.mxu0 0
        %2029 = vmatmul.mubr.bf16.gmra.mxu0 %v1938
        %v2030 = vpop.f32.mrf.mxu0
        %v2031 = vadd.f32 0.0, %v2030
        %v2032 = vpop.f32.mrf.mxu0
        %v2033 = vpop.f32.mrf.mxu0
        %v2034 = vadd.f32 0.0, %v2033
        %v2035 = vpop.f32.mrf.mxu0
        %2036 = vdwg.mxu0
        %v2041 = vunpack.c.l.b16 %v1414
        %v2042 = vunpack.c.l.b16 %v1415
        %v2043 = vunpack.c.l.b16 %v1416
        %v2044 = vunpack.c.l.b16 %v1417
        %v2045 = vpack.c.b16 %v2042, %v2041
        %v2046 = vpack.c.b16 %v2044, %v2043
        %v2050 = vsel %vm1011, %v1406, 0
        %v2053 = vsel %vm1011, %v1407, 0
        %v2056 = vsel %vm1011, %v1408, 0
        %v2059 = vsel %vm1011, %v1409, 0
        %v2062 = vsel %vm1011, %v1410, 0
        %v2065 = vsel %vm1011, %v1411, 0
        %v2068 = vsel %vm1011, %v1412, 0
        %v2071 = vsel %vm1011, %v1413, 0
        %2073 = vmatprep.subr.bf16.mxu0 0
        %2074 = vmatpush1.bf16.msra.mxu0 0
        %2075 = vmatprep.subr.bf16.mxu0 0
        %2076 = vmatpush1.bf16.msra.mxu0 0
        %2077 = vmatprep.subr.bf16.mxu0 0
        %2078 = vmatpush1.bf16.msra.mxu0 0
        %2079 = vmatprep.subr.bf16.mxu0 0
        %2080 = vmatpush1.bf16.msra.mxu0 0
        %2081 = vmatprep.subr.bf16.mxu0 0
        %2082 = vmatpush1.bf16.msra.mxu0 0
        %2083 = vmatprep.subr.bf16.mxu0 0
        %2084 = vmatpush1.bf16.msra.mxu0 0
        %2085 = vmatprep.subr.bf16.mxu0 0
        %2086 = vmatpush1.bf16.msra.mxu0 %v2046
        %2087 = vmatprep.subr.bf16.mxu0 0
        %2088 = vmatpush1.bf16.msra.mxu0 %v2045
        %2089 = vmatprep.subr.bf16.mxu0 0
        %2090 = vmatpush2.bf16.msra.mxu0 0
        %2091 = vmatprep.subr.bf16.mxu0 0
        %2092 = vmatpush2.bf16.msra.mxu0 0
        %2093 = vmatprep.subr.bf16.mxu0 0
        %2094 = vmatpush2.bf16.msra.mxu0 0
        %2095 = vmatprep.subr.bf16.mxu0 0
        %2096 = vmatpush2.bf16.msra.mxu0 0
        %2097 = vmatprep.subr.bf16.mxu0 0
        %2098 = vmatpush2.bf16.msra.mxu0 0
        %2099 = vmatprep.subr.bf16.mxu0 0
        %2100 = vmatpush2.bf16.msra.mxu0 0
        %2101 = vmatprep.subr.bf16.mxu0 0
        %2102 = vmatpush2.bf16.msra.mxu0 0
        %2103 = vmatprep.subr.bf16.mxu0 0
        %2104 = vmatpush2.bf16.msra.mxu0 0
        %2105 = vmatprep.mubr.bf16.mxu0 0
        %2106 = vmatmul.mubr.bf16.gmra.mxu0 %v2050
        %v2107 = vpop.f32.mrf.mxu0
        %v2108 = vadd.f32 %v1975, %v2107
        %v2109 = vpop.f32.mrf.mxu0
        %v2110 = vpop.f32.mrf.mxu0
        %v2111 = vadd.f32 %v1978, %v2110
        %v2112 = vpop.f32.mrf.mxu0
        %2113 = vmatprep.mubr.bf16.mxu0 0
        %2114 = vmatmul.mubr.bf16.gmra.mxu0 %v2053
        %v2115 = vpop.f32.mrf.mxu0
        %v2116 = vadd.f32 %v1983, %v2115
        %v2117 = vpop.f32.mrf.mxu0
        %v2118 = vpop.f32.mrf.mxu0
        %v2119 = vadd.f32 %v1986, %v2118
        %v2120 = vpop.f32.mrf.mxu0
        %2121 = vmatprep.mubr.bf16.mxu0 0
        %2122 = vmatmul.mubr.bf16.gmra.mxu0 %v2056
        %v2123 = vpop.f32.mrf.mxu0
        %v2124 = vadd.f32 %v1991, %v2123
        %v2125 = vpop.f32.mrf.mxu0
        %v2126 = vpop.f32.mrf.mxu0
        %v2127 = vadd.f32 %v1994, %v2126
        %v2128 = vpop.f32.mrf.mxu0
        %2129 = vmatprep.mubr.bf16.mxu0 0
        %2130 = vmatmul.mubr.bf16.gmra.mxu0 %v2059
        %v2131 = vpop.f32.mrf.mxu0
        %v2132 = vadd.f32 %v1999, %v2131
        %v2133 = vpop.f32.mrf.mxu0
        %v2134 = vpop.f32.mrf.mxu0
        %v2135 = vadd.f32 %v2002, %v2134
        %v2136 = vpop.f32.mrf.mxu0
        %2137 = vmatprep.mubr.bf16.mxu0 0
        %2138 = vmatmul.mubr.bf16.gmra.mxu0 %v2062
        %v2139 = vpop.f32.mrf.mxu0
        %v2140 = vadd.f32 %v2007, %v2139
        %v2141 = vpop.f32.mrf.mxu0
        %v2142 = vpop.f32.mrf.mxu0
        %v2143 = vadd.f32 %v2010, %v2142
        %v2144 = vpop.f32.mrf.mxu0
        %2145 = vmatprep.mubr.bf16.mxu0 0
        %2146 = vmatmul.mubr.bf16.gmra.mxu0 %v2065
        %v2147 = vpop.f32.mrf.mxu0
        %v2148 = vadd.f32 %v2015, %v2147
        %v2149 = vpop.f32.mrf.mxu0
        %v2150 = vpop.f32.mrf.mxu0
        %v2151 = vadd.f32 %v2018, %v2150
        %v2152 = vpop.f32.mrf.mxu0
        %2153 = vmatprep.mubr.bf16.mxu0 0
        %2154 = vmatmul.mubr.bf16.gmra.mxu0 %v2068
        %v2155 = vpop.f32.mrf.mxu0
        %v2156 = vadd.f32 %v2023, %v2155
        %v2157 = vpop.f32.mrf.mxu0
        %v2158 = vpop.f32.mrf.mxu0
        %v2159 = vadd.f32 %v2026, %v2158
        %v2160 = vpop.f32.mrf.mxu0
        %2161 = vmatprep.mubr.bf16.mxu0 0
        %2162 = vmatmul.mubr.bf16.gmra.mxu0 %v2071
        %v2163 = vpop.f32.mrf.mxu0
        %v2164 = vadd.f32 %v2031, %v2163
        %v2165 = vpop.f32.mrf.mxu0
        %v2166 = vpop.f32.mrf.mxu0
        %v2167 = vadd.f32 %v2034, %v2166
        %v2168 = vpop.f32.mrf.mxu0
        %2169 = vdwg.mxu0
        %2170 = vrot.lane.b32.xlu0 %v987, 64
        %v2171 = vpop.permute.xlu0 %2170
        %2172 = vrot.lane.b32.xlu0 %v988, 64
        %v2173 = vpop.permute.xlu0 %2172
        %2174 = vrot.lane.b32.xlu0 %v989, 64
        %v2175 = vpop.permute.xlu0 %2174
        %2176 = vrot.lane.b32.xlu0 %v990, 64
        %v2177 = vpop.permute.xlu0 %2176
        %2178 = vrot.lane.b32.xlu0 %v991, 64
        %v2179 = vpop.permute.xlu0 %2178
        %2180 = vrot.lane.b32.xlu0 %v992, 64
        %v2181 = vpop.permute.xlu0 %2180
        %2182 = vrot.lane.b32.xlu0 %v993, 64
        %v2183 = vpop.permute.xlu0 %2182
        %2184 = vrot.lane.b32.xlu0 %v994, 64
        %v2185 = vpop.permute.xlu0 %2184
        %2186 = vrot.lane.b32.xlu0 %v995, 64
        %v2187 = vpop.permute.xlu0 %2186
        %2188 = vrot.lane.b32.xlu0 %v996, 64
        %v2189 = vpop.permute.xlu0 %2188
        %2190 = vrot.lane.b32.xlu0 %v997, 64
        %v2191 = vpop.permute.xlu0 %2190
        %2192 = vrot.lane.b32.xlu0 %v998, 64
        %v2193 = vpop.permute.xlu0 %2192
        %2194 = vrot.lane.b32.xlu0 %v999, 64
        %v2195 = vpop.permute.xlu0 %2194
        %2196 = vrot.lane.b32.xlu0 %v1000, 64
        %v2197 = vpop.permute.xlu0 %2196
        %2198 = vrot.lane.b32.xlu0 %v1001, 64
        %v2199 = vpop.permute.xlu0 %2198
        %2200 = vrot.lane.b32.xlu0 %v1002, 64
        %v2201 = vpop.permute.xlu0 %2200
        %v2203 = vsel %vm1011, %v2171, 0
        %v2206 = vsel %vm1011, %v2173, 0
        %v2209 = vsel %vm1011, %v2175, 0
        %v2212 = vsel %vm1011, %v2177, 0
        %v2215 = vsel %vm1011, %v2179, 0
        %v2218 = vsel %vm1011, %v2181, 0
        %v2221 = vsel %vm1011, %v2183, 0
        %v2224 = vsel %vm1011, %v2185, 0
        %v2227 = vsel %vm1011, %v2187, 0
        %v2230 = vsel %vm1011, %v2189, 0
        %v2233 = vsel %vm1011, %v2191, 0
        %v2236 = vsel %vm1011, %v2193, 0
        %v2239 = vsel %vm1011, %v2195, 0
        %v2242 = vsel %vm1011, %v2197, 0
        %v2245 = vsel %vm1011, %v2199, 0
        %v2248 = vsel %vm1011, %v2201, 0
        %2250 = vmatprep.subr.bf16.mxu0 0
        %2251 = vmatpush1.bf16.xpose.msra.mxu0 %v2248
        %2252 = vmatprep.subr.bf16.mxu0 0
        %2253 = vmatpush1.bf16.xpose.msra.mxu0 %v2245
        %2254 = vmatprep.subr.bf16.mxu0 0
        %2255 = vmatpush1.bf16.xpose.msra.mxu0 %v2242
        %2256 = vmatprep.subr.bf16.mxu0 0
        %2257 = vmatpush1.bf16.xpose.msra.mxu0 %v2239
        %2258 = vmatprep.subr.bf16.mxu0 0
        %2259 = vmatpush1.bf16.xpose.msra.mxu0 %v2236
        %2260 = vmatprep.subr.bf16.mxu0 0
        %2261 = vmatpush1.bf16.xpose.msra.mxu0 %v2233
        %2262 = vmatprep.subr.bf16.mxu0 0
        %2263 = vmatpush1.bf16.xpose.msra.mxu0 %v2230
        %2264 = vmatprep.subr.bf16.mxu0 0
        %2265 = vmatpush1.bf16.xpose.msra.mxu0 %v2227
        %2266 = vmatprep.subr.bf16.mxu0 0
        %2267 = vmatpush2.bf16.xpose.msra.mxu0 0
        %2268 = vmatprep.subr.bf16.mxu0 0
        %2269 = vmatpush2.bf16.xpose.msra.mxu0 0
        %2270 = vmatprep.subr.bf16.mxu0 0
        %2271 = vmatpush2.bf16.xpose.msra.mxu0 0
        %2272 = vmatprep.subr.bf16.mxu0 0
        %2273 = vmatpush2.bf16.xpose.msra.mxu0 0
        %2274 = vmatprep.subr.bf16.mxu0 0
        %2275 = vmatpush2.bf16.xpose.msra.mxu0 0
        %2276 = vmatprep.subr.bf16.mxu0 0
        %2277 = vmatpush2.bf16.xpose.msra.mxu0 0
        %2278 = vmatprep.subr.bf16.mxu0 0
        %2279 = vmatpush2.bf16.xpose.msra.mxu0 0
        %2280 = vmatprep.subr.bf16.mxu0 0
        %2281 = vmatpush2.bf16.xpose.msra.mxu0 0
        %2282 = vmatprep.mubr.bf16.mxu0 0
        %2283 = vmatmul.mubr.bf16.gmra.mxu0 %v2203
        %v2284 = vpop.f32.mrf.mxu0
        %v2285 = vadd.f32 %v522, %v2284
        %v2286 = vpop.f32.mrf.mxu0
        %v2287 = vpop.f32.mrf.mxu0
        %v2288 = vadd.f32 %v523, %v2287
        %v2289 = vpop.f32.mrf.mxu0
        %2290 = vmatprep.mubr.bf16.mxu0 0
        %2291 = vmatmul.mubr.bf16.gmra.mxu0 %v2206
        %v2292 = vpop.f32.mrf.mxu0
        %v2293 = vadd.f32 %v524, %v2292
        %v2294 = vpop.f32.mrf.mxu0
        %v2295 = vpop.f32.mrf.mxu0
        %v2296 = vadd.f32 %v525, %v2295
        %v2297 = vpop.f32.mrf.mxu0
        %2298 = vmatprep.mubr.bf16.mxu0 0
        %2299 = vmatmul.mubr.bf16.gmra.mxu0 %v2209
        %v2300 = vpop.f32.mrf.mxu0
        %v2301 = vadd.f32 %v526, %v2300
        %v2302 = vpop.f32.mrf.mxu0
        %v2303 = vpop.f32.mrf.mxu0
        %v2304 = vadd.f32 %v527, %v2303
        %v2305 = vpop.f32.mrf.mxu0
        %2306 = vmatprep.mubr.bf16.mxu0 0
        %2307 = vmatmul.mubr.bf16.gmra.mxu0 %v2212
        %v2308 = vpop.f32.mrf.mxu0
        %v2309 = vadd.f32 %v528, %v2308
        %v2310 = vpop.f32.mrf.mxu0
        %v2311 = vpop.f32.mrf.mxu0
        %v2312 = vadd.f32 %v529, %v2311
        %v2313 = vpop.f32.mrf.mxu0
        %2314 = vmatprep.mubr.bf16.mxu0 0
        %2315 = vmatmul.mubr.bf16.gmra.mxu0 %v2215
        %v2316 = vpop.f32.mrf.mxu0
        %v2317 = vadd.f32 %v530, %v2316
        %v2318 = vpop.f32.mrf.mxu0
        %v2319 = vpop.f32.mrf.mxu0
        %v2320 = vadd.f32 %v531, %v2319
        %v2321 = vpop.f32.mrf.mxu0
        %2322 = vmatprep.mubr.bf16.mxu0 0
        %2323 = vmatmul.mubr.bf16.gmra.mxu0 %v2218
        %v2324 = vpop.f32.mrf.mxu0
        %v2325 = vadd.f32 %v532, %v2324
        %v2326 = vpop.f32.mrf.mxu0
        %v2327 = vpop.f32.mrf.mxu0
        %v2328 = vadd.f32 %v533, %v2327
        %v2329 = vpop.f32.mrf.mxu0
        %2330 = vmatprep.mubr.bf16.mxu0 0
        %2331 = vmatmul.mubr.bf16.gmra.mxu0 %v2221
        %v2332 = vpop.f32.mrf.mxu0
        %v2333 = vadd.f32 %v534, %v2332
        %v2334 = vpop.f32.mrf.mxu0
        %v2335 = vpop.f32.mrf.mxu0
        %v2336 = vadd.f32 %v535, %v2335
        %v2337 = vpop.f32.mrf.mxu0
        %2338 = vmatprep.mubr.bf16.mxu0 0
        %2339 = vmatmul.mubr.bf16.gmra.mxu0 %v2224
        %v2340 = vpop.f32.mrf.mxu0
        %v2341 = vadd.f32 %v536, %v2340
        %v2342 = vpop.f32.mrf.mxu0
        %v2343 = vpop.f32.mrf.mxu0
        %v2344 = vadd.f32 %v537, %v2343
        %v2345 = vpop.f32.mrf.mxu0
        %2346 = vdwg.mxu0
        %2347 = vmax.xlane.f32.xlu0 %v2285
        %v2348 = vpop.xlane.xlu0 %2347
        %2349 = vmax.xlane.f32.xlu0 %v2288
        %v2350 = vpop.xlane.xlu0 %2349
        %2351 = vmax.xlane.f32.xlu0 %v2293
        %v2352 = vpop.xlane.xlu0 %2351
        %2353 = vmax.xlane.f32.xlu0 %v2296
        %v2354 = vpop.xlane.xlu0 %2353
        %2355 = vmax.xlane.f32.xlu0 %v2301
        %v2356 = vpop.xlane.xlu0 %2355
        %2357 = vmax.xlane.f32.xlu0 %v2304
        %v2358 = vpop.xlane.xlu0 %2357
        %2359 = vmax.xlane.f32.xlu0 %v2309
        %v2360 = vpop.xlane.xlu0 %2359
        %2361 = vmax.xlane.f32.xlu0 %v2312
        %v2362 = vpop.xlane.xlu0 %2361
        %2363 = vmax.xlane.f32.xlu0 %v2317
        %v2364 = vpop.xlane.xlu0 %2363
        %2365 = vmax.xlane.f32.xlu0 %v2320
        %v2366 = vpop.xlane.xlu0 %2365
        %2367 = vmax.xlane.f32.xlu0 %v2325
        %v2368 = vpop.xlane.xlu0 %2367
        %2369 = vmax.xlane.f32.xlu0 %v2328
        %v2370 = vpop.xlane.xlu0 %2369
        %2371 = vmax.xlane.f32.xlu0 %v2333
        %v2372 = vpop.xlane.xlu0 %2371
        %2373 = vmax.xlane.f32.xlu0 %v2336
        %v2374 = vpop.xlane.xlu0 %2373
        %2375 = vmax.xlane.f32.xlu0 %v2341
        %v2376 = vpop.xlane.xlu0 %2375
        %2377 = vmax.xlane.f32.xlu0 %v2344
        %v2378 = vpop.xlane.xlu0 %2377
        %v2379 = vsub.f32 %v2285, %v2348
        %v2380 = vsub.f32 %v2288, %v2350
        %v2381 = vsub.f32 %v2293, %v2352
        %v2382 = vsub.f32 %v2296, %v2354
        %v2383 = vsub.f32 %v2301, %v2356
        %v2384 = vsub.f32 %v2304, %v2358
        %v2385 = vsub.f32 %v2309, %v2360
        %v2386 = vsub.f32 %v2312, %v2362
        %v2387 = vsub.f32 %v2317, %v2364
        %v2388 = vsub.f32 %v2320, %v2366
        %v2389 = vsub.f32 %v2325, %v2368
        %v2390 = vsub.f32 %v2328, %v2370
        %v2391 = vsub.f32 %v2333, %v2372
        %v2392 = vsub.f32 %v2336, %v2374
        %v2393 = vsub.f32 %v2341, %v2376
        %v2394 = vsub.f32 %v2344, %v2378
        %v2395 = vmul.f32 %v2379, 1.442695
        %v2396 = vpow.pop %v2395
        %v2397 = vmul.f32 %v2380, 1.442695
        %v2398 = vpow.pop %v2397
        %v2399 = vmul.f32 %v2381, 1.442695
        %v2400 = vpow.pop %v2399
        %v2401 = vmul.f32 %v2382, 1.442695
        %v2402 = vpow.pop %v2401
        %v2403 = vmul.f32 %v2383, 1.442695
        %v2404 = vpow.pop %v2403
        %v2405 = vmul.f32 %v2384, 1.442695
        %v2406 = vpow.pop %v2405
        %v2407 = vmul.f32 %v2385, 1.442695
        %v2408 = vpow.pop %v2407
        %v2409 = vmul.f32 %v2386, 1.442695
        %v2410 = vpow.pop %v2409
        %v2411 = vmul.f32 %v2387, 1.442695
        %v2412 = vpow.pop %v2411
        %v2413 = vmul.f32 %v2388, 1.442695
        %v2414 = vpow.pop %v2413
        %v2415 = vmul.f32 %v2389, 1.442695
        %v2416 = vpow.pop %v2415
        %v2417 = vmul.f32 %v2390, 1.442695
        %v2418 = vpow.pop %v2417
        %v2419 = vmul.f32 %v2391, 1.442695
        %v2420 = vpow.pop %v2419
        %v2421 = vmul.f32 %v2392, 1.442695
        %v2422 = vpow.pop %v2421
        %v2423 = vmul.f32 %v2393, 1.442695
        %v2424 = vpow.pop %v2423
        %v2425 = vmul.f32 %v2394, 1.442695
        %v2426 = vpow.pop %v2425
        %2427 = vadd.xlane.f32.xlu0 %v2396
        %v2428 = vpop.xlane.xlu0 %2427
        %2429 = vadd.xlane.f32.xlu0 %v2398
        %v2430 = vpop.xlane.xlu0 %2429
        %2431 = vadd.xlane.f32.xlu0 %v2400
        %v2432 = vpop.xlane.xlu0 %2431
        %2433 = vadd.xlane.f32.xlu0 %v2402
        %v2434 = vpop.xlane.xlu0 %2433
        %2435 = vadd.xlane.f32.xlu0 %v2404
        %v2436 = vpop.xlane.xlu0 %2435
        %2437 = vadd.xlane.f32.xlu0 %v2406
        %v2438 = vpop.xlane.xlu0 %2437
        %2439 = vadd.xlane.f32.xlu0 %v2408
        %v2440 = vpop.xlane.xlu0 %2439
        %2441 = vadd.xlane.f32.xlu0 %v2410
        %v2442 = vpop.xlane.xlu0 %2441
        %2443 = vadd.xlane.f32.xlu0 %v2412
        %v2444 = vpop.xlane.xlu0 %2443
        %2445 = vadd.xlane.f32.xlu0 %v2414
        %v2446 = vpop.xlane.xlu0 %2445
        %2447 = vadd.xlane.f32.xlu0 %v2416
        %v2448 = vpop.xlane.xlu0 %2447
        %2449 = vadd.xlane.f32.xlu0 %v2418
        %v2450 = vpop.xlane.xlu0 %2449
        %2451 = vadd.xlane.f32.xlu0 %v2420
        %v2452 = vpop.xlane.xlu0 %2451
        %2453 = vadd.xlane.f32.xlu0 %v2422
        %v2454 = vpop.xlane.xlu0 %2453
        %2455 = vadd.xlane.f32.xlu0 %v2424
        %v2456 = vpop.xlane.xlu0 %2455
        %2457 = vadd.xlane.f32.xlu0 %v2426
        %v2458 = vpop.xlane.xlu0 %2457
        %v2459 = vrcp.pop %v2428
        %v2460 = vrcp.pop %v2430
        %v2461 = vrcp.pop %v2432
        %v2462 = vrcp.pop %v2434
        %v2463 = vrcp.pop %v2436
        %v2464 = vrcp.pop %v2438
        %v2465 = vrcp.pop %v2440
        %v2466 = vrcp.pop %v2442
        %v2467 = vrcp.pop %v2444
        %v2468 = vrcp.pop %v2446
        %v2469 = vrcp.pop %v2448
        %v2470 = vrcp.pop %v2450
        %v2471 = vrcp.pop %v2452
        %v2472 = vrcp.pop %v2454
        %v2473 = vrcp.pop %v2456
        %v2474 = vrcp.pop %v2458
        %v2475 = vmul.f32 %v2396, %v2459
        %v2476 = vmul.f32 %v2398, %v2460
        %v2477 = vmul.f32 %v2400, %v2461
        %v2478 = vmul.f32 %v2402, %v2462
        %v2479 = vmul.f32 %v2404, %v2463
        %v2480 = vmul.f32 %v2406, %v2464
        %v2481 = vmul.f32 %v2408, %v2465
        %v2482 = vmul.f32 %v2410, %v2466
        %v2483 = vmul.f32 %v2412, %v2467
        %v2484 = vmul.f32 %v2414, %v2468
        %v2485 = vmul.f32 %v2416, %v2469
        %v2486 = vmul.f32 %v2418, %v2470
        %v2487 = vmul.f32 %v2420, %v2471
        %v2488 = vmul.f32 %v2422, %v2472
        %v2489 = vmul.f32 %v2424, %v2473
        %v2490 = vmul.f32 %v2426, %v2474
        %v2491 = vpack.c.bf16 %v2476, %v2475
        %v2492 = vpack.c.bf16 %v2478, %v2477
        %v2493 = vpack.c.bf16 %v2480, %v2479
        %v2494 = vpack.c.bf16 %v2482, %v2481
        %v2495 = vpack.c.bf16 %v2484, %v2483
        %v2496 = vpack.c.bf16 %v2486, %v2485
        %v2497 = vpack.c.bf16 %v2488, %v2487
        %v2498 = vpack.c.bf16 %v2490, %v2489
        %2499 = vrot.lane.b32.xlu0 %v1003, 64
        %v2500 = vpop.permute.xlu0 %2499
        %2501 = vrot.lane.b32.xlu0 %v1004, 64
        %v2502 = vpop.permute.xlu0 %2501
        %2503 = vrot.lane.b32.xlu0 %v1005, 64
        %v2504 = vpop.permute.xlu0 %2503
        %2505 = vrot.lane.b32.xlu0 %v1006, 64
        %v2506 = vpop.permute.xlu0 %2505
        %2507 = vrot.lane.b32.xlu0 %v1007, 64
        %v2508 = vpop.permute.xlu0 %2507
        %2509 = vrot.lane.b32.xlu0 %v1008, 64
        %v2510 = vpop.permute.xlu0 %2509
        %2511 = vrot.lane.b32.xlu0 %v1009, 64
        %v2512 = vpop.permute.xlu0 %2511
        %2513 = vrot.lane.b32.xlu0 %v1010, 64
        %v2514 = vpop.permute.xlu0 %2513
        %2523 = vmatprep.subr.bf16.mxu0 0
        %2524 = vmatpush1.bf16.msra.mxu0 %v2514
        %2525 = vmatprep.subr.bf16.mxu0 0
        %2526 = vmatpush1.bf16.msra.mxu0 %v2512
        %2527 = vmatprep.subr.bf16.mxu0 0
        %2528 = vmatpush1.bf16.msra.mxu0 %v2510
        %2529 = vmatprep.subr.bf16.mxu0 0
        %2530 = vmatpush1.bf16.msra.mxu0 %v2508
        %2531 = vmatprep.subr.bf16.mxu0 0
        %2532 = vmatpush1.bf16.msra.mxu0 %v2506
        %2533 = vmatprep.subr.bf16.mxu0 0
        %2534 = vmatpush1.bf16.msra.mxu0 %v2504
        %2535 = vmatprep.subr.bf16.mxu0 0
        %2536 = vmatpush1.bf16.msra.mxu0 %v2502
        %2537 = vmatprep.subr.bf16.mxu0 0
        %2538 = vmatpush1.bf16.msra.mxu0 %v2500
        %2539 = vmatprep.subr.bf16.mxu0 0
        %2540 = vmatpush2.bf16.msra.mxu0 0
        %2541 = vmatprep.subr.bf16.mxu0 0
        %2542 = vmatpush2.bf16.msra.mxu0 0
        %2543 = vmatprep.subr.bf16.mxu0 0
        %2544 = vmatpush2.bf16.msra.mxu0 0
        %2545 = vmatprep.subr.bf16.mxu0 0
        %2546 = vmatpush2.bf16.msra.mxu0 0
        %2547 = vmatprep.subr.bf16.mxu0 0
        %2548 = vmatpush2.bf16.msra.mxu0 0
        %2549 = vmatprep.subr.bf16.mxu0 0
        %2550 = vmatpush2.bf16.msra.mxu0 0
        %2551 = vmatprep.subr.bf16.mxu0 0
        %2552 = vmatpush2.bf16.msra.mxu0 0
        %2553 = vmatprep.subr.bf16.mxu0 0
        %2554 = vmatpush2.bf16.msra.mxu0 0
        %2555 = vmatprep.mubr.bf16.mxu0 0
        %2556 = vmatmul.mubr.bf16.gmra.mxu0 %v2491
        %v2557 = vpop.f32.mrf.mxu0
        %v2558 = vadd.f32 0.0, %v2557
        %v2559 = vpop.f32.mrf.mxu0
        %v2560 = vpop.f32.mrf.mxu0
        %v2561 = vadd.f32 0.0, %v2560
        %v2562 = vpop.f32.mrf.mxu0
        %2563 = vmatprep.mubr.bf16.mxu0 0
        %2564 = vmatmul.mubr.bf16.gmra.mxu0 %v2492
        %v2565 = vpop.f32.mrf.mxu0
        %v2566 = vadd.f32 0.0, %v2565
        %v2567 = vpop.f32.mrf.mxu0
        %v2568 = vpop.f32.mrf.mxu0
        %v2569 = vadd.f32 0.0, %v2568
        %v2570 = vpop.f32.mrf.mxu0
        %2571 = vmatprep.mubr.bf16.mxu0 0
        %2572 = vmatmul.mubr.bf16.gmra.mxu0 %v2493
        %v2573 = vpop.f32.mrf.mxu0
        %v2574 = vadd.f32 0.0, %v2573
        %v2575 = vpop.f32.mrf.mxu0
        %v2576 = vpop.f32.mrf.mxu0
        %v2577 = vadd.f32 0.0, %v2576
        %v2578 = vpop.f32.mrf.mxu0
        %2579 = vmatprep.mubr.bf16.mxu0 0
        %2580 = vmatmul.mubr.bf16.gmra.mxu0 %v2494
        %v2581 = vpop.f32.mrf.mxu0
        %v2582 = vadd.f32 0.0, %v2581
        %v2583 = vpop.f32.mrf.mxu0
        %v2584 = vpop.f32.mrf.mxu0
        %v2585 = vadd.f32 0.0, %v2584
        %v2586 = vpop.f32.mrf.mxu0
        %2587 = vmatprep.mubr.bf16.mxu0 0
        %2588 = vmatmul.mubr.bf16.gmra.mxu0 %v2495
        %v2589 = vpop.f32.mrf.mxu0
        %v2590 = vadd.f32 0.0, %v2589
        %v2591 = vpop.f32.mrf.mxu0
        %v2592 = vpop.f32.mrf.mxu0
        %v2593 = vadd.f32 0.0, %v2592
        %v2594 = vpop.f32.mrf.mxu0
        %2595 = vmatprep.mubr.bf16.mxu0 0
        %2596 = vmatmul.mubr.bf16.gmra.mxu0 %v2496
        %v2597 = vpop.f32.mrf.mxu0
        %v2598 = vadd.f32 0.0, %v2597
        %v2599 = vpop.f32.mrf.mxu0
        %v2600 = vpop.f32.mrf.mxu0
        %v2601 = vadd.f32 0.0, %v2600
        %v2602 = vpop.f32.mrf.mxu0
        %2603 = vmatprep.mubr.bf16.mxu0 0
        %2604 = vmatmul.mubr.bf16.gmra.mxu0 %v2497
        %v2605 = vpop.f32.mrf.mxu0
        %v2606 = vadd.f32 0.0, %v2605
        %v2607 = vpop.f32.mrf.mxu0
        %v2608 = vpop.f32.mrf.mxu0
        %v2609 = vadd.f32 0.0, %v2608
        %v2610 = vpop.f32.mrf.mxu0
        %2611 = vmatprep.mubr.bf16.mxu0 0
        %2612 = vmatmul.mubr.bf16.gmra.mxu0 %v2498
        %v2613 = vpop.f32.mrf.mxu0
        %v2614 = vadd.f32 0.0, %v2613
        %v2615 = vpop.f32.mrf.mxu0
        %v2616 = vpop.f32.mrf.mxu0
        %v2617 = vadd.f32 0.0, %v2616
        %v2618 = vpop.f32.mrf.mxu0
        %2619 = vdwg.mxu0
        %v2620 = vpack.c.bf16 %v2561, %v2558
        %v2621 = vpack.c.bf16 %v2569, %v2566
        %v2622 = vpack.c.bf16 %v2577, %v2574
        %v2623 = vpack.c.bf16 %v2585, %v2582
        %v2624 = vpack.c.bf16 %v2593, %v2590
        %v2625 = vpack.c.bf16 %v2601, %v2598
        %v2626 = vpack.c.bf16 %v2609, %v2606
        %v2627 = vpack.c.bf16 %v2617, %v2614
        %v2628 = vld [vmem:[#allocation10 + $0x20] sm:$0xf]
        %v2629 = vld [vmem:[#allocation10 + $0x24] sm:$0xf]
        %v2630 = vld [vmem:[#allocation10 + $0x28] sm:$0xf]
        %v2631 = vld [vmem:[#allocation10 + $0x2c] sm:$0xf]
        %v2636 = vunpack.c.l.b16 %v2628
        %v2637 = vunpack.c.l.b16 %v2629
        %v2638 = vunpack.c.l.b16 %v2630
        %v2639 = vunpack.c.l.b16 %v2631
        %v2640 = vpack.c.b16 %v2637, %v2636
        %v2641 = vpack.c.b16 %v2639, %v2638
        %v2645 = vsel %vm1011, %v2620, 0
        %v2648 = vsel %vm1011, %v2621, 0
        %v2651 = vsel %vm1011, %v2622, 0
        %v2654 = vsel %vm1011, %v2623, 0
        %v2657 = vsel %vm1011, %v2624, 0
        %v2660 = vsel %vm1011, %v2625, 0
        %v2663 = vsel %vm1011, %v2626, 0
        %v2666 = vsel %vm1011, %v2627, 0
        %2668 = vmatprep.subr.bf16.mxu0 0
        %2669 = vmatpush1.bf16.msra.mxu0 0
        %2670 = vmatprep.subr.bf16.mxu0 0
        %2671 = vmatpush1.bf16.msra.mxu0 0
        %2672 = vmatprep.subr.bf16.mxu0 0
        %2673 = vmatpush1.bf16.msra.mxu0 0
        %2674 = vmatprep.subr.bf16.mxu0 0
        %2675 = vmatpush1.bf16.msra.mxu0 0
        %2676 = vmatprep.subr.bf16.mxu0 0
        %2677 = vmatpush1.bf16.msra.mxu0 0
        %2678 = vmatprep.subr.bf16.mxu0 0
        %2679 = vmatpush1.bf16.msra.mxu0 0
        %2680 = vmatprep.subr.bf16.mxu0 0
        %2681 = vmatpush1.bf16.msra.mxu0 %v2641
        %2682 = vmatprep.subr.bf16.mxu0 0
        %2683 = vmatpush1.bf16.msra.mxu0 %v2640
        %2684 = vmatprep.subr.bf16.mxu0 0
        %2685 = vmatpush2.bf16.msra.mxu0 0
        %2686 = vmatprep.subr.bf16.mxu0 0
        %2687 = vmatpush2.bf16.msra.mxu0 0
        %2688 = vmatprep.subr.bf16.mxu0 0
        %2689 = vmatpush2.bf16.msra.mxu0 0
        %2690 = vmatprep.subr.bf16.mxu0 0
        %2691 = vmatpush2.bf16.msra.mxu0 0
        %2692 = vmatprep.subr.bf16.mxu0 0
        %2693 = vmatpush2.bf16.msra.mxu0 0
        %2694 = vmatprep.subr.bf16.mxu0 0
        %2695 = vmatpush2.bf16.msra.mxu0 0
        %2696 = vmatprep.subr.bf16.mxu0 0
        %2697 = vmatpush2.bf16.msra.mxu0 0
        %2698 = vmatprep.subr.bf16.mxu0 0
        %2699 = vmatpush2.bf16.msra.mxu0 0
        %2700 = vmatprep.mubr.bf16.mxu0 0
        %2701 = vmatmul.mubr.bf16.gmra.mxu0 %v2645
        %v2702 = vpop.f32.mrf.mxu0
        %v2703 = vadd.f32 0.0, %v2702
        %v2704 = vpop.f32.mrf.mxu0
        %v2705 = vpop.f32.mrf.mxu0
        %v2706 = vadd.f32 0.0, %v2705
        %v2707 = vpop.f32.mrf.mxu0
        %2708 = vmatprep.mubr.bf16.mxu0 0
        %2709 = vmatmul.mubr.bf16.gmra.mxu0 %v2648
        %v2710 = vpop.f32.mrf.mxu0
        %v2711 = vadd.f32 0.0, %v2710
        %v2712 = vpop.f32.mrf.mxu0
        %v2713 = vpop.f32.mrf.mxu0
        %v2714 = vadd.f32 0.0, %v2713
        %v2715 = vpop.f32.mrf.mxu0
        %2716 = vmatprep.mubr.bf16.mxu0 0
        %2717 = vmatmul.mubr.bf16.gmra.mxu0 %v2651
        %v2718 = vpop.f32.mrf.mxu0
        %v2719 = vadd.f32 0.0, %v2718
        %v2720 = vpop.f32.mrf.mxu0
        %v2721 = vpop.f32.mrf.mxu0
        %v2722 = vadd.f32 0.0, %v2721
        %v2723 = vpop.f32.mrf.mxu0
        %2724 = vmatprep.mubr.bf16.mxu0 0
        %2725 = vmatmul.mubr.bf16.gmra.mxu0 %v2654
        %v2726 = vpop.f32.mrf.mxu0
        %v2727 = vadd.f32 0.0, %v2726
        %v2728 = vpop.f32.mrf.mxu0
        %v2729 = vpop.f32.mrf.mxu0
        %v2730 = vadd.f32 0.0, %v2729
        %v2731 = vpop.f32.mrf.mxu0
        %2732 = vmatprep.mubr.bf16.mxu0 0
        %2733 = vmatmul.mubr.bf16.gmra.mxu0 %v2657
        %v2734 = vpop.f32.mrf.mxu0
        %v2735 = vadd.f32 0.0, %v2734
        %v2736 = vpop.f32.mrf.mxu0
        %v2737 = vpop.f32.mrf.mxu0
        %v2738 = vadd.f32 0.0, %v2737
        %v2739 = vpop.f32.mrf.mxu0
        %2740 = vmatprep.mubr.bf16.mxu0 0
        %2741 = vmatmul.mubr.bf16.gmra.mxu0 %v2660
        %v2742 = vpop.f32.mrf.mxu0
        %v2743 = vadd.f32 0.0, %v2742
        %v2744 = vpop.f32.mrf.mxu0
        %v2745 = vpop.f32.mrf.mxu0
        %v2746 = vadd.f32 0.0, %v2745
        %v2747 = vpop.f32.mrf.mxu0
        %2748 = vmatprep.mubr.bf16.mxu0 0
        %2749 = vmatmul.mubr.bf16.gmra.mxu0 %v2663
        %v2750 = vpop.f32.mrf.mxu0
        %v2751 = vadd.f32 0.0, %v2750
        %v2752 = vpop.f32.mrf.mxu0
        %v2753 = vpop.f32.mrf.mxu0
        %v2754 = vadd.f32 0.0, %v2753
        %v2755 = vpop.f32.mrf.mxu0
        %2756 = vmatprep.mubr.bf16.mxu0 0
        %2757 = vmatmul.mubr.bf16.gmra.mxu0 %v2666
        %v2758 = vpop.f32.mrf.mxu0
        %v2759 = vadd.f32 0.0, %v2758
        %v2760 = vpop.f32.mrf.mxu0
        %v2761 = vpop.f32.mrf.mxu0
        %v2762 = vadd.f32 0.0, %v2761
        %v2763 = vpop.f32.mrf.mxu0
        %2764 = vdwg.mxu0
        %v2765 = vadd.f32 %v2108, %v2703
        %v2766 = vadd.f32 %v2111, %v2706
        %v2767 = vadd.f32 %v2116, %v2711
        %v2768 = vadd.f32 %v2119, %v2714
        %v2769 = vadd.f32 %v2124, %v2719
        %v2770 = vadd.f32 %v2127, %v2722
        %v2771 = vadd.f32 %v2132, %v2727
        %v2772 = vadd.f32 %v2135, %v2730
        %v2773 = vadd.f32 %v2140, %v2735
        %v2774 = vadd.f32 %v2143, %v2738
        %v2775 = vadd.f32 %v2148, %v2743
        %v2776 = vadd.f32 %v2151, %v2746
        %v2777 = vadd.f32 %v2156, %v2751
        %v2778 = vadd.f32 %v2159, %v2754
        %v2779 = vadd.f32 %v2164, %v2759
        %v2780 = vadd.f32 %v2167, %v2762
        %2781 = vrot.lane.b32.xlu0 %v987, 32
        %v2782 = vpop.permute.xlu0 %2781
        %2783 = vrot.lane.b32.xlu0 %v988, 32
        %v2784 = vpop.permute.xlu0 %2783
        %2785 = vrot.lane.b32.xlu0 %v989, 32
        %v2786 = vpop.permute.xlu0 %2785
        %2787 = vrot.lane.b32.xlu0 %v990, 32
        %v2788 = vpop.permute.xlu0 %2787
        %2789 = vrot.lane.b32.xlu0 %v991, 32
        %v2790 = vpop.permute.xlu0 %2789
        %2791 = vrot.lane.b32.xlu0 %v992, 32
        %v2792 = vpop.permute.xlu0 %2791
        %2793 = vrot.lane.b32.xlu0 %v993, 32
        %v2794 = vpop.permute.xlu0 %2793
        %2795 = vrot.lane.b32.xlu0 %v994, 32
        %v2796 = vpop.permute.xlu0 %2795
        %2797 = vrot.lane.b32.xlu0 %v995, 32
        %v2798 = vpop.permute.xlu0 %2797
        %2799 = vrot.lane.b32.xlu0 %v996, 32
        %v2800 = vpop.permute.xlu0 %2799
        %2801 = vrot.lane.b32.xlu0 %v997, 32
        %v2802 = vpop.permute.xlu0 %2801
        %2803 = vrot.lane.b32.xlu0 %v998, 32
        %v2804 = vpop.permute.xlu0 %2803
        %2805 = vrot.lane.b32.xlu0 %v999, 32
        %v2806 = vpop.permute.xlu0 %2805
        %2807 = vrot.lane.b32.xlu0 %v1000, 32
        %v2808 = vpop.permute.xlu0 %2807
        %2809 = vrot.lane.b32.xlu0 %v1001, 32
        %v2810 = vpop.permute.xlu0 %2809
        %2811 = vrot.lane.b32.xlu0 %v1002, 32
        %v2812 = vpop.permute.xlu0 %2811
        %v2814 = vsel %vm1011, %v2782, 0
        %v2817 = vsel %vm1011, %v2784, 0
        %v2820 = vsel %vm1011, %v2786, 0
        %v2823 = vsel %vm1011, %v2788, 0
        %v2826 = vsel %vm1011, %v2790, 0
        %v2829 = vsel %vm1011, %v2792, 0
        %v2832 = vsel %vm1011, %v2794, 0
        %v2835 = vsel %vm1011, %v2796, 0
        %v2838 = vsel %vm1011, %v2798, 0
        %v2841 = vsel %vm1011, %v2800, 0
        %v2844 = vsel %vm1011, %v2802, 0
        %v2847 = vsel %vm1011, %v2804, 0
        %v2850 = vsel %vm1011, %v2806, 0
        %v2853 = vsel %vm1011, %v2808, 0
        %v2856 = vsel %vm1011, %v2810, 0
        %v2859 = vsel %vm1011, %v2812, 0
        %2861 = vmatprep.subr.bf16.mxu0 0
        %2862 = vmatpush1.bf16.xpose.msra.mxu0 %v2859
        %2863 = vmatprep.subr.bf16.mxu0 0
        %2864 = vmatpush1.bf16.xpose.msra.mxu0 %v2856
        %2865 = vmatprep.subr.bf16.mxu0 0
        %2866 = vmatpush1.bf16.xpose.msra.mxu0 %v2853
        %2867 = vmatprep.subr.bf16.mxu0 0
        %2868 = vmatpush1.bf16.xpose.msra.mxu0 %v2850
        %2869 = vmatprep.subr.bf16.mxu0 0
        %2870 = vmatpush1.bf16.xpose.msra.mxu0 %v2847
        %2871 = vmatprep.subr.bf16.mxu0 0
        %2872 = vmatpush1.bf16.xpose.msra.mxu0 %v2844
        %2873 = vmatprep.subr.bf16.mxu0 0
        %2874 = vmatpush1.bf16.xpose.msra.mxu0 %v2841
        %2875 = vmatprep.subr.bf16.mxu0 0
        %2876 = vmatpush1.bf16.xpose.msra.mxu0 %v2838
        %2877 = vmatprep.subr.bf16.mxu0 0
        %2878 = vmatpush2.bf16.xpose.msra.mxu0 0
        %2879 = vmatprep.subr.bf16.mxu0 0
        %2880 = vmatpush2.bf16.xpose.msra.mxu0 0
        %2881 = vmatprep.subr.bf16.mxu0 0
        %2882 = vmatpush2.bf16.xpose.msra.mxu0 0
        %2883 = vmatprep.subr.bf16.mxu0 0
        %2884 = vmatpush2.bf16.xpose.msra.mxu0 0
        %2885 = vmatprep.subr.bf16.mxu0 0
        %2886 = vmatpush2.bf16.xpose.msra.mxu0 0
        %2887 = vmatprep.subr.bf16.mxu0 0
        %2888 = vmatpush2.bf16.xpose.msra.mxu0 0
        %2889 = vmatprep.subr.bf16.mxu0 0
        %2890 = vmatpush2.bf16.xpose.msra.mxu0 0
        %2891 = vmatprep.subr.bf16.mxu0 0
        %2892 = vmatpush2.bf16.xpose.msra.mxu0 0
        %2893 = vmatprep.mubr.bf16.mxu0 0
        %2894 = vmatmul.mubr.bf16.gmra.mxu0 %v2814
        %v2895 = vpop.f32.mrf.mxu0
        %v2896 = vadd.f32 %v522, %v2895
        %v2897 = vpop.f32.mrf.mxu0
        %v2898 = vpop.f32.mrf.mxu0
        %v2899 = vadd.f32 %v523, %v2898
        %v2900 = vpop.f32.mrf.mxu0
        %2901 = vmatprep.mubr.bf16.mxu0 0
        %2902 = vmatmul.mubr.bf16.gmra.mxu0 %v2817
        %v2903 = vpop.f32.mrf.mxu0
        %v2904 = vadd.f32 %v524, %v2903
        %v2905 = vpop.f32.mrf.mxu0
        %v2906 = vpop.f32.mrf.mxu0
        %v2907 = vadd.f32 %v525, %v2906
        %v2908 = vpop.f32.mrf.mxu0
        %2909 = vmatprep.mubr.bf16.mxu0 0
        %2910 = vmatmul.mubr.bf16.gmra.mxu0 %v2820
        %v2911 = vpop.f32.mrf.mxu0
        %v2912 = vadd.f32 %v526, %v2911
        %v2913 = vpop.f32.mrf.mxu0
        %v2914 = vpop.f32.mrf.mxu0
        %v2915 = vadd.f32 %v527, %v2914
        %v2916 = vpop.f32.mrf.mxu0
        %2917 = vmatprep.mubr.bf16.mxu0 0
        %2918 = vmatmul.mubr.bf16.gmra.mxu0 %v2823
        %v2919 = vpop.f32.mrf.mxu0
        %v2920 = vadd.f32 %v528, %v2919
        %v2921 = vpop.f32.mrf.mxu0
        %v2922 = vpop.f32.mrf.mxu0
        %v2923 = vadd.f32 %v529, %v2922
        %v2924 = vpop.f32.mrf.mxu0
        %2925 = vmatprep.mubr.bf16.mxu0 0
        %2926 = vmatmul.mubr.bf16.gmra.mxu0 %v2826
        %v2927 = vpop.f32.mrf.mxu0
        %v2928 = vadd.f32 %v530, %v2927
        %v2929 = vpop.f32.mrf.mxu0
        %v2930 = vpop.f32.mrf.mxu0
        %v2931 = vadd.f32 %v531, %v2930
        %v2932 = vpop.f32.mrf.mxu0
        %2933 = vmatprep.mubr.bf16.mxu0 0
        %2934 = vmatmul.mubr.bf16.gmra.mxu0 %v2829
        %v2935 = vpop.f32.mrf.mxu0
        %v2936 = vadd.f32 %v532, %v2935
        %v2937 = vpop.f32.mrf.mxu0
        %v2938 = vpop.f32.mrf.mxu0
        %v2939 = vadd.f32 %v533, %v2938
        %v2940 = vpop.f32.mrf.mxu0
        %2941 = vmatprep.mubr.bf16.mxu0 0
        %2942 = vmatmul.mubr.bf16.gmra.mxu0 %v2832
        %v2943 = vpop.f32.mrf.mxu0
        %v2944 = vadd.f32 %v534, %v2943
        %v2945 = vpop.f32.mrf.mxu0
        %v2946 = vpop.f32.mrf.mxu0
        %v2947 = vadd.f32 %v535, %v2946
        %v2948 = vpop.f32.mrf.mxu0
        %2949 = vmatprep.mubr.bf16.mxu0 0
        %2950 = vmatmul.mubr.bf16.gmra.mxu0 %v2835
        %v2951 = vpop.f32.mrf.mxu0
        %v2952 = vadd.f32 %v536, %v2951
        %v2953 = vpop.f32.mrf.mxu0
        %v2954 = vpop.f32.mrf.mxu0
        %v2955 = vadd.f32 %v537, %v2954
        %v2956 = vpop.f32.mrf.mxu0
        %2957 = vdwg.mxu0
        %2958 = vmax.xlane.f32.xlu0 %v2896
        %v2959 = vpop.xlane.xlu0 %2958
        %2960 = vmax.xlane.f32.xlu0 %v2899
        %v2961 = vpop.xlane.xlu0 %2960
        %2962 = vmax.xlane.f32.xlu0 %v2904
        %v2963 = vpop.xlane.xlu0 %2962
        %2964 = vmax.xlane.f32.xlu0 %v2907
        %v2965 = vpop.xlane.xlu0 %2964
        %2966 = vmax.xlane.f32.xlu0 %v2912
        %v2967 = vpop.xlane.xlu0 %2966
        %2968 = vmax.xlane.f32.xlu0 %v2915
        %v2969 = vpop.xlane.xlu0 %2968
        %2970 = vmax.xlane.f32.xlu0 %v2920
        %v2971 = vpop.xlane.xlu0 %2970
        %2972 = vmax.xlane.f32.xlu0 %v2923
        %v2973 = vpop.xlane.xlu0 %2972
        %2974 = vmax.xlane.f32.xlu0 %v2928
        %v2975 = vpop.xlane.xlu0 %2974
        %2976 = vmax.xlane.f32.xlu0 %v2931
        %v2977 = vpop.xlane.xlu0 %2976
        %2978 = vmax.xlane.f32.xlu0 %v2936
        %v2979 = vpop.xlane.xlu0 %2978
        %2980 = vmax.xlane.f32.xlu0 %v2939
        %v2981 = vpop.xlane.xlu0 %2980
        %2982 = vmax.xlane.f32.xlu0 %v2944
        %v2983 = vpop.xlane.xlu0 %2982
        %2984 = vmax.xlane.f32.xlu0 %v2947
        %v2985 = vpop.xlane.xlu0 %2984
        %2986 = vmax.xlane.f32.xlu0 %v2952
        %v2987 = vpop.xlane.xlu0 %2986
        %2988 = vmax.xlane.f32.xlu0 %v2955
        %v2989 = vpop.xlane.xlu0 %2988
        %v2990 = vsub.f32 %v2896, %v2959
        %v2991 = vsub.f32 %v2899, %v2961
        %v2992 = vsub.f32 %v2904, %v2963
        %v2993 = vsub.f32 %v2907, %v2965
        %v2994 = vsub.f32 %v2912, %v2967
        %v2995 = vsub.f32 %v2915, %v2969
        %v2996 = vsub.f32 %v2920, %v2971
        %v2997 = vsub.f32 %v2923, %v2973
        %v2998 = vsub.f32 %v2928, %v2975
        %v2999 = vsub.f32 %v2931, %v2977
        %v3000 = vsub.f32 %v2936, %v2979
        %v3001 = vsub.f32 %v2939, %v2981
        %v3002 = vsub.f32 %v2944, %v2983
        %v3003 = vsub.f32 %v2947, %v2985
        %v3004 = vsub.f32 %v2952, %v2987
        %v3005 = vsub.f32 %v2955, %v2989
        %v3006 = vmul.f32 %v2990, 1.442695
        %v3007 = vpow.pop %v3006
        %v3008 = vmul.f32 %v2991, 1.442695
        %v3009 = vpow.pop %v3008
        %v3010 = vmul.f32 %v2992, 1.442695
        %v3011 = vpow.pop %v3010
        %v3012 = vmul.f32 %v2993, 1.442695
        %v3013 = vpow.pop %v3012
        %v3014 = vmul.f32 %v2994, 1.442695
        %v3015 = vpow.pop %v3014
        %v3016 = vmul.f32 %v2995, 1.442695
        %v3017 = vpow.pop %v3016
        %v3018 = vmul.f32 %v2996, 1.442695
        %v3019 = vpow.pop %v3018
        %v3020 = vmul.f32 %v2997, 1.442695
        %v3021 = vpow.pop %v3020
        %v3022 = vmul.f32 %v2998, 1.442695
        %v3023 = vpow.pop %v3022
        %v3024 = vmul.f32 %v2999, 1.442695
        %v3025 = vpow.pop %v3024
        %v3026 = vmul.f32 %v3000, 1.442695
        %v3027 = vpow.pop %v3026
        %v3028 = vmul.f32 %v3001, 1.442695
        %v3029 = vpow.pop %v3028
        %v3030 = vmul.f32 %v3002, 1.442695
        %v3031 = vpow.pop %v3030
        %v3032 = vmul.f32 %v3003, 1.442695
        %v3033 = vpow.pop %v3032
        %v3034 = vmul.f32 %v3004, 1.442695
        %v3035 = vpow.pop %v3034
        %v3036 = vmul.f32 %v3005, 1.442695
        %v3037 = vpow.pop %v3036
        %3038 = vadd.xlane.f32.xlu0 %v3007
        %v3039 = vpop.xlane.xlu0 %3038
        %3040 = vadd.xlane.f32.xlu0 %v3009
        %v3041 = vpop.xlane.xlu0 %3040
        %3042 = vadd.xlane.f32.xlu0 %v3011
        %v3043 = vpop.xlane.xlu0 %3042
        %3044 = vadd.xlane.f32.xlu0 %v3013
        %v3045 = vpop.xlane.xlu0 %3044
        %3046 = vadd.xlane.f32.xlu0 %v3015
        %v3047 = vpop.xlane.xlu0 %3046
        %3048 = vadd.xlane.f32.xlu0 %v3017
        %v3049 = vpop.xlane.xlu0 %3048
        %3050 = vadd.xlane.f32.xlu0 %v3019
        %v3051 = vpop.xlane.xlu0 %3050
        %3052 = vadd.xlane.f32.xlu0 %v3021
        %v3053 = vpop.xlane.xlu0 %3052
        %3054 = vadd.xlane.f32.xlu0 %v3023
        %v3055 = vpop.xlane.xlu0 %3054
        %3056 = vadd.xlane.f32.xlu0 %v3025
        %v3057 = vpop.xlane.xlu0 %3056
        %3058 = vadd.xlane.f32.xlu0 %v3027
        %v3059 = vpop.xlane.xlu0 %3058
        %3060 = vadd.xlane.f32.xlu0 %v3029
        %v3061 = vpop.xlane.xlu0 %3060
        %3062 = vadd.xlane.f32.xlu0 %v3031
        %v3063 = vpop.xlane.xlu0 %3062
        %3064 = vadd.xlane.f32.xlu0 %v3033
        %v3065 = vpop.xlane.xlu0 %3064
        %3066 = vadd.xlane.f32.xlu0 %v3035
        %v3067 = vpop.xlane.xlu0 %3066
        %3068 = vadd.xlane.f32.xlu0 %v3037
        %v3069 = vpop.xlane.xlu0 %3068
        %v3070 = vrcp.pop %v3039
        %v3071 = vrcp.pop %v3041
        %v3072 = vrcp.pop %v3043
        %v3073 = vrcp.pop %v3045
        %v3074 = vrcp.pop %v3047
        %v3075 = vrcp.pop %v3049
        %v3076 = vrcp.pop %v3051
        %v3077 = vrcp.pop %v3053
        %v3078 = vrcp.pop %v3055
        %v3079 = vrcp.pop %v3057
        %v3080 = vrcp.pop %v3059
        %v3081 = vrcp.pop %v3061
        %v3082 = vrcp.pop %v3063
        %v3083 = vrcp.pop %v3065
        %v3084 = vrcp.pop %v3067
        %v3085 = vrcp.pop %v3069
        %v3086 = vmul.f32 %v3007, %v3070
        %v3087 = vmul.f32 %v3009, %v3071
        %v3088 = vmul.f32 %v3011, %v3072
        %v3089 = vmul.f32 %v3013, %v3073
        %v3090 = vmul.f32 %v3015, %v3074
        %v3091 = vmul.f32 %v3017, %v3075
        %v3092 = vmul.f32 %v3019, %v3076
        %v3093 = vmul.f32 %v3021, %v3077
        %v3094 = vmul.f32 %v3023, %v3078
        %v3095 = vmul.f32 %v3025, %v3079
        %v3096 = vmul.f32 %v3027, %v3080
        %v3097 = vmul.f32 %v3029, %v3081
        %v3098 = vmul.f32 %v3031, %v3082
        %v3099 = vmul.f32 %v3033, %v3083
        %v3100 = vmul.f32 %v3035, %v3084
        %v3101 = vmul.f32 %v3037, %v3085
        %v3102 = vpack.c.bf16 %v3087, %v3086
        %v3103 = vpack.c.bf16 %v3089, %v3088
        %v3104 = vpack.c.bf16 %v3091, %v3090
        %v3105 = vpack.c.bf16 %v3093, %v3092
        %v3106 = vpack.c.bf16 %v3095, %v3094
        %v3107 = vpack.c.bf16 %v3097, %v3096
        %v3108 = vpack.c.bf16 %v3099, %v3098
        %v3109 = vpack.c.bf16 %v3101, %v3100
        %3110 = vrot.lane.b32.xlu0 %v1003, 32
        %v3111 = vpop.permute.xlu0 %3110
        %3112 = vrot.lane.b32.xlu0 %v1004, 32
        %v3113 = vpop.permute.xlu0 %3112
        %3114 = vrot.lane.b32.xlu0 %v1005, 32
        %v3115 = vpop.permute.xlu0 %3114
        %3116 = vrot.lane.b32.xlu0 %v1006, 32
        %v3117 = vpop.permute.xlu0 %3116
        %3118 = vrot.lane.b32.xlu0 %v1007, 32
        %v3119 = vpop.permute.xlu0 %3118
        %3120 = vrot.lane.b32.xlu0 %v1008, 32
        %v3121 = vpop.permute.xlu0 %3120
        %3122 = vrot.lane.b32.xlu0 %v1009, 32
        %v3123 = vpop.permute.xlu0 %3122
        %3124 = vrot.lane.b32.xlu0 %v1010, 32
        %v3125 = vpop.permute.xlu0 %3124
        %3134 = vmatprep.subr.bf16.mxu0 0
        %3135 = vmatpush1.bf16.msra.mxu0 %v3125
        %3136 = vmatprep.subr.bf16.mxu0 0
        %3137 = vmatpush1.bf16.msra.mxu0 %v3123
        %3138 = vmatprep.subr.bf16.mxu0 0
        %3139 = vmatpush1.bf16.msra.mxu0 %v3121
        %3140 = vmatprep.subr.bf16.mxu0 0
        %3141 = vmatpush1.bf16.msra.mxu0 %v3119
        %3142 = vmatprep.subr.bf16.mxu0 0
        %3143 = vmatpush1.bf16.msra.mxu0 %v3117
        %3144 = vmatprep.subr.bf16.mxu0 0
        %3145 = vmatpush1.bf16.msra.mxu0 %v3115
        %3146 = vmatprep.subr.bf16.mxu0 0
        %3147 = vmatpush1.bf16.msra.mxu0 %v3113
        %3148 = vmatprep.subr.bf16.mxu0 0
        %3149 = vmatpush1.bf16.msra.mxu0 %v3111
        %3150 = vmatprep.subr.bf16.mxu0 0
        %3151 = vmatpush2.bf16.msra.mxu0 0
        %3152 = vmatprep.subr.bf16.mxu0 0
        %3153 = vmatpush2.bf16.msra.mxu0 0
        %3154 = vmatprep.subr.bf16.mxu0 0
        %3155 = vmatpush2.bf16.msra.mxu0 0
        %3156 = vmatprep.subr.bf16.mxu0 0
        %3157 = vmatpush2.bf16.msra.mxu0 0
        %3158 = vmatprep.subr.bf16.mxu0 0
        %3159 = vmatpush2.bf16.msra.mxu0 0
        %3160 = vmatprep.subr.bf16.mxu0 0
        %3161 = vmatpush2.bf16.msra.mxu0 0
        %3162 = vmatprep.subr.bf16.mxu0 0
        %3163 = vmatpush2.bf16.msra.mxu0 0
        %3164 = vmatprep.subr.bf16.mxu0 0
        %3165 = vmatpush2.bf16.msra.mxu0 0
        %3166 = vmatprep.mubr.bf16.mxu0 0
        %3167 = vmatmul.mubr.bf16.gmra.mxu0 %v3102
        %v3168 = vpop.f32.mrf.mxu0
        %v3169 = vadd.f32 0.0, %v3168
        %v3170 = vpop.f32.mrf.mxu0
        %v3171 = vpop.f32.mrf.mxu0
        %v3172 = vadd.f32 0.0, %v3171
        %v3173 = vpop.f32.mrf.mxu0
        %3174 = vmatprep.mubr.bf16.mxu0 0
        %3175 = vmatmul.mubr.bf16.gmra.mxu0 %v3103
        %v3176 = vpop.f32.mrf.mxu0
        %v3177 = vadd.f32 0.0, %v3176
        %v3178 = vpop.f32.mrf.mxu0
        %v3179 = vpop.f32.mrf.mxu0
        %v3180 = vadd.f32 0.0, %v3179
        %v3181 = vpop.f32.mrf.mxu0
        %3182 = vmatprep.mubr.bf16.mxu0 0
        %3183 = vmatmul.mubr.bf16.gmra.mxu0 %v3104
        %v3184 = vpop.f32.mrf.mxu0
        %v3185 = vadd.f32 0.0, %v3184
        %v3186 = vpop.f32.mrf.mxu0
        %v3187 = vpop.f32.mrf.mxu0
        %v3188 = vadd.f32 0.0, %v3187
        %v3189 = vpop.f32.mrf.mxu0
        %3190 = vmatprep.mubr.bf16.mxu0 0
        %3191 = vmatmul.mubr.bf16.gmra.mxu0 %v3105
        %v3192 = vpop.f32.mrf.mxu0
        %v3193 = vadd.f32 0.0, %v3192
        %v3194 = vpop.f32.mrf.mxu0
        %v3195 = vpop.f32.mrf.mxu0
        %v3196 = vadd.f32 0.0, %v3195
        %v3197 = vpop.f32.mrf.mxu0
        %3198 = vmatprep.mubr.bf16.mxu0 0
        %3199 = vmatmul.mubr.bf16.gmra.mxu0 %v3106
        %v3200 = vpop.f32.mrf.mxu0
        %v3201 = vadd.f32 0.0, %v3200
        %v3202 = vpop.f32.mrf.mxu0
        %v3203 = vpop.f32.mrf.mxu0
        %v3204 = vadd.f32 0.0, %v3203
        %v3205 = vpop.f32.mrf.mxu0
        %3206 = vmatprep.mubr.bf16.mxu0 0
        %3207 = vmatmul.mubr.bf16.gmra.mxu0 %v3107
        %v3208 = vpop.f32.mrf.mxu0
        %v3209 = vadd.f32 0.0, %v3208
        %v3210 = vpop.f32.mrf.mxu0
        %v3211 = vpop.f32.mrf.mxu0
        %v3212 = vadd.f32 0.0, %v3211
        %v3213 = vpop.f32.mrf.mxu0
        %3214 = vmatprep.mubr.bf16.mxu0 0
        %3215 = vmatmul.mubr.bf16.gmra.mxu0 %v3108
        %v3216 = vpop.f32.mrf.mxu0
        %v3217 = vadd.f32 0.0, %v3216
        %v3218 = vpop.f32.mrf.mxu0
        %v3219 = vpop.f32.mrf.mxu0
        %v3220 = vadd.f32 0.0, %v3219
        %v3221 = vpop.f32.mrf.mxu0
        %3222 = vmatprep.mubr.bf16.mxu0 0
        %3223 = vmatmul.mubr.bf16.gmra.mxu0 %v3109
        %v3224 = vpop.f32.mrf.mxu0
        %v3225 = vadd.f32 0.0, %v3224
        %v3226 = vpop.f32.mrf.mxu0
        %v3227 = vpop.f32.mrf.mxu0
        %v3228 = vadd.f32 0.0, %v3227
        %v3229 = vpop.f32.mrf.mxu0
        %3230 = vdwg.mxu0
        %v3231 = vpack.c.bf16 %v3172, %v3169
        %v3232 = vpack.c.bf16 %v3180, %v3177
        %v3233 = vpack.c.bf16 %v3188, %v3185
        %v3234 = vpack.c.bf16 %v3196, %v3193
        %v3235 = vpack.c.bf16 %v3204, %v3201
        %v3236 = vpack.c.bf16 %v3212, %v3209
        %v3237 = vpack.c.bf16 %v3220, %v3217
        %v3238 = vpack.c.bf16 %v3228, %v3225
        %v3239 = vld [vmem:[#allocation10 + $0x30] sm:$0xf]
        %v3240 = vld [vmem:[#allocation10 + $0x34] sm:$0xf]
        %v3241 = vld [vmem:[#allocation10 + $0x38] sm:$0xf]
        %v3242 = vld [vmem:[#allocation10 + $0x3c] sm:$0xf]
        %v3247 = vunpack.c.l.b16 %v3239
        %v3248 = vunpack.c.l.b16 %v3240
        %v3249 = vunpack.c.l.b16 %v3241
        %v3250 = vunpack.c.l.b16 %v3242
        %v3251 = vpack.c.b16 %v3248, %v3247
        %v3252 = vpack.c.b16 %v3250, %v3249
        %v3256 = vsel %vm1011, %v3231, 0
        %v3259 = vsel %vm1011, %v3232, 0
        %v3262 = vsel %vm1011, %v3233, 0
        %v3265 = vsel %vm1011, %v3234, 0
        %v3268 = vsel %vm1011, %v3235, 0
        %v3271 = vsel %vm1011, %v3236, 0
        %v3274 = vsel %vm1011, %v3237, 0
        %v3277 = vsel %vm1011, %v3238, 0
        %3279 = vmatprep.subr.bf16.mxu0 0
        %3280 = vmatpush1.bf16.msra.mxu0 0
        %3281 = vmatprep.subr.bf16.mxu0 0
        %3282 = vmatpush1.bf16.msra.mxu0 0
        %3283 = vmatprep.subr.bf16.mxu0 0
        %3284 = vmatpush1.bf16.msra.mxu0 0
        %3285 = vmatprep.subr.bf16.mxu0 0
        %3286 = vmatpush1.bf16.msra.mxu0 0
        %3287 = vmatprep.subr.bf16.mxu0 0
        %3288 = vmatpush1.bf16.msra.mxu0 0
        %3289 = vmatprep.subr.bf16.mxu0 0
        %3290 = vmatpush1.bf16.msra.mxu0 0
        %3291 = vmatprep.subr.bf16.mxu0 0
        %3292 = vmatpush1.bf16.msra.mxu0 %v3252
        %3293 = vmatprep.subr.bf16.mxu0 0
        %3294 = vmatpush1.bf16.msra.mxu0 %v3251
        %3295 = vmatprep.subr.bf16.mxu0 0
        %3296 = vmatpush2.bf16.msra.mxu0 0
        %3297 = vmatprep.subr.bf16.mxu0 0
        %3298 = vmatpush2.bf16.msra.mxu0 0
        %3299 = vmatprep.subr.bf16.mxu0 0
        %3300 = vmatpush2.bf16.msra.mxu0 0
        %3301 = vmatprep.subr.bf16.mxu0 0
        %3302 = vmatpush2.bf16.msra.mxu0 0
        %3303 = vmatprep.subr.bf16.mxu0 0
        %3304 = vmatpush2.bf16.msra.mxu0 0
        %3305 = vmatprep.subr.bf16.mxu0 0
        %3306 = vmatpush2.bf16.msra.mxu0 0
        %3307 = vmatprep.subr.bf16.mxu0 0
        %3308 = vmatpush2.bf16.msra.mxu0 0
        %3309 = vmatprep.subr.bf16.mxu0 0
        %3310 = vmatpush2.bf16.msra.mxu0 0
        %3311 = vmatprep.mubr.bf16.mxu0 0
        %3312 = vmatmul.mubr.bf16.gmra.mxu0 %v3256
        %v3313 = vpop.f32.mrf.mxu0
        %v3314 = vadd.f32 0.0, %v3313
        %v3315 = vpop.f32.mrf.mxu0
        %v3316 = vpop.f32.mrf.mxu0
        %v3317 = vadd.f32 0.0, %v3316
        %v3318 = vpop.f32.mrf.mxu0
        %3319 = vmatprep.mubr.bf16.mxu0 0
        %3320 = vmatmul.mubr.bf16.gmra.mxu0 %v3259
        %v3321 = vpop.f32.mrf.mxu0
        %v3322 = vadd.f32 0.0, %v3321
        %v3323 = vpop.f32.mrf.mxu0
        %v3324 = vpop.f32.mrf.mxu0
        %v3325 = vadd.f32 0.0, %v3324
        %v3326 = vpop.f32.mrf.mxu0
        %3327 = vmatprep.mubr.bf16.mxu0 0
        %3328 = vmatmul.mubr.bf16.gmra.mxu0 %v3262
        %v3329 = vpop.f32.mrf.mxu0
        %v3330 = vadd.f32 0.0, %v3329
        %v3331 = vpop.f32.mrf.mxu0
        %v3332 = vpop.f32.mrf.mxu0
        %v3333 = vadd.f32 0.0, %v3332
        %v3334 = vpop.f32.mrf.mxu0
        %3335 = vmatprep.mubr.bf16.mxu0 0
        %3336 = vmatmul.mubr.bf16.gmra.mxu0 %v3265
        %v3337 = vpop.f32.mrf.mxu0
        %v3338 = vadd.f32 0.0, %v3337
        %v3339 = vpop.f32.mrf.mxu0
        %v3340 = vpop.f32.mrf.mxu0
        %v3341 = vadd.f32 0.0, %v3340
        %v3342 = vpop.f32.mrf.mxu0
        %3343 = vmatprep.mubr.bf16.mxu0 0
        %3344 = vmatmul.mubr.bf16.gmra.mxu0 %v3268
        %v3345 = vpop.f32.mrf.mxu0
        %v3346 = vadd.f32 0.0, %v3345
        %v3347 = vpop.f32.mrf.mxu0
        %v3348 = vpop.f32.mrf.mxu0
        %v3349 = vadd.f32 0.0, %v3348
        %v3350 = vpop.f32.mrf.mxu0
        %3351 = vmatprep.mubr.bf16.mxu0 0
        %3352 = vmatmul.mubr.bf16.gmra.mxu0 %v3271
        %v3353 = vpop.f32.mrf.mxu0
        %v3354 = vadd.f32 0.0, %v3353
        %v3355 = vpop.f32.mrf.mxu0
        %v3356 = vpop.f32.mrf.mxu0
        %v3357 = vadd.f32 0.0, %v3356
        %v3358 = vpop.f32.mrf.mxu0
        %3359 = vmatprep.mubr.bf16.mxu0 0
        %3360 = vmatmul.mubr.bf16.gmra.mxu0 %v3274
        %v3361 = vpop.f32.mrf.mxu0
        %v3362 = vadd.f32 0.0, %v3361
        %v3363 = vpop.f32.mrf.mxu0
        %v3364 = vpop.f32.mrf.mxu0
        %v3365 = vadd.f32 0.0, %v3364
        %v3366 = vpop.f32.mrf.mxu0
        %3367 = vmatprep.mubr.bf16.mxu0 0
        %3368 = vmatmul.mubr.bf16.gmra.mxu0 %v3277
        %v3369 = vpop.f32.mrf.mxu0
        %v3370 = vadd.f32 0.0, %v3369
        %v3371 = vpop.f32.mrf.mxu0
        %v3372 = vpop.f32.mrf.mxu0
        %v3373 = vadd.f32 0.0, %v3372
        %v3374 = vpop.f32.mrf.mxu0
        %3375 = vdwg.mxu0
        %v3376 = vadd.f32 %v2765, %v3314
        %v3377 = vadd.f32 %v2766, %v3317
        %v3378 = vadd.f32 %v2767, %v3322
        %v3379 = vadd.f32 %v2768, %v3325
        %v3380 = vadd.f32 %v2769, %v3330
        %v3381 = vadd.f32 %v2770, %v3333
        %v3382 = vadd.f32 %v2771, %v3338
        %v3383 = vadd.f32 %v2772, %v3341
        %v3384 = vadd.f32 %v2773, %v3346
        %v3385 = vadd.f32 %v2774, %v3349
        %v3386 = vadd.f32 %v2775, %v3354
        %v3387 = vadd.f32 %v2776, %v3357
        %v3388 = vadd.f32 %v2777, %v3362
        %v3389 = vadd.f32 %v2778, %v3365
        %v3390 = vadd.f32 %v2779, %v3370
        %v3391 = vadd.f32 %v2780, %v3373
        %v3392 = vld [vmem:[#allocation14 + $0x3] sm:$0x1]
        %v3393 = vlaneseq
        %v3394 = vshrl.u32 %v3393, 7
        %v3395 = vsub.s32 0, %v3394
        %v3396 = vrot.slane %v3392, %v3395
        %v3397 = vadd.f32 %v3376, %v3396
        %v3398 = vadd.f32 %v3377, %v3396
        %v3399 = vadd.f32 %v3378, %v3396
        %v3400 = vadd.f32 %v3379, %v3396
        %v3401 = vadd.f32 %v3380, %v3396
        %v3402 = vadd.f32 %v3381, %v3396
        %v3403 = vadd.f32 %v3382, %v3396
        %v3404 = vadd.f32 %v3383, %v3396
        %v3405 = vadd.f32 %v3384, %v3396
        %v3406 = vadd.f32 %v3385, %v3396
        %v3407 = vadd.f32 %v3386, %v3396
        %v3408 = vadd.f32 %v3387, %v3396
        %v3409 = vadd.f32 %v3388, %v3396
        %v3410 = vadd.f32 %v3389, %v3396
        %v3411 = vadd.f32 %v3390, %v3396
        %v3412 = vadd.f32 %v3391, %v3396
        %v3413 = vadd.f32 %v3397, %v475
        %v3414 = vadd.f32 %v3398, %v476
        %v3415 = vadd.f32 %v3399, %v477
        %v3416 = vadd.f32 %v3400, %v478
        %v3417 = vadd.f32 %v3401, %v479
        %v3418 = vadd.f32 %v3402, %v480
        %v3419 = vadd.f32 %v3403, %v481
        %v3420 = vadd.f32 %v3404, %v482
        %v3421 = vadd.f32 %v3405, %v483
        %v3422 = vadd.f32 %v3406, %v484
        %v3423 = vadd.f32 %v3407, %v485
        %v3424 = vadd.f32 %v3408, %v486
        %v3425 = vadd.f32 %v3409, %v487
        %v3426 = vadd.f32 %v3410, %v488
        %v3427 = vadd.f32 %v3411, %v489
        %v3428 = vadd.f32 %v3412, %v490
        %3429 = vadd.xlane.f32.xlu0 %v3413
        %v3430 = vpop.xlane.xlu0 %3429
        %3431 = vadd.xlane.f32.xlu0 %v3414
        %v3432 = vpop.xlane.xlu0 %3431
        %3433 = vadd.xlane.f32.xlu0 %v3415
        %v3434 = vpop.xlane.xlu0 %3433
        %3435 = vadd.xlane.f32.xlu0 %v3416
        %v3436 = vpop.xlane.xlu0 %3435
        %3437 = vadd.xlane.f32.xlu0 %v3417
        %v3438 = vpop.xlane.xlu0 %3437
        %3439 = vadd.xlane.f32.xlu0 %v3418
        %v3440 = vpop.xlane.xlu0 %3439
        %3441 = vadd.xlane.f32.xlu0 %v3419
        %v3442 = vpop.xlane.xlu0 %3441
        %3443 = vadd.xlane.f32.xlu0 %v3420
        %v3444 = vpop.xlane.xlu0 %3443
        %3445 = vadd.xlane.f32.xlu0 %v3421
        %v3446 = vpop.xlane.xlu0 %3445
        %3447 = vadd.xlane.f32.xlu0 %v3422
        %v3448 = vpop.xlane.xlu0 %3447
        %3449 = vadd.xlane.f32.xlu0 %v3423
        %v3450 = vpop.xlane.xlu0 %3449
        %3451 = vadd.xlane.f32.xlu0 %v3424
        %v3452 = vpop.xlane.xlu0 %3451
        %3453 = vadd.xlane.f32.xlu0 %v3425
        %v3454 = vpop.xlane.xlu0 %3453
        %3455 = vadd.xlane.f32.xlu0 %v3426
        %v3456 = vpop.xlane.xlu0 %3455
        %3457 = vadd.xlane.f32.xlu0 %v3427
        %v3458 = vpop.xlane.xlu0 %3457
        %3459 = vadd.xlane.f32.xlu0 %v3428
        %v3460 = vpop.xlane.xlu0 %3459
        %v3461 = vrcp.pop 128.0
        %v3462 = vmul.f32 %v3430, %v3461
        %v3463 = vmul.f32 %v3432, %v3461
        %v3464 = vmul.f32 %v3434, %v3461
        %v3465 = vmul.f32 %v3436, %v3461
        %v3466 = vmul.f32 %v3438, %v3461
        %v3467 = vmul.f32 %v3440, %v3461
        %v3468 = vmul.f32 %v3442, %v3461
        %v3469 = vmul.f32 %v3444, %v3461
        %v3470 = vmul.f32 %v3446, %v3461
        %v3471 = vmul.f32 %v3448, %v3461
        %v3472 = vmul.f32 %v3450, %v3461
        %v3473 = vmul.f32 %v3452, %v3461
        %v3474 = vmul.f32 %v3454, %v3461
        %v3475 = vmul.f32 %v3456, %v3461
        %v3476 = vmul.f32 %v3458, %v3461
        %v3477 = vmul.f32 %v3460, %v3461
        %v3478 = vsub.f32 %v3413, %v3462
        %v3479 = vsub.f32 %v3414, %v3463
        %v3480 = vsub.f32 %v3415, %v3464
        %v3481 = vsub.f32 %v3416, %v3465
        %v3482 = vsub.f32 %v3417, %v3466
        %v3483 = vsub.f32 %v3418, %v3467
        %v3484 = vsub.f32 %v3419, %v3468
        %v3485 = vsub.f32 %v3420, %v3469
        %v3486 = vsub.f32 %v3421, %v3470
        %v3487 = vsub.f32 %v3422, %v3471
        %v3488 = vsub.f32 %v3423, %v3472
        %v3489 = vsub.f32 %v3424, %v3473
        %v3490 = vsub.f32 %v3425, %v3474
        %v3491 = vsub.f32 %v3426, %v3475
        %v3492 = vsub.f32 %v3427, %v3476
        %v3493 = vsub.f32 %v3428, %v3477
        %v3494 = vmul.f32 %v3478, %v3478
        %v3495 = vmul.f32 %v3479, %v3479
        %v3496 = vmul.f32 %v3480, %v3480
        %v3497 = vmul.f32 %v3481, %v3481
        %v3498 = vmul.f32 %v3482, %v3482
        %v3499 = vmul.f32 %v3483, %v3483
        %v3500 = vmul.f32 %v3484, %v3484
        %v3501 = vmul.f32 %v3485, %v3485
        %v3502 = vmul.f32 %v3486, %v3486
        %v3503 = vmul.f32 %v3487, %v3487
        %v3504 = vmul.f32 %v3488, %v3488
        %v3505 = vmul.f32 %v3489, %v3489
        %v3506 = vmul.f32 %v3490, %v3490
        %v3507 = vmul.f32 %v3491, %v3491
        %v3508 = vmul.f32 %v3492, %v3492
        %v3509 = vmul.f32 %v3493, %v3493
        %3510 = vadd.xlane.f32.xlu0 %v3494
        %v3511 = vpop.xlane.xlu0 %3510
        %3512 = vadd.xlane.f32.xlu0 %v3495
        %v3513 = vpop.xlane.xlu0 %3512
        %3514 = vadd.xlane.f32.xlu0 %v3496
        %v3515 = vpop.xlane.xlu0 %3514
        %3516 = vadd.xlane.f32.xlu0 %v3497
        %v3517 = vpop.xlane.xlu0 %3516
        %3518 = vadd.xlane.f32.xlu0 %v3498
        %v3519 = vpop.xlane.xlu0 %3518
        %3520 = vadd.xlane.f32.xlu0 %v3499
        %v3521 = vpop.xlane.xlu0 %3520
        %3522 = vadd.xlane.f32.xlu0 %v3500
        %v3523 = vpop.xlane.xlu0 %3522
        %3524 = vadd.xlane.f32.xlu0 %v3501
        %v3525 = vpop.xlane.xlu0 %3524
        %3526 = vadd.xlane.f32.xlu0 %v3502
        %v3527 = vpop.xlane.xlu0 %3526
        %3528 = vadd.xlane.f32.xlu0 %v3503
        %v3529 = vpop.xlane.xlu0 %3528
        %3530 = vadd.xlane.f32.xlu0 %v3504
        %v3531 = vpop.xlane.xlu0 %3530
        %3532 = vadd.xlane.f32.xlu0 %v3505
        %v3533 = vpop.xlane.xlu0 %3532
        %3534 = vadd.xlane.f32.xlu0 %v3506
        %v3535 = vpop.xlane.xlu0 %3534
        %3536 = vadd.xlane.f32.xlu0 %v3507
        %v3537 = vpop.xlane.xlu0 %3536
        %3538 = vadd.xlane.f32.xlu0 %v3508
        %v3539 = vpop.xlane.xlu0 %3538
        %3540 = vadd.xlane.f32.xlu0 %v3509
        %v3541 = vpop.xlane.xlu0 %3540
        %v3542 = vmul.f32 %v3511, %v3461
        %v3543 = vmul.f32 %v3513, %v3461
        %v3544 = vmul.f32 %v3515, %v3461
        %v3545 = vmul.f32 %v3517, %v3461
        %v3546 = vmul.f32 %v3519, %v3461
        %v3547 = vmul.f32 %v3521, %v3461
        %v3548 = vmul.f32 %v3523, %v3461
        %v3549 = vmul.f32 %v3525, %v3461
        %v3550 = vmul.f32 %v3527, %v3461
        %v3551 = vmul.f32 %v3529, %v3461
        %v3552 = vmul.f32 %v3531, %v3461
        %v3553 = vmul.f32 %v3533, %v3461
        %v3554 = vmul.f32 %v3535, %v3461
        %v3555 = vmul.f32 %v3537, %v3461
        %v3556 = vmul.f32 %v3539, %v3461
        %v3557 = vmul.f32 %v3541, %v3461
        %v3558 = vadd.f32 %v3542, 1e-05
        %v3559 = vadd.f32 %v3543, 1e-05
        %v3560 = vadd.f32 %v3544, 1e-05
        %v3561 = vadd.f32 %v3545, 1e-05
        %v3562 = vadd.f32 %v3546, 1e-05
        %v3563 = vadd.f32 %v3547, 1e-05
        %v3564 = vadd.f32 %v3548, 1e-05
        %v3565 = vadd.f32 %v3549, 1e-05
        %v3566 = vadd.f32 %v3550, 1e-05
        %v3567 = vadd.f32 %v3551, 1e-05
        %v3568 = vadd.f32 %v3552, 1e-05
        %v3569 = vadd.f32 %v3553, 1e-05
        %v3570 = vadd.f32 %v3554, 1e-05
        %v3571 = vadd.f32 %v3555, 1e-05
        %v3572 = vadd.f32 %v3556, 1e-05
        %v3573 = vadd.f32 %v3557, 1e-05
        %v3574 = vrsqrt.pop %v3558
        %v3575 = vrsqrt.pop %v3559
        %v3576 = vrsqrt.pop %v3560
        %v3577 = vrsqrt.pop %v3561
        %v3578 = vrsqrt.pop %v3562
        %v3579 = vrsqrt.pop %v3563
        %v3580 = vrsqrt.pop %v3564
        %v3581 = vrsqrt.pop %v3565
        %v3582 = vrsqrt.pop %v3566
        %v3583 = vrsqrt.pop %v3567
        %v3584 = vrsqrt.pop %v3568
        %v3585 = vrsqrt.pop %v3569
        %v3586 = vrsqrt.pop %v3570
        %v3587 = vrsqrt.pop %v3571
        %v3588 = vrsqrt.pop %v3572
        %v3589 = vrsqrt.pop %v3573
        %v3590 = vmul.f32 %v3478, %v3574
        %v3591 = vmul.f32 %v3479, %v3575
        %v3592 = vmul.f32 %v3480, %v3576
        %v3593 = vmul.f32 %v3481, %v3577
        %v3594 = vmul.f32 %v3482, %v3578
        %v3595 = vmul.f32 %v3483, %v3579
        %v3596 = vmul.f32 %v3484, %v3580
        %v3597 = vmul.f32 %v3485, %v3581
        %v3598 = vmul.f32 %v3486, %v3582
        %v3599 = vmul.f32 %v3487, %v3583
        %v3600 = vmul.f32 %v3488, %v3584
        %v3601 = vmul.f32 %v3489, %v3585
        %v3602 = vmul.f32 %v3490, %v3586
        %v3603 = vmul.f32 %v3491, %v3587
        %v3604 = vmul.f32 %v3492, %v3588
        %v3605 = vmul.f32 %v3493, %v3589
        %v3606 = vld [vmem:[#allocation14 + $0x4] sm:$0x1]
        %v3607 = vlaneseq
        %v3608 = vshrl.u32 %v3607, 7
        %v3609 = vsub.s32 0, %v3608
        %v3610 = vrot.slane %v3606, %v3609
        %v3611 = vmul.f32 %v3590, %v3610
        %v3612 = vmul.f32 %v3591, %v3610
        %v3613 = vmul.f32 %v3592, %v3610
        %v3614 = vmul.f32 %v3593, %v3610
        %v3615 = vmul.f32 %v3594, %v3610
        %v3616 = vmul.f32 %v3595, %v3610
        %v3617 = vmul.f32 %v3596, %v3610
        %v3618 = vmul.f32 %v3597, %v3610
        %v3619 = vmul.f32 %v3598, %v3610
        %v3620 = vmul.f32 %v3599, %v3610
        %v3621 = vmul.f32 %v3600, %v3610
        %v3622 = vmul.f32 %v3601, %v3610
        %v3623 = vmul.f32 %v3602, %v3610
        %v3624 = vmul.f32 %v3603, %v3610
        %v3625 = vmul.f32 %v3604, %v3610
        %v3626 = vmul.f32 %v3605, %v3610
        %v3627 = vld [vmem:[#allocation14 + $0x5] sm:$0x1]
        %v3628 = vlaneseq
        %v3629 = vshrl.u32 %v3628, 7
        %v3630 = vsub.s32 0, %v3629
        %v3631 = vrot.slane %v3627, %v3630
        %v3632 = vadd.f32 %v3611, %v3631
        %v3633 = vadd.f32 %v3612, %v3631
        %v3634 = vadd.f32 %v3613, %v3631
        %v3635 = vadd.f32 %v3614, %v3631
        %v3636 = vadd.f32 %v3615, %v3631
        %v3637 = vadd.f32 %v3616, %v3631
        %v3638 = vadd.f32 %v3617, %v3631
        %v3639 = vadd.f32 %v3618, %v3631
        %v3640 = vadd.f32 %v3619, %v3631
        %v3641 = vadd.f32 %v3620, %v3631
        %v3642 = vadd.f32 %v3621, %v3631
        %v3643 = vadd.f32 %v3622, %v3631
        %v3644 = vadd.f32 %v3623, %v3631
        %v3645 = vadd.f32 %v3624, %v3631
        %v3646 = vadd.f32 %v3625, %v3631
        %v3647 = vadd.f32 %v3626, %v3631
        %v3648 = vpack.c.bf16 %v3633, %v3632
        %v3649 = vpack.c.bf16 %v3635, %v3634
        %v3650 = vpack.c.bf16 %v3637, %v3636
        %v3651 = vpack.c.bf16 %v3639, %v3638
        %v3652 = vpack.c.bf16 %v3641, %v3640
        %v3653 = vpack.c.bf16 %v3643, %v3642
        %v3654 = vpack.c.bf16 %v3645, %v3644
        %v3655 = vpack.c.bf16 %v3647, %v3646
        %v3656 = vld [vmem:[#allocation11] sm:$0xff]
        %v3657 = vld [vmem:[#allocation11 + $0x8] sm:$0xff]
        %v3658 = vld [vmem:[#allocation11 + $0x10] sm:$0xff]
        %v3659 = vld [vmem:[#allocation11 + $0x18] sm:$0xff]
        %v3660 = vld [vmem:[#allocation11 + $0x20] sm:$0xff]
        %v3661 = vld [vmem:[#allocation11 + $0x28] sm:$0xff]
        %v3662 = vld [vmem:[#allocation11 + $0x30] sm:$0xff]
        %v3663 = vld [vmem:[#allocation11 + $0x38] sm:$0xff]
        %v3664 = vld [vmem:[#allocation11 + $0x40] sm:$0xff]
        %v3665 = vld [vmem:[#allocation11 + $0x48] sm:$0xff]
        %v3666 = vld [vmem:[#allocation11 + $0x50] sm:$0xff]
        %v3667 = vld [vmem:[#allocation11 + $0x58] sm:$0xff]
        %v3668 = vld [vmem:[#allocation11 + $0x60] sm:$0xff]
        %v3669 = vld [vmem:[#allocation11 + $0x68] sm:$0xff]
        %v3670 = vld [vmem:[#allocation11 + $0x70] sm:$0xff]
        %v3671 = vld [vmem:[#allocation11 + $0x78] sm:$0xff]
        %v3672 = vld [vmem:[#allocation11 + $0x80] sm:$0xff]
        %v3673 = vld [vmem:[#allocation11 + $0x88] sm:$0xff]
        %v3674 = vld [vmem:[#allocation11 + $0x90] sm:$0xff]
        %v3675 = vld [vmem:[#allocation11 + $0x98] sm:$0xff]
        %v3676 = vld [vmem:[#allocation11 + $0xa0] sm:$0xff]
        %v3677 = vld [vmem:[#allocation11 + $0xa8] sm:$0xff]
        %v3678 = vld [vmem:[#allocation11 + $0xb0] sm:$0xff]
        %v3679 = vld [vmem:[#allocation11 + $0xb8] sm:$0xff]
        %v3680 = vld [vmem:[#allocation11 + $0xc0] sm:$0xff]
        %v3681 = vld [vmem:[#allocation11 + $0xc8] sm:$0xff]
        %v3682 = vld [vmem:[#allocation11 + $0xd0] sm:$0xff]
        %v3683 = vld [vmem:[#allocation11 + $0xd8] sm:$0xff]
        %v3684 = vld [vmem:[#allocation11 + $0xe0] sm:$0xff]
        %v3685 = vld [vmem:[#allocation11 + $0xe8] sm:$0xff]
        %v3686 = vld [vmem:[#allocation11 + $0xf0] sm:$0xff]
        %v3687 = vld [vmem:[#allocation11 + $0xf8] sm:$0xff]
        %v3688 = vld [vmem:[%s8] sm:$0xf]
        %v3690 = vlaneseq
        %v3691 = vshrl.u32 %v3690, 7
        %v3692 = vsub.s32 0, %v3691
        %v3693 = vrot.slane %v3688, %v3692
        %v3694 = vlaneseq
        %v3695 = vshrl.u32 %v3694, 7
        %v3696 = vsub.s32 1, %v3695
        %v3697 = vrot.slane %v3688, %v3696
        %v3698 = vlaneseq
        %v3699 = vshrl.u32 %v3698, 7
        %v3700 = vsub.s32 2, %v3699
        %v3701 = vrot.slane %v3688, %v3700
        %v3702 = vlaneseq
        %v3703 = vshrl.u32 %v3702, 7
        %v3704 = vsub.s32 3, %v3703
        %v3705 = vrot.slane %v3688, %v3704
        %v3742 = vunpack.c.l.b16 %v3656
        %v3743 = vunpack.c.h.b16 %v3656
        %v3744 = vunpack.c.l.b16 %v3657
        %v3745 = vunpack.c.h.b16 %v3657
        %v3746 = vunpack.c.l.b16 %v3658
        %v3747 = vunpack.c.h.b16 %v3658
        %v3748 = vunpack.c.l.b16 %v3659
        %v3749 = vunpack.c.h.b16 %v3659
        %v3750 = vunpack.c.l.b16 %v3660
        %v3751 = vunpack.c.h.b16 %v3660
        %v3752 = vunpack.c.l.b16 %v3661
        %v3753 = vunpack.c.h.b16 %v3661
        %v3754 = vunpack.c.l.b16 %v3662
        %v3755 = vunpack.c.h.b16 %v3662
        %v3756 = vunpack.c.l.b16 %v3663
        %v3757 = vunpack.c.h.b16 %v3663
        %v3758 = vunpack.c.l.b16 %v3664
        %v3759 = vunpack.c.h.b16 %v3664
        %v3760 = vunpack.c.l.b16 %v3665
        %v3761 = vunpack.c.h.b16 %v3665
        %v3762 = vunpack.c.l.b16 %v3666
        %v3763 = vunpack.c.h.b16 %v3666
        %v3764 = vunpack.c.l.b16 %v3667
        %v3765 = vunpack.c.h.b16 %v3667
        %v3766 = vunpack.c.l.b16 %v3668
        %v3767 = vunpack.c.h.b16 %v3668
        %v3768 = vunpack.c.l.b16 %v3669
        %v3769 = vunpack.c.h.b16 %v3669
        %v3770 = vunpack.c.l.b16 %v3670
        %v3771 = vunpack.c.h.b16 %v3670
        %v3772 = vunpack.c.l.b16 %v3671
        %v3773 = vunpack.c.h.b16 %v3671
        %v3774 = vunpack.c.l.b16 %v3672
        %v3775 = vunpack.c.h.b16 %v3672
        %v3776 = vunpack.c.l.b16 %v3673
        %v3777 = vunpack.c.h.b16 %v3673
        %v3778 = vunpack.c.l.b16 %v3674
        %v3779 = vunpack.c.h.b16 %v3674
        %v3780 = vunpack.c.l.b16 %v3675
        %v3781 = vunpack.c.h.b16 %v3675
        %v3782 = vunpack.c.l.b16 %v3676
        %v3783 = vunpack.c.h.b16 %v3676
        %v3784 = vunpack.c.l.b16 %v3677
        %v3785 = vunpack.c.h.b16 %v3677
        %v3786 = vunpack.c.l.b16 %v3678
        %v3787 = vunpack.c.h.b16 %v3678
        %v3788 = vunpack.c.l.b16 %v3679
        %v3789 = vunpack.c.h.b16 %v3679
        %v3790 = vunpack.c.l.b16 %v3680
        %v3791 = vunpack.c.h.b16 %v3680
        %v3792 = vunpack.c.l.b16 %v3681
        %v3793 = vunpack.c.h.b16 %v3681
        %v3794 = vunpack.c.l.b16 %v3682
        %v3795 = vunpack.c.h.b16 %v3682
        %v3796 = vunpack.c.l.b16 %v3683
        %v3797 = vunpack.c.h.b16 %v3683
        %v3798 = vunpack.c.l.b16 %v3684
        %v3799 = vunpack.c.h.b16 %v3684
        %v3800 = vunpack.c.l.b16 %v3685
        %v3801 = vunpack.c.h.b16 %v3685
        %v3802 = vunpack.c.l.b16 %v3686
        %v3803 = vunpack.c.h.b16 %v3686
        %v3804 = vunpack.c.l.b16 %v3687
        %v3805 = vunpack.c.h.b16 %v3687
        %v3806 = vpack.c.b16 %v3746, %v3742
        %v3807 = vpack.c.b16 %v3747, %v3743
        %v3808 = vpack.c.b16 %v3748, %v3744
        %v3809 = vpack.c.b16 %v3749, %v3745
        %v3810 = vpack.c.b16 %v3754, %v3750
        %v3811 = vpack.c.b16 %v3755, %v3751
        %v3812 = vpack.c.b16 %v3756, %v3752
        %v3813 = vpack.c.b16 %v3757, %v3753
        %v3814 = vpack.c.b16 %v3762, %v3758
        %v3815 = vpack.c.b16 %v3763, %v3759
        %v3816 = vpack.c.b16 %v3764, %v3760
        %v3817 = vpack.c.b16 %v3765, %v3761
        %v3818 = vpack.c.b16 %v3770, %v3766
        %v3819 = vpack.c.b16 %v3771, %v3767
        %v3820 = vpack.c.b16 %v3772, %v3768
        %v3821 = vpack.c.b16 %v3773, %v3769
        %v3822 = vpack.c.b16 %v3778, %v3774
        %v3823 = vpack.c.b16 %v3779, %v3775
        %v3824 = vpack.c.b16 %v3780, %v3776
        %v3825 = vpack.c.b16 %v3781, %v3777
        %v3826 = vpack.c.b16 %v3786, %v3782
        %v3827 = vpack.c.b16 %v3787, %v3783
        %v3828 = vpack.c.b16 %v3788, %v3784
        %v3829 = vpack.c.b16 %v3789, %v3785
        %v3830 = vpack.c.b16 %v3794, %v3790
        %v3831 = vpack.c.b16 %v3795, %v3791
        %v3832 = vpack.c.b16 %v3796, %v3792
        %v3833 = vpack.c.b16 %v3797, %v3793
        %v3834 = vpack.c.b16 %v3802, %v3798
        %v3835 = vpack.c.b16 %v3803, %v3799
        %v3836 = vpack.c.b16 %v3804, %v3800
        %v3837 = vpack.c.b16 %v3805, %v3801
        %3870 = vmatprep.subr.bf16.mxu0 %v3835
        %3871 = vmatpush1.bf16.msra.mxu0 %v3834
        %3872 = vmatprep.subr.bf16.mxu0 %v3831
        %3873 = vmatpush1.bf16.msra.mxu0 %v3830
        %3874 = vmatprep.subr.bf16.mxu0 %v3827
        %3875 = vmatpush1.bf16.msra.mxu0 %v3826
        %3876 = vmatprep.subr.bf16.mxu0 %v3823
        %3877 = vmatpush1.bf16.msra.mxu0 %v3822
        %3878 = vmatprep.subr.bf16.mxu0 %v3819
        %3879 = vmatpush1.bf16.msra.mxu0 %v3818
        %3880 = vmatprep.subr.bf16.mxu0 %v3815
        %3881 = vmatpush1.bf16.msra.mxu0 %v3814
        %3882 = vmatprep.subr.bf16.mxu0 %v3811
        %3883 = vmatpush1.bf16.msra.mxu0 %v3810
        %3884 = vmatprep.subr.bf16.mxu0 %v3807
        %3885 = vmatpush1.bf16.msra.mxu0 %v3806
        %3886 = vmatprep.subr.bf16.mxu0 0
        %3887 = vmatpush2.bf16.msra.mxu0 0
        %3888 = vmatprep.subr.bf16.mxu0 0
        %3889 = vmatpush2.bf16.msra.mxu0 0
        %3890 = vmatprep.subr.bf16.mxu0 0
        %3891 = vmatpush2.bf16.msra.mxu0 0
        %3892 = vmatprep.subr.bf16.mxu0 0
        %3893 = vmatpush2.bf16.msra.mxu0 0
        %3894 = vmatprep.subr.bf16.mxu0 0
        %3895 = vmatpush2.bf16.msra.mxu0 0
        %3896 = vmatprep.subr.bf16.mxu0 0
        %3897 = vmatpush2.bf16.msra.mxu0 0
        %3898 = vmatprep.subr.bf16.mxu0 0
        %3899 = vmatpush2.bf16.msra.mxu0 0
        %3900 = vmatprep.subr.bf16.mxu0 0
        %3901 = vmatpush2.bf16.msra.mxu0 0
        %3902 = vmatprep.mubr.bf16.mxu0 0
        %3903 = vmatmul.mubr.bf16.gmra.mxu0 %v3648
        %v3904 = vpop.f32.mrf.mxu0
        %v3905 = vadd.f32 %v3693, %v3904
        %v3906 = vpop.f32.mrf.mxu0
        %v3907 = vadd.f32 %v3697, %v3906
        %v3908 = vpop.f32.mrf.mxu0
        %v3909 = vadd.f32 %v3693, %v3908
        %v3910 = vpop.f32.mrf.mxu0
        %v3911 = vadd.f32 %v3697, %v3910
        %3912 = vmatprep.mubr.bf16.mxu0 0
        %3913 = vmatmul.mubr.bf16.gmra.mxu0 %v3649
        %v3914 = vpop.f32.mrf.mxu0
        %v3915 = vadd.f32 %v3693, %v3914
        %v3916 = vpop.f32.mrf.mxu0
        %v3917 = vadd.f32 %v3697, %v3916
        %v3918 = vpop.f32.mrf.mxu0
        %v3919 = vadd.f32 %v3693, %v3918
        %v3920 = vpop.f32.mrf.mxu0
        %v3921 = vadd.f32 %v3697, %v3920
        %3922 = vmatprep.mubr.bf16.mxu0 0
        %3923 = vmatmul.mubr.bf16.gmra.mxu0 %v3650
        %v3924 = vpop.f32.mrf.mxu0
        %v3925 = vadd.f32 %v3693, %v3924
        %v3926 = vpop.f32.mrf.mxu0
        %v3927 = vadd.f32 %v3697, %v3926
        %v3928 = vpop.f32.mrf.mxu0
        %v3929 = vadd.f32 %v3693, %v3928
        %v3930 = vpop.f32.mrf.mxu0
        %v3931 = vadd.f32 %v3697, %v3930
        %3932 = vmatprep.mubr.bf16.mxu0 0
        %3933 = vmatmul.mubr.bf16.gmra.mxu0 %v3651
        %v3934 = vpop.f32.mrf.mxu0
        %v3935 = vadd.f32 %v3693, %v3934
        %v3936 = vpop.f32.mrf.mxu0
        %v3937 = vadd.f32 %v3697, %v3936
        %v3938 = vpop.f32.mrf.mxu0
        %v3939 = vadd.f32 %v3693, %v3938
        %v3940 = vpop.f32.mrf.mxu0
        %v3941 = vadd.f32 %v3697, %v3940
        %3942 = vmatprep.mubr.bf16.mxu0 0
        %3943 = vmatmul.mubr.bf16.gmra.mxu0 %v3652
        %v3944 = vpop.f32.mrf.mxu0
        %v3945 = vadd.f32 %v3693, %v3944
        %v3946 = vpop.f32.mrf.mxu0
        %v3947 = vadd.f32 %v3697, %v3946
        %v3948 = vpop.f32.mrf.mxu0
        %v3949 = vadd.f32 %v3693, %v3948
        %v3950 = vpop.f32.mrf.mxu0
        %v3951 = vadd.f32 %v3697, %v3950
        %3952 = vmatprep.mubr.bf16.mxu0 0
        %3953 = vmatmul.mubr.bf16.gmra.mxu0 %v3653
        %v3954 = vpop.f32.mrf.mxu0
        %v3955 = vadd.f32 %v3693, %v3954
        %v3956 = vpop.f32.mrf.mxu0
        %v3957 = vadd.f32 %v3697, %v3956
        %v3958 = vpop.f32.mrf.mxu0
        %v3959 = vadd.f32 %v3693, %v3958
        %v3960 = vpop.f32.mrf.mxu0
        %v3961 = vadd.f32 %v3697, %v3960
        %3962 = vmatprep.mubr.bf16.mxu0 0
        %3963 = vmatmul.mubr.bf16.gmra.mxu0 %v3654
        %v3964 = vpop.f32.mrf.mxu0
        %v3965 = vadd.f32 %v3693, %v3964
        %v3966 = vpop.f32.mrf.mxu0
        %v3967 = vadd.f32 %v3697, %v3966
        %v3968 = vpop.f32.mrf.mxu0
        %v3969 = vadd.f32 %v3693, %v3968
        %v3970 = vpop.f32.mrf.mxu0
        %v3971 = vadd.f32 %v3697, %v3970
        %3972 = vmatprep.mubr.bf16.mxu0 0
        %3973 = vmatmul.mubr.bf16.gmra.mxu0 %v3655
        %v3974 = vpop.f32.mrf.mxu0
        %v3975 = vadd.f32 %v3693, %v3974
        %v3976 = vpop.f32.mrf.mxu0
        %v3977 = vadd.f32 %v3697, %v3976
        %v3978 = vpop.f32.mrf.mxu0
        %v3979 = vadd.f32 %v3693, %v3978
        %v3980 = vpop.f32.mrf.mxu0
        %v3981 = vadd.f32 %v3697, %v3980
        %3982 = vdwg.mxu0
        %3983 = vmatprep.subr.bf16.mxu0 %v3837
        %3984 = vmatpush1.bf16.msra.mxu0 %v3836
        %3985 = vmatprep.subr.bf16.mxu0 %v3833
        %3986 = vmatpush1.bf16.msra.mxu0 %v3832
        %3987 = vmatprep.subr.bf16.mxu0 %v3829
        %3988 = vmatpush1.bf16.msra.mxu0 %v3828
        %3989 = vmatprep.subr.bf16.mxu0 %v3825
        %3990 = vmatpush1.bf16.msra.mxu0 %v3824
        %3991 = vmatprep.subr.bf16.mxu0 %v3821
        %3992 = vmatpush1.bf16.msra.mxu0 %v3820
        %3993 = vmatprep.subr.bf16.mxu0 %v3817
        %3994 = vmatpush1.bf16.msra.mxu0 %v3816
        %3995 = vmatprep.subr.bf16.mxu0 %v3813
        %3996 = vmatpush1.bf16.msra.mxu0 %v3812
        %3997 = vmatprep.subr.bf16.mxu0 %v3809
        %3998 = vmatpush1.bf16.msra.mxu0 %v3808
        %3999 = vmatprep.subr.bf16.mxu0 0
        %4000 = vmatpush2.bf16.msra.mxu0 0
        %4001 = vmatprep.subr.bf16.mxu0 0
        %4002 = vmatpush2.bf16.msra.mxu0 0
        %4003 = vmatprep.subr.bf16.mxu0 0
        %4004 = vmatpush2.bf16.msra.mxu0 0
        %4005 = vmatprep.subr.bf16.mxu0 0
        %4006 = vmatpush2.bf16.msra.mxu0 0
        %4007 = vmatprep.subr.bf16.mxu0 0
        %4008 = vmatpush2.bf16.msra.mxu0 0
        %4009 = vmatprep.subr.bf16.mxu0 0
        %4010 = vmatpush2.bf16.msra.mxu0 0
        %4011 = vmatprep.subr.bf16.mxu0 0
        %4012 = vmatpush2.bf16.msra.mxu0 0
        %4013 = vmatprep.subr.bf16.mxu0 0
        %4014 = vmatpush2.bf16.msra.mxu0 0
        %4015 = vmatprep.mubr.bf16.mxu0 0
        %4016 = vmatmul.mubr.bf16.gmra.mxu0 %v3648
        %v4017 = vpop.f32.mrf.mxu0
        %v4018 = vadd.f32 %v3701, %v4017
        %v4019 = vpop.f32.mrf.mxu0
        %v4020 = vadd.f32 %v3705, %v4019
        %v4021 = vpop.f32.mrf.mxu0
        %v4022 = vadd.f32 %v3701, %v4021
        %v4023 = vpop.f32.mrf.mxu0
        %v4024 = vadd.f32 %v3705, %v4023
        %4025 = vmatprep.mubr.bf16.mxu0 0
        %4026 = vmatmul.mubr.bf16.gmra.mxu0 %v3649
        %v4027 = vpop.f32.mrf.mxu0
        %v4028 = vadd.f32 %v3701, %v4027
        %v4029 = vpop.f32.mrf.mxu0
        %v4030 = vadd.f32 %v3705, %v4029
        %v4031 = vpop.f32.mrf.mxu0
        %v4032 = vadd.f32 %v3701, %v4031
        %v4033 = vpop.f32.mrf.mxu0
        %v4034 = vadd.f32 %v3705, %v4033
        %4035 = vmatprep.mubr.bf16.mxu0 0
        %4036 = vmatmul.mubr.bf16.gmra.mxu0 %v3650
        %v4037 = vpop.f32.mrf.mxu0
        %v4038 = vadd.f32 %v3701, %v4037
        %v4039 = vpop.f32.mrf.mxu0
        %v4040 = vadd.f32 %v3705, %v4039
        %v4041 = vpop.f32.mrf.mxu0
        %v4042 = vadd.f32 %v3701, %v4041
        %v4043 = vpop.f32.mrf.mxu0
        %v4044 = vadd.f32 %v3705, %v4043
        %4045 = vmatprep.mubr.bf16.mxu0 0
        %4046 = vmatmul.mubr.bf16.gmra.mxu0 %v3651
        %v4047 = vpop.f32.mrf.mxu0
        %v4048 = vadd.f32 %v3701, %v4047
        %v4049 = vpop.f32.mrf.mxu0
        %v4050 = vadd.f32 %v3705, %v4049
        %v4051 = vpop.f32.mrf.mxu0
        %v4052 = vadd.f32 %v3701, %v4051
        %v4053 = vpop.f32.mrf.mxu0
        %v4054 = vadd.f32 %v3705, %v4053
        %4055 = vmatprep.mubr.bf16.mxu0 0
        %4056 = vmatmul.mubr.bf16.gmra.mxu0 %v3652
        %v4057 = vpop.f32.mrf.mxu0
        %v4058 = vadd.f32 %v3701, %v4057
        %v4059 = vpop.f32.mrf.mxu0
        %v4060 = vadd.f32 %v3705, %v4059
        %v4061 = vpop.f32.mrf.mxu0
        %v4062 = vadd.f32 %v3701, %v4061
        %v4063 = vpop.f32.mrf.mxu0
        %v4064 = vadd.f32 %v3705, %v4063
        %4065 = vmatprep.mubr.bf16.mxu0 0
        %4066 = vmatmul.mubr.bf16.gmra.mxu0 %v3653
        %v4067 = vpop.f32.mrf.mxu0
        %v4068 = vadd.f32 %v3701, %v4067
        %v4069 = vpop.f32.mrf.mxu0
        %v4070 = vadd.f32 %v3705, %v4069
        %v4071 = vpop.f32.mrf.mxu0
        %v4072 = vadd.f32 %v3701, %v4071
        %v4073 = vpop.f32.mrf.mxu0
        %v4074 = vadd.f32 %v3705, %v4073
        %4075 = vmatprep.mubr.bf16.mxu0 0
        %4076 = vmatmul.mubr.bf16.gmra.mxu0 %v3654
        %v4077 = vpop.f32.mrf.mxu0
        %v4078 = vadd.f32 %v3701, %v4077
        %v4079 = vpop.f32.mrf.mxu0
        %v4080 = vadd.f32 %v3705, %v4079
        %v4081 = vpop.f32.mrf.mxu0
        %v4082 = vadd.f32 %v3701, %v4081
        %v4083 = vpop.f32.mrf.mxu0
        %v4084 = vadd.f32 %v3705, %v4083
        %4085 = vmatprep.mubr.bf16.mxu0 0
        %4086 = vmatmul.mubr.bf16.gmra.mxu0 %v3655
        %v4087 = vpop.f32.mrf.mxu0
        %v4088 = vadd.f32 %v3701, %v4087
        %v4089 = vpop.f32.mrf.mxu0
        %v4090 = vadd.f32 %v3705, %v4089
        %v4091 = vpop.f32.mrf.mxu0
        %v4092 = vadd.f32 %v3701, %v4091
        %v4093 = vpop.f32.mrf.mxu0
        %v4094 = vadd.f32 %v3705, %v4093
        %4095 = vdwg.mxu0
        %v4096 = vmax.f32 %v3905, 0.0
        %v4097 = vmax.f32 %v3907, 0.0
        %v4098 = vmax.f32 %v4018, 0.0
        %v4099 = vmax.f32 %v4020, 0.0
        %v4100 = vmax.f32 %v3909, 0.0
        %v4101 = vmax.f32 %v3911, 0.0
        %v4102 = vmax.f32 %v4022, 0.0
        %v4103 = vmax.f32 %v4024, 0.0
        %v4104 = vmax.f32 %v3915, 0.0
        %v4105 = vmax.f32 %v3917, 0.0
        %v4106 = vmax.f32 %v4028, 0.0
        %v4107 = vmax.f32 %v4030, 0.0
        %v4108 = vmax.f32 %v3919, 0.0
        %v4109 = vmax.f32 %v3921, 0.0
        %v4110 = vmax.f32 %v4032, 0.0
        %v4111 = vmax.f32 %v4034, 0.0
        %v4112 = vmax.f32 %v3925, 0.0
        %v4113 = vmax.f32 %v3927, 0.0
        %v4114 = vmax.f32 %v4038, 0.0
        %v4115 = vmax.f32 %v4040, 0.0
        %v4116 = vmax.f32 %v3929, 0.0
        %v4117 = vmax.f32 %v3931, 0.0
        %v4118 = vmax.f32 %v4042, 0.0
        %v4119 = vmax.f32 %v4044, 0.0
        %v4120 = vmax.f32 %v3935, 0.0
        %v4121 = vmax.f32 %v3937, 0.0
        %v4122 = vmax.f32 %v4048, 0.0
        %v4123 = vmax.f32 %v4050, 0.0
        %v4124 = vmax.f32 %v3939, 0.0
        %v4125 = vmax.f32 %v3941, 0.0
        %v4126 = vmax.f32 %v4052, 0.0
        %v4127 = vmax.f32 %v4054, 0.0
        %v4128 = vmax.f32 %v3945, 0.0
        %v4129 = vmax.f32 %v3947, 0.0
        %v4130 = vmax.f32 %v4058, 0.0
        %v4131 = vmax.f32 %v4060, 0.0
        %v4132 = vmax.f32 %v3949, 0.0
        %v4133 = vmax.f32 %v3951, 0.0
        %v4134 = vmax.f32 %v4062, 0.0
        %v4135 = vmax.f32 %v4064, 0.0
        %v4136 = vmax.f32 %v3955, 0.0
        %v4137 = vmax.f32 %v3957, 0.0
        %v4138 = vmax.f32 %v4068, 0.0
        %v4139 = vmax.f32 %v4070, 0.0
        %v4140 = vmax.f32 %v3959, 0.0
        %v4141 = vmax.f32 %v3961, 0.0
        %v4142 = vmax.f32 %v4072, 0.0
        %v4143 = vmax.f32 %v4074, 0.0
        %v4144 = vmax.f32 %v3965, 0.0
        %v4145 = vmax.f32 %v3967, 0.0
        %v4146 = vmax.f32 %v4078, 0.0
        %v4147 = vmax.f32 %v4080, 0.0
        %v4148 = vmax.f32 %v3969, 0.0
        %v4149 = vmax.f32 %v3971, 0.0
        %v4150 = vmax.f32 %v4082, 0.0
        %v4151 = vmax.f32 %v4084, 0.0
        %v4152 = vmax.f32 %v3975, 0.0
        %v4153 = vmax.f32 %v3977, 0.0
        %v4154 = vmax.f32 %v4088, 0.0
        %v4155 = vmax.f32 %v4090, 0.0
        %v4156 = vmax.f32 %v3979, 0.0
        %v4157 = vmax.f32 %v3981, 0.0
        %v4158 = vmax.f32 %v4092, 0.0
        %v4159 = vmax.f32 %v4094, 0.0
        %v4160 = vpack.c.bf16 %v4100, %v4096
        %v4161 = vpack.c.bf16 %v4101, %v4097
        %v4162 = vpack.c.bf16 %v4102, %v4098
        %v4163 = vpack.c.bf16 %v4103, %v4099
        %v4164 = vpack.c.bf16 %v4108, %v4104
        %v4165 = vpack.c.bf16 %v4109, %v4105
        %v4166 = vpack.c.bf16 %v4110, %v4106
        %v4167 = vpack.c.bf16 %v4111, %v4107
        %v4168 = vpack.c.bf16 %v4116, %v4112
        %v4169 = vpack.c.bf16 %v4117, %v4113
        %v4170 = vpack.c.bf16 %v4118, %v4114
        %v4171 = vpack.c.bf16 %v4119, %v4115
        %v4172 = vpack.c.bf16 %v4124, %v4120
        %v4173 = vpack.c.bf16 %v4125, %v4121
        %v4174 = vpack.c.bf16 %v4126, %v4122
        %v4175 = vpack.c.bf16 %v4127, %v4123
        %v4176 = vpack.c.bf16 %v4132, %v4128
        %v4177 = vpack.c.bf16 %v4133, %v4129
        %v4178 = vpack.c.bf16 %v4134, %v4130
        %v4179 = vpack.c.bf16 %v4135, %v4131
        %v4180 = vpack.c.bf16 %v4140, %v4136
        %v4181 = vpack.c.bf16 %v4141, %v4137
        %v4182 = vpack.c.bf16 %v4142, %v4138
        %v4183 = vpack.c.bf16 %v4143, %v4139
        %v4184 = vpack.c.bf16 %v4148, %v4144
        %v4185 = vpack.c.bf16 %v4149, %v4145
        %v4186 = vpack.c.bf16 %v4150, %v4146
        %v4187 = vpack.c.bf16 %v4151, %v4147
        %v4188 = vpack.c.bf16 %v4156, %v4152
        %v4189 = vpack.c.bf16 %v4157, %v4153
        %v4190 = vpack.c.bf16 %v4158, %v4154
        %v4191 = vpack.c.bf16 %v4159, %v4155
        %v4192 = vld [vmem:[#allocation13] sm:$0xf]
        %v4193 = vld [vmem:[#allocation13 + $0x4] sm:$0xf]
        %v4194 = vld [vmem:[#allocation13 + $0x8] sm:$0xf]
        %v4195 = vld [vmem:[#allocation13 + $0xc] sm:$0xf]
        %v4196 = vld [vmem:[#allocation13 + $0x10] sm:$0xf]
        %v4197 = vld [vmem:[#allocation13 + $0x14] sm:$0xf]
        %v4198 = vld [vmem:[#allocation13 + $0x18] sm:$0xf]
        %v4199 = vld [vmem:[#allocation13 + $0x1c] sm:$0xf]
        %v4200 = vld [vmem:[#allocation13 + $0x20] sm:$0xf]
        %v4201 = vld [vmem:[#allocation13 + $0x24] sm:$0xf]
        %v4202 = vld [vmem:[#allocation13 + $0x28] sm:$0xf]
        %v4203 = vld [vmem:[#allocation13 + $0x2c] sm:$0xf]
        %v4204 = vld [vmem:[#allocation13 + $0x30] sm:$0xf]
        %v4205 = vld [vmem:[#allocation13 + $0x34] sm:$0xf]
        %v4206 = vld [vmem:[#allocation13 + $0x38] sm:$0xf]
        %v4207 = vld [vmem:[#allocation13 + $0x3c] sm:$0xf]
        %v4208 = vld [vmem:[#allocation13 + $0x40] sm:$0xf]
        %v4209 = vld [vmem:[#allocation13 + $0x44] sm:$0xf]
        %v4210 = vld [vmem:[#allocation13 + $0x48] sm:$0xf]
        %v4211 = vld [vmem:[#allocation13 + $0x4c] sm:$0xf]
        %v4212 = vld [vmem:[#allocation13 + $0x50] sm:$0xf]
        %v4213 = vld [vmem:[#allocation13 + $0x54] sm:$0xf]
        %v4214 = vld [vmem:[#allocation13 + $0x58] sm:$0xf]
        %v4215 = vld [vmem:[#allocation13 + $0x5c] sm:$0xf]
        %v4216 = vld [vmem:[#allocation13 + $0x60] sm:$0xf]
        %v4217 = vld [vmem:[#allocation13 + $0x64] sm:$0xf]
        %v4218 = vld [vmem:[#allocation13 + $0x68] sm:$0xf]
        %v4219 = vld [vmem:[#allocation13 + $0x6c] sm:$0xf]
        %v4220 = vld [vmem:[#allocation13 + $0x70] sm:$0xf]
        %v4221 = vld [vmem:[#allocation13 + $0x74] sm:$0xf]
        %v4222 = vld [vmem:[#allocation13 + $0x78] sm:$0xf]
        %v4223 = vld [vmem:[#allocation13 + $0x7c] sm:$0xf]
        %v4224 = vld [vmem:[#allocation13 + $0x80] sm:$0xf]
        %v4225 = vld [vmem:[#allocation13 + $0x84] sm:$0xf]
        %v4226 = vld [vmem:[#allocation13 + $0x88] sm:$0xf]
        %v4227 = vld [vmem:[#allocation13 + $0x8c] sm:$0xf]
        %v4228 = vld [vmem:[#allocation13 + $0x90] sm:$0xf]
        %v4229 = vld [vmem:[#allocation13 + $0x94] sm:$0xf]
        %v4230 = vld [vmem:[#allocation13 + $0x98] sm:$0xf]
        %v4231 = vld [vmem:[#allocation13 + $0x9c] sm:$0xf]
        %v4232 = vld [vmem:[#allocation13 + $0xa0] sm:$0xf]
        %v4233 = vld [vmem:[#allocation13 + $0xa4] sm:$0xf]
        %v4234 = vld [vmem:[#allocation13 + $0xa8] sm:$0xf]
        %v4235 = vld [vmem:[#allocation13 + $0xac] sm:$0xf]
        %v4236 = vld [vmem:[#allocation13 + $0xb0] sm:$0xf]
        %v4237 = vld [vmem:[#allocation13 + $0xb4] sm:$0xf]
        %v4238 = vld [vmem:[#allocation13 + $0xb8] sm:$0xf]
        %v4239 = vld [vmem:[#allocation13 + $0xbc] sm:$0xf]
        %v4240 = vld [vmem:[#allocation13 + $0xc0] sm:$0xf]
        %v4241 = vld [vmem:[#allocation13 + $0xc4] sm:$0xf]
        %v4242 = vld [vmem:[#allocation13 + $0xc8] sm:$0xf]
        %v4243 = vld [vmem:[#allocation13 + $0xcc] sm:$0xf]
        %v4244 = vld [vmem:[#allocation13 + $0xd0] sm:$0xf]
        %v4245 = vld [vmem:[#allocation13 + $0xd4] sm:$0xf]
        %v4246 = vld [vmem:[#allocation13 + $0xd8] sm:$0xf]
        %v4247 = vld [vmem:[#allocation13 + $0xdc] sm:$0xf]
        %v4248 = vld [vmem:[#allocation13 + $0xe0] sm:$0xf]
        %v4249 = vld [vmem:[#allocation13 + $0xe4] sm:$0xf]
        %v4250 = vld [vmem:[#allocation13 + $0xe8] sm:$0xf]
        %v4251 = vld [vmem:[#allocation13 + $0xec] sm:$0xf]
        %v4252 = vld [vmem:[#allocation13 + $0xf0] sm:$0xf]
        %v4253 = vld [vmem:[#allocation13 + $0xf4] sm:$0xf]
        %v4254 = vld [vmem:[#allocation13 + $0xf8] sm:$0xf]
        %v4255 = vld [vmem:[#allocation13 + $0xfc] sm:$0xf]
        %v4256 = vld [vmem:[#allocation14 + $0x6] sm:$0x1]
        %v4257 = vlaneseq
        %v4258 = vshrl.u32 %v4257, 7
        %v4259 = vsub.s32 0, %v4258
        %v4260 = vrot.slane %v4256, %v4259
        %v4325 = vunpack.c.l.b16 %v4192
        %v4326 = vunpack.c.l.b16 %v4193
        %v4327 = vunpack.c.l.b16 %v4194
        %v4328 = vunpack.c.l.b16 %v4195
        %v4329 = vunpack.c.l.b16 %v4196
        %v4330 = vunpack.c.l.b16 %v4197
        %v4331 = vunpack.c.l.b16 %v4198
        %v4332 = vunpack.c.l.b16 %v4199
        %v4333 = vunpack.c.l.b16 %v4200
        %v4334 = vunpack.c.l.b16 %v4201
        %v4335 = vunpack.c.l.b16 %v4202
        %v4336 = vunpack.c.l.b16 %v4203
        %v4337 = vunpack.c.l.b16 %v4204
        %v4338 = vunpack.c.l.b16 %v4205
        %v4339 = vunpack.c.l.b16 %v4206
        %v4340 = vunpack.c.l.b16 %v4207
        %v4341 = vunpack.c.l.b16 %v4208
        %v4342 = vunpack.c.l.b16 %v4209
        %v4343 = vunpack.c.l.b16 %v4210
        %v4344 = vunpack.c.l.b16 %v4211
        %v4345 = vunpack.c.l.b16 %v4212
        %v4346 = vunpack.c.l.b16 %v4213
        %v4347 = vunpack.c.l.b16 %v4214
        %v4348 = vunpack.c.l.b16 %v4215
        %v4349 = vunpack.c.l.b16 %v4216
        %v4350 = vunpack.c.l.b16 %v4217
        %v4351 = vunpack.c.l.b16 %v4218
        %v4352 = vunpack.c.l.b16 %v4219
        %v4353 = vunpack.c.l.b16 %v4220
        %v4354 = vunpack.c.l.b16 %v4221
        %v4355 = vunpack.c.l.b16 %v4222
        %v4356 = vunpack.c.l.b16 %v4223
        %v4357 = vunpack.c.l.b16 %v4224
        %v4358 = vunpack.c.l.b16 %v4225
        %v4359 = vunpack.c.l.b16 %v4226
        %v4360 = vunpack.c.l.b16 %v4227
        %v4361 = vunpack.c.l.b16 %v4228
        %v4362 = vunpack.c.l.b16 %v4229
        %v4363 = vunpack.c.l.b16 %v4230
        %v4364 = vunpack.c.l.b16 %v4231
        %v4365 = vunpack.c.l.b16 %v4232
        %v4366 = vunpack.c.l.b16 %v4233
        %v4367 = vunpack.c.l.b16 %v4234
        %v4368 = vunpack.c.l.b16 %v4235
        %v4369 = vunpack.c.l.b16 %v4236
        %v4370 = vunpack.c.l.b16 %v4237
        %v4371 = vunpack.c.l.b16 %v4238
        %v4372 = vunpack.c.l.b16 %v4239
        %v4373 = vunpack.c.l.b16 %v4240
        %v4374 = vunpack.c.l.b16 %v4241
        %v4375 = vunpack.c.l.b16 %v4242
        %v4376 = vunpack.c.l.b16 %v4243
        %v4377 = vunpack.c.l.b16 %v4244
        %v4378 = vunpack.c.l.b16 %v4245
        %v4379 = vunpack.c.l.b16 %v4246
        %v4380 = vunpack.c.l.b16 %v4247
        %v4381 = vunpack.c.l.b16 %v4248
        %v4382 = vunpack.c.l.b16 %v4249
        %v4383 = vunpack.c.l.b16 %v4250
        %v4384 = vunpack.c.l.b16 %v4251
        %v4385 = vunpack.c.l.b16 %v4252
        %v4386 = vunpack.c.l.b16 %v4253
        %v4387 = vunpack.c.l.b16 %v4254
        %v4388 = vunpack.c.l.b16 %v4255
        %v4389 = vpack.c.b16 %v4326, %v4325
        %v4390 = vpack.c.b16 %v4328, %v4327
        %v4391 = vpack.c.b16 %v4330, %v4329
        %v4392 = vpack.c.b16 %v4332, %v4331
        %v4393 = vpack.c.b16 %v4334, %v4333
        %v4394 = vpack.c.b16 %v4336, %v4335
        %v4395 = vpack.c.b16 %v4338, %v4337
        %v4396 = vpack.c.b16 %v4340, %v4339
        %v4397 = vpack.c.b16 %v4342, %v4341
        %v4398 = vpack.c.b16 %v4344, %v4343
        %v4399 = vpack.c.b16 %v4346, %v4345
        %v4400 = vpack.c.b16 %v4348, %v4347
        %v4401 = vpack.c.b16 %v4350, %v4349
        %v4402 = vpack.c.b16 %v4352, %v4351
        %v4403 = vpack.c.b16 %v4354, %v4353
        %v4404 = vpack.c.b16 %v4356, %v4355
        %v4405 = vpack.c.b16 %v4358, %v4357
        %v4406 = vpack.c.b16 %v4360, %v4359
        %v4407 = vpack.c.b16 %v4362, %v4361
        %v4408 = vpack.c.b16 %v4364, %v4363
        %v4409 = vpack.c.b16 %v4366, %v4365
        %v4410 = vpack.c.b16 %v4368, %v4367
        %v4411 = vpack.c.b16 %v4370, %v4369
        %v4412 = vpack.c.b16 %v4372, %v4371
        %v4413 = vpack.c.b16 %v4374, %v4373
        %v4414 = vpack.c.b16 %v4376, %v4375
        %v4415 = vpack.c.b16 %v4378, %v4377
        %v4416 = vpack.c.b16 %v4380, %v4379
        %v4417 = vpack.c.b16 %v4382, %v4381
        %v4418 = vpack.c.b16 %v4384, %v4383
        %v4419 = vpack.c.b16 %v4386, %v4385
        %v4420 = vpack.c.b16 %v4388, %v4387
        %4453 = vmatprep.subr.bf16.mxu0 0
        %4454 = vmatpush1.bf16.msra.mxu0 %v4396
        %4455 = vmatprep.subr.bf16.mxu0 0
        %4456 = vmatpush1.bf16.msra.mxu0 %v4395
        %4457 = vmatprep.subr.bf16.mxu0 0
        %4458 = vmatpush1.bf16.msra.mxu0 %v4394
        %4459 = vmatprep.subr.bf16.mxu0 0
        %4460 = vmatpush1.bf16.msra.mxu0 %v4393
        %4461 = vmatprep.subr.bf16.mxu0 0
        %4462 = vmatpush1.bf16.msra.mxu0 %v4392
        %4463 = vmatprep.subr.bf16.mxu0 0
        %4464 = vmatpush1.bf16.msra.mxu0 %v4391
        %4465 = vmatprep.subr.bf16.mxu0 0
        %4466 = vmatpush1.bf16.msra.mxu0 %v4390
        %4467 = vmatprep.subr.bf16.mxu0 0
        %4468 = vmatpush1.bf16.msra.mxu0 %v4389
        %4469 = vmatprep.subr.bf16.mxu0 0
        %4470 = vmatpush2.bf16.msra.mxu0 %v4404
        %4471 = vmatprep.subr.bf16.mxu0 0
        %4472 = vmatpush2.bf16.msra.mxu0 %v4403
        %4473 = vmatprep.subr.bf16.mxu0 0
        %4474 = vmatpush2.bf16.msra.mxu0 %v4402
        %4475 = vmatprep.subr.bf16.mxu0 0
        %4476 = vmatpush2.bf16.msra.mxu0 %v4401
        %4477 = vmatprep.subr.bf16.mxu0 0
        %4478 = vmatpush2.bf16.msra.mxu0 %v4400
        %4479 = vmatprep.subr.bf16.mxu0 0
        %4480 = vmatpush2.bf16.msra.mxu0 %v4399
        %4481 = vmatprep.subr.bf16.mxu0 0
        %4482 = vmatpush2.bf16.msra.mxu0 %v4398
        %4483 = vmatprep.subr.bf16.mxu0 0
        %4484 = vmatpush2.bf16.msra.mxu0 %v4397
        %4485 = vmatprep.mubr.bf16.mxu0 %v4161
        %4486 = vmatmul.mubr.bf16.gmra.mxu0 %v4160
        %v4487 = vpop.f32.mrf.mxu0
        %v4488 = vadd.f32 %v4260, %v4487
        %v4489 = vpop.f32.mrf.mxu0
        %v4490 = vpop.f32.mrf.mxu0
        %v4491 = vadd.f32 %v4260, %v4490
        %v4492 = vpop.f32.mrf.mxu0
        %4493 = vmatprep.mubr.bf16.mxu0 %v4165
        %4494 = vmatmul.mubr.bf16.gmra.mxu0 %v4164
        %v4495 = vpop.f32.mrf.mxu0
        %v4496 = vadd.f32 %v4260, %v4495
        %v4497 = vpop.f32.mrf.mxu0
        %v4498 = vpop.f32.mrf.mxu0
        %v4499 = vadd.f32 %v4260, %v4498
        %v4500 = vpop.f32.mrf.mxu0
        %4501 = vmatprep.mubr.bf16.mxu0 %v4169
        %4502 = vmatmul.mubr.bf16.gmra.mxu0 %v4168
        %v4503 = vpop.f32.mrf.mxu0
        %v4504 = vadd.f32 %v4260, %v4503
        %v4505 = vpop.f32.mrf.mxu0
        %v4506 = vpop.f32.mrf.mxu0
        %v4507 = vadd.f32 %v4260, %v4506
        %v4508 = vpop.f32.mrf.mxu0
        %4509 = vmatprep.mubr.bf16.mxu0 %v4173
        %4510 = vmatmul.mubr.bf16.gmra.mxu0 %v4172
        %v4511 = vpop.f32.mrf.mxu0
        %v4512 = vadd.f32 %v4260, %v4511
        %v4513 = vpop.f32.mrf.mxu0
        %v4514 = vpop.f32.mrf.mxu0
        %v4515 = vadd.f32 %v4260, %v4514
        %v4516 = vpop.f32.mrf.mxu0
        %4517 = vmatprep.mubr.bf16.mxu0 %v4177
        %4518 = vmatmul.mubr.bf16.gmra.mxu0 %v4176
        %v4519 = vpop.f32.mrf.mxu0
        %v4520 = vadd.f32 %v4260, %v4519
        %v4521 = vpop.f32.mrf.mxu0
        %v4522 = vpop.f32.mrf.mxu0
        %v4523 = vadd.f32 %v4260, %v4522
        %v4524 = vpop.f32.mrf.mxu0
        %4525 = vmatprep.mubr.bf16.mxu0 %v4181
        %4526 = vmatmul.mubr.bf16.gmra.mxu0 %v4180
        %v4527 = vpop.f32.mrf.mxu0
        %v4528 = vadd.f32 %v4260, %v4527
        %v4529 = vpop.f32.mrf.mxu0
        %v4530 = vpop.f32.mrf.mxu0
        %v4531 = vadd.f32 %v4260, %v4530
        %v4532 = vpop.f32.mrf.mxu0
        %4533 = vmatprep.mubr.bf16.mxu0 %v4185
        %4534 = vmatmul.mubr.bf16.gmra.mxu0 %v4184
        %v4535 = vpop.f32.mrf.mxu0
        %v4536 = vadd.f32 %v4260, %v4535
        %v4537 = vpop.f32.mrf.mxu0
        %v4538 = vpop.f32.mrf.mxu0
        %v4539 = vadd.f32 %v4260, %v4538
        %v4540 = vpop.f32.mrf.mxu0
        %4541 = vmatprep.mubr.bf16.mxu0 %v4189
        %4542 = vmatmul.mubr.bf16.gmra.mxu0 %v4188
        %v4543 = vpop.f32.mrf.mxu0
        %v4544 = vadd.f32 %v4260, %v4543
        %v4545 = vpop.f32.mrf.mxu0
        %v4546 = vpop.f32.mrf.mxu0
        %v4547 = vadd.f32 %v4260, %v4546
        %v4548 = vpop.f32.mrf.mxu0
        %4549 = vdwg.mxu0
        %4550 = vmatprep.subr.bf16.mxu0 0
        %4551 = vmatpush1.bf16.msra.mxu0 %v4412
        %4552 = vmatprep.subr.bf16.mxu0 0
        %4553 = vmatpush1.bf16.msra.mxu0 %v4411
        %4554 = vmatprep.subr.bf16.mxu0 0
        %4555 = vmatpush1.bf16.msra.mxu0 %v4410
        %4556 = vmatprep.subr.bf16.mxu0 0
        %4557 = vmatpush1.bf16.msra.mxu0 %v4409
        %4558 = vmatprep.subr.bf16.mxu0 0
        %4559 = vmatpush1.bf16.msra.mxu0 %v4408
        %4560 = vmatprep.subr.bf16.mxu0 0
        %4561 = vmatpush1.bf16.msra.mxu0 %v4407
        %4562 = vmatprep.subr.bf16.mxu0 0
        %4563 = vmatpush1.bf16.msra.mxu0 %v4406
        %4564 = vmatprep.subr.bf16.mxu0 0
        %4565 = vmatpush1.bf16.msra.mxu0 %v4405
        %4566 = vmatprep.subr.bf16.mxu0 0
        %4567 = vmatpush2.bf16.msra.mxu0 %v4420
        %4568 = vmatprep.subr.bf16.mxu0 0
        %4569 = vmatpush2.bf16.msra.mxu0 %v4419
        %4570 = vmatprep.subr.bf16.mxu0 0
        %4571 = vmatpush2.bf16.msra.mxu0 %v4418
        %4572 = vmatprep.subr.bf16.mxu0 0
        %4573 = vmatpush2.bf16.msra.mxu0 %v4417
        %4574 = vmatprep.subr.bf16.mxu0 0
        %4575 = vmatpush2.bf16.msra.mxu0 %v4416
        %4576 = vmatprep.subr.bf16.mxu0 0
        %4577 = vmatpush2.bf16.msra.mxu0 %v4415
        %4578 = vmatprep.subr.bf16.mxu0 0
        %4579 = vmatpush2.bf16.msra.mxu0 %v4414
        %4580 = vmatprep.subr.bf16.mxu0 0
        %4581 = vmatpush2.bf16.msra.mxu0 %v4413
        %4582 = vmatprep.mubr.bf16.mxu0 %v4163
        %4583 = vmatmul.mubr.bf16.gmra.mxu0 %v4162
        %v4584 = vpop.f32.mrf.mxu0
        %v4585 = vadd.f32 %v4488, %v4584
        %v4586 = vpop.f32.mrf.mxu0
        %v4587 = vpop.f32.mrf.mxu0
        %v4588 = vadd.f32 %v4491, %v4587
        %v4589 = vpop.f32.mrf.mxu0
        %4590 = vmatprep.mubr.bf16.mxu0 %v4167
        %4591 = vmatmul.mubr.bf16.gmra.mxu0 %v4166
        %v4592 = vpop.f32.mrf.mxu0
        %v4593 = vadd.f32 %v4496, %v4592
        %v4594 = vpop.f32.mrf.mxu0
        %v4595 = vpop.f32.mrf.mxu0
        %v4596 = vadd.f32 %v4499, %v4595
        %v4597 = vpop.f32.mrf.mxu0
        %4598 = vmatprep.mubr.bf16.mxu0 %v4171
        %4599 = vmatmul.mubr.bf16.gmra.mxu0 %v4170
        %v4600 = vpop.f32.mrf.mxu0
        %v4601 = vadd.f32 %v4504, %v4600
        %v4602 = vpop.f32.mrf.mxu0
        %v4603 = vpop.f32.mrf.mxu0
        %v4604 = vadd.f32 %v4507, %v4603
        %v4605 = vpop.f32.mrf.mxu0
        %4606 = vmatprep.mubr.bf16.mxu0 %v4175
        %4607 = vmatmul.mubr.bf16.gmra.mxu0 %v4174
        %v4608 = vpop.f32.mrf.mxu0
        %v4609 = vadd.f32 %v4512, %v4608
        %v4610 = vpop.f32.mrf.mxu0
        %v4611 = vpop.f32.mrf.mxu0
        %v4612 = vadd.f32 %v4515, %v4611
        %v4613 = vpop.f32.mrf.mxu0
        %4614 = vmatprep.mubr.bf16.mxu0 %v4179
        %4615 = vmatmul.mubr.bf16.gmra.mxu0 %v4178
        %v4616 = vpop.f32.mrf.mxu0
        %v4617 = vadd.f32 %v4520, %v4616
        %v4618 = vpop.f32.mrf.mxu0
        %v4619 = vpop.f32.mrf.mxu0
        %v4620 = vadd.f32 %v4523, %v4619
        %v4621 = vpop.f32.mrf.mxu0
        %4622 = vmatprep.mubr.bf16.mxu0 %v4183
        %4623 = vmatmul.mubr.bf16.gmra.mxu0 %v4182
        %v4624 = vpop.f32.mrf.mxu0
        %v4625 = vadd.f32 %v4528, %v4624
        %v4626 = vpop.f32.mrf.mxu0
        %v4627 = vpop.f32.mrf.mxu0
        %v4628 = vadd.f32 %v4531, %v4627
        %v4629 = vpop.f32.mrf.mxu0
        %4630 = vmatprep.mubr.bf16.mxu0 %v4187
        %4631 = vmatmul.mubr.bf16.gmra.mxu0 %v4186
        %v4632 = vpop.f32.mrf.mxu0
        %v4633 = vadd.f32 %v4536, %v4632
        %v4634 = vpop.f32.mrf.mxu0
        %v4635 = vpop.f32.mrf.mxu0
        %v4636 = vadd.f32 %v4539, %v4635
        %v4637 = vpop.f32.mrf.mxu0
        %4638 = vmatprep.mubr.bf16.mxu0 %v4191
        %4639 = vmatmul.mubr.bf16.gmra.mxu0 %v4190
        %v4640 = vpop.f32.mrf.mxu0
        %v4641 = vadd.f32 %v4544, %v4640
        %v4642 = vpop.f32.mrf.mxu0
        %v4643 = vpop.f32.mrf.mxu0
        %v4644 = vadd.f32 %v4547, %v4643
        %v4645 = vpop.f32.mrf.mxu0
        %4646 = vdwg.mxu0
        %v4647 = vadd.f32 %v4585, %v3632
        %v4648 = vadd.f32 %v4588, %v3633
        %v4649 = vadd.f32 %v4593, %v3634
        %v4650 = vadd.f32 %v4596, %v3635
        %v4651 = vadd.f32 %v4601, %v3636
        %v4652 = vadd.f32 %v4604, %v3637
        %v4653 = vadd.f32 %v4609, %v3638
        %v4654 = vadd.f32 %v4612, %v3639
        %v4655 = vadd.f32 %v4617, %v3640
        %v4656 = vadd.f32 %v4620, %v3641
        %v4657 = vadd.f32 %v4625, %v3642
        %v4658 = vadd.f32 %v4628, %v3643
        %v4659 = vadd.f32 %v4633, %v3644
        %v4660 = vadd.f32 %v4636, %v3645
        %v4661 = vadd.f32 %v4641, %v3646
        %v4662 = vadd.f32 %v4644, %v3647
        %4663 = vadd.xlane.f32.xlu0 %v4647
        %v4664 = vpop.xlane.xlu0 %4663
        %4665 = vadd.xlane.f32.xlu0 %v4648
        %v4666 = vpop.xlane.xlu0 %4665
        %4667 = vadd.xlane.f32.xlu0 %v4649
        %v4668 = vpop.xlane.xlu0 %4667
        %4669 = vadd.xlane.f32.xlu0 %v4650
        %v4670 = vpop.xlane.xlu0 %4669
        %4671 = vadd.xlane.f32.xlu0 %v4651
        %v4672 = vpop.xlane.xlu0 %4671
        %4673 = vadd.xlane.f32.xlu0 %v4652
        %v4674 = vpop.xlane.xlu0 %4673
        %4675 = vadd.xlane.f32.xlu0 %v4653
        %v4676 = vpop.xlane.xlu0 %4675
        %4677 = vadd.xlane.f32.xlu0 %v4654
        %v4678 = vpop.xlane.xlu0 %4677
        %4679 = vadd.xlane.f32.xlu0 %v4655
        %v4680 = vpop.xlane.xlu0 %4679
        %4681 = vadd.xlane.f32.xlu0 %v4656
        %v4682 = vpop.xlane.xlu0 %4681
        %4683 = vadd.xlane.f32.xlu0 %v4657
        %v4684 = vpop.xlane.xlu0 %4683
        %4685 = vadd.xlane.f32.xlu0 %v4658
        %v4686 = vpop.xlane.xlu0 %4685
        %4687 = vadd.xlane.f32.xlu0 %v4659
        %v4688 = vpop.xlane.xlu0 %4687
        %4689 = vadd.xlane.f32.xlu0 %v4660
        %v4690 = vpop.xlane.xlu0 %4689
        %4691 = vadd.xlane.f32.xlu0 %v4661
        %v4692 = vpop.xlane.xlu0 %4691
        %4693 = vadd.xlane.f32.xlu0 %v4662
        %v4694 = vpop.xlane.xlu0 %4693
        %v4695 = vmul.f32 %v4664, %v3461
        %v4696 = vmul.f32 %v4666, %v3461
        %v4697 = vmul.f32 %v4668, %v3461
        %v4698 = vmul.f32 %v4670, %v3461
        %v4699 = vmul.f32 %v4672, %v3461
        %v4700 = vmul.f32 %v4674, %v3461
        %v4701 = vmul.f32 %v4676, %v3461
        %v4702 = vmul.f32 %v4678, %v3461
        %v4703 = vmul.f32 %v4680, %v3461
        %v4704 = vmul.f32 %v4682, %v3461
        %v4705 = vmul.f32 %v4684, %v3461
        %v4706 = vmul.f32 %v4686, %v3461
        %v4707 = vmul.f32 %v4688, %v3461
        %v4708 = vmul.f32 %v4690, %v3461
        %v4709 = vmul.f32 %v4692, %v3461
        %v4710 = vmul.f32 %v4694, %v3461
        %v4711 = vsub.f32 %v4647, %v4695
        %v4712 = vsub.f32 %v4648, %v4696
        %v4713 = vsub.f32 %v4649, %v4697
        %v4714 = vsub.f32 %v4650, %v4698
        %v4715 = vsub.f32 %v4651, %v4699
        %v4716 = vsub.f32 %v4652, %v4700
        %v4717 = vsub.f32 %v4653, %v4701
        %v4718 = vsub.f32 %v4654, %v4702
        %v4719 = vsub.f32 %v4655, %v4703
        %v4720 = vsub.f32 %v4656, %v4704
        %v4721 = vsub.f32 %v4657, %v4705
        %v4722 = vsub.f32 %v4658, %v4706
        %v4723 = vsub.f32 %v4659, %v4707
        %v4724 = vsub.f32 %v4660, %v4708
        %v4725 = vsub.f32 %v4661, %v4709
        %v4726 = vsub.f32 %v4662, %v4710
        %v4727 = vmul.f32 %v4711, %v4711
        %v4728 = vmul.f32 %v4712, %v4712
        %v4729 = vmul.f32 %v4713, %v4713
        %v4730 = vmul.f32 %v4714, %v4714
        %v4731 = vmul.f32 %v4715, %v4715
        %v4732 = vmul.f32 %v4716, %v4716
        %v4733 = vmul.f32 %v4717, %v4717
        %v4734 = vmul.f32 %v4718, %v4718
        %v4735 = vmul.f32 %v4719, %v4719
        %v4736 = vmul.f32 %v4720, %v4720
        %v4737 = vmul.f32 %v4721, %v4721
        %v4738 = vmul.f32 %v4722, %v4722
        %v4739 = vmul.f32 %v4723, %v4723
        %v4740 = vmul.f32 %v4724, %v4724
        %v4741 = vmul.f32 %v4725, %v4725
        %v4742 = vmul.f32 %v4726, %v4726
        %4743 = vadd.xlane.f32.xlu0 %v4727
        %v4744 = vpop.xlane.xlu0 %4743
        %4745 = vadd.xlane.f32.xlu0 %v4728
        %v4746 = vpop.xlane.xlu0 %4745
        %4747 = vadd.xlane.f32.xlu0 %v4729
        %v4748 = vpop.xlane.xlu0 %4747
        %4749 = vadd.xlane.f32.xlu0 %v4730
        %v4750 = vpop.xlane.xlu0 %4749
        %4751 = vadd.xlane.f32.xlu0 %v4731
        %v4752 = vpop.xlane.xlu0 %4751
        %4753 = vadd.xlane.f32.xlu0 %v4732
        %v4754 = vpop.xlane.xlu0 %4753
        %4755 = vadd.xlane.f32.xlu0 %v4733
        %v4756 = vpop.xlane.xlu0 %4755
        %4757 = vadd.xlane.f32.xlu0 %v4734
        %v4758 = vpop.xlane.xlu0 %4757
        %4759 = vadd.xlane.f32.xlu0 %v4735
        %v4760 = vpop.xlane.xlu0 %4759
        %4761 = vadd.xlane.f32.xlu0 %v4736
        %v4762 = vpop.xlane.xlu0 %4761
        %4763 = vadd.xlane.f32.xlu0 %v4737
        %v4764 = vpop.xlane.xlu0 %4763
        %4765 = vadd.xlane.f32.xlu0 %v4738
        %v4766 = vpop.xlane.xlu0 %4765
        %4767 = vadd.xlane.f32.xlu0 %v4739
        %v4768 = vpop.xlane.xlu0 %4767
        %4769 = vadd.xlane.f32.xlu0 %v4740
        %v4770 = vpop.xlane.xlu0 %4769
        %4771 = vadd.xlane.f32.xlu0 %v4741
        %v4772 = vpop.xlane.xlu0 %4771
        %4773 = vadd.xlane.f32.xlu0 %v4742
        %v4774 = vpop.xlane.xlu0 %4773
        %v4775 = vmul.f32 %v4744, %v3461
        %v4776 = vmul.f32 %v4746, %v3461
        %v4777 = vmul.f32 %v4748, %v3461
        %v4778 = vmul.f32 %v4750, %v3461
        %v4779 = vmul.f32 %v4752, %v3461
        %v4780 = vmul.f32 %v4754, %v3461
        %v4781 = vmul.f32 %v4756, %v3461
        %v4782 = vmul.f32 %v4758, %v3461
        %v4783 = vmul.f32 %v4760, %v3461
        %v4784 = vmul.f32 %v4762, %v3461
        %v4785 = vmul.f32 %v4764, %v3461
        %v4786 = vmul.f32 %v4766, %v3461
        %v4787 = vmul.f32 %v4768, %v3461
        %v4788 = vmul.f32 %v4770, %v3461
        %v4789 = vmul.f32 %v4772, %v3461
        %v4790 = vmul.f32 %v4774, %v3461
        %v4791 = vadd.f32 %v4775, 1e-05
        %v4792 = vadd.f32 %v4776, 1e-05
        %v4793 = vadd.f32 %v4777, 1e-05
        %v4794 = vadd.f32 %v4778, 1e-05
        %v4795 = vadd.f32 %v4779, 1e-05
        %v4796 = vadd.f32 %v4780, 1e-05
        %v4797 = vadd.f32 %v4781, 1e-05
        %v4798 = vadd.f32 %v4782, 1e-05
        %v4799 = vadd.f32 %v4783, 1e-05
        %v4800 = vadd.f32 %v4784, 1e-05
        %v4801 = vadd.f32 %v4785, 1e-05
        %v4802 = vadd.f32 %v4786, 1e-05
        %v4803 = vadd.f32 %v4787, 1e-05
        %v4804 = vadd.f32 %v4788, 1e-05
        %v4805 = vadd.f32 %v4789, 1e-05
        %v4806 = vadd.f32 %v4790, 1e-05
        %v4807 = vrsqrt.pop %v4791
        %v4808 = vrsqrt.pop %v4792
        %v4809 = vrsqrt.pop %v4793
        %v4810 = vrsqrt.pop %v4794
        %v4811 = vrsqrt.pop %v4795
        %v4812 = vrsqrt.pop %v4796
        %v4813 = vrsqrt.pop %v4797
        %v4814 = vrsqrt.pop %v4798
        %v4815 = vrsqrt.pop %v4799
        %v4816 = vrsqrt.pop %v4800
        %v4817 = vrsqrt.pop %v4801
        %v4818 = vrsqrt.pop %v4802
        %v4819 = vrsqrt.pop %v4803
        %v4820 = vrsqrt.pop %v4804
        %v4821 = vrsqrt.pop %v4805
        %v4822 = vrsqrt.pop %v4806
        %v4823 = vmul.f32 %v4711, %v4807
        %v4824 = vmul.f32 %v4712, %v4808
        %v4825 = vmul.f32 %v4713, %v4809
        %v4826 = vmul.f32 %v4714, %v4810
        %v4827 = vmul.f32 %v4715, %v4811
        %v4828 = vmul.f32 %v4716, %v4812
        %v4829 = vmul.f32 %v4717, %v4813
        %v4830 = vmul.f32 %v4718, %v4814
        %v4831 = vmul.f32 %v4719, %v4815
        %v4832 = vmul.f32 %v4720, %v4816
        %v4833 = vmul.f32 %v4721, %v4817
        %v4834 = vmul.f32 %v4722, %v4818
        %v4835 = vmul.f32 %v4723, %v4819
        %v4836 = vmul.f32 %v4724, %v4820
        %v4837 = vmul.f32 %v4725, %v4821
        %v4838 = vmul.f32 %v4726, %v4822
        %v4839 = vld [vmem:[#allocation14 + $0x7] sm:$0x1]
        %v4840 = vlaneseq
        %v4841 = vshrl.u32 %v4840, 7
        %v4842 = vsub.s32 0, %v4841
        %v4843 = vrot.slane %v4839, %v4842
        %v4844 = vmul.f32 %v4823, %v4843
        %v4845 = vmul.f32 %v4824, %v4843
        %v4846 = vmul.f32 %v4825, %v4843
        %v4847 = vmul.f32 %v4826, %v4843
        %v4848 = vmul.f32 %v4827, %v4843
        %v4849 = vmul.f32 %v4828, %v4843
        %v4850 = vmul.f32 %v4829, %v4843
        %v4851 = vmul.f32 %v4830, %v4843
        %v4852 = vmul.f32 %v4831, %v4843
        %v4853 = vmul.f32 %v4832, %v4843
        %v4854 = vmul.f32 %v4833, %v4843
        %v4855 = vmul.f32 %v4834, %v4843
        %v4856 = vmul.f32 %v4835, %v4843
        %v4857 = vmul.f32 %v4836, %v4843
        %v4858 = vmul.f32 %v4837, %v4843
        %v4859 = vmul.f32 %v4838, %v4843
        %v4860 = vld [vmem:[#allocation14 + $0x8] sm:$0x1]
        %v4861 = vlaneseq
        %v4862 = vshrl.u32 %v4861, 7
        %v4863 = vsub.s32 0, %v4862
        %v4864 = vrot.slane %v4860, %v4863
        %v4865 = vadd.f32 %v4844, %v4864
        %v4866 = vadd.f32 %v4845, %v4864
        %v4867 = vadd.f32 %v4846, %v4864
        %v4868 = vadd.f32 %v4847, %v4864
        %v4869 = vadd.f32 %v4848, %v4864
        %v4870 = vadd.f32 %v4849, %v4864
        %v4871 = vadd.f32 %v4850, %v4864
        %v4872 = vadd.f32 %v4851, %v4864
        %v4873 = vadd.f32 %v4852, %v4864
        %v4874 = vadd.f32 %v4853, %v4864
        %v4875 = vadd.f32 %v4854, %v4864
        %v4876 = vadd.f32 %v4855, %v4864
        %v4877 = vadd.f32 %v4856, %v4864
        %v4878 = vadd.f32 %v4857, %v4864
        %v4879 = vadd.f32 %v4858, %v4864
        %v4880 = vadd.f32 %v4859, %v4864
        %4881 = vst [vmem:[%s471] sm:$0xff] %v4865
        %4882 = vst [vmem:[%s471 + $0x8] sm:$0xff] %v4866
        %4883 = vst [vmem:[%s471 + $0x10] sm:$0xff] %v4867
        %4884 = vst [vmem:[%s471 + $0x18] sm:$0xff] %v4868
        %4885 = vst [vmem:[%s471 + $0x20] sm:$0xff] %v4869
        %4886 = vst [vmem:[%s471 + $0x28] sm:$0xff] %v4870
        %4887 = vst [vmem:[%s471 + $0x30] sm:$0xff] %v4871
        %4888 = vst [vmem:[%s471 + $0x38] sm:$0xff] %v4872
        %4889 = vst [vmem:[%s471 + $0x40] sm:$0xff] %v4873
        %4890 = vst [vmem:[%s471 + $0x48] sm:$0xff] %v4874
        %4891 = vst [vmem:[%s471 + $0x50] sm:$0xff] %v4875
        %4892 = vst [vmem:[%s471 + $0x58] sm:$0xff] %v4876
        %4893 = vst [vmem:[%s471 + $0x60] sm:$0xff] %v4877
        %4894 = vst [vmem:[%s471 + $0x68] sm:$0xff] %v4878
        %4895 = vst [vmem:[%s471 + $0x70] sm:$0xff] %v4879
        %4896 = vst [vmem:[%s471 + $0x78] sm:$0xff] %v4880
        %s4897 = sand.u32 %s239, 1
        %s4898 = scalar_lea.sflag [#allocation4], %s4897
        %s4899 = sand.u32 %s239, 1
        %s4900 = smul.addr %s4899, 128
        %s4901 = scalar_lea.vmem [#allocation16], %s4900
        // Predicated region
        $region89: #{tpu_custom_call.1} parent=55 // pred_check
          %p4902 = pneg %p249
        $region90: #{tpu_custom_call.1} parent=55 // pred_check_branch
          %4904 = sbr.rel (%p4902) target = $region92
        $region91: #{tpu_custom_call.1} parent=55 // pred_region
          %s4905 = smul.u32 16, %s32
          %s4907 = ssub.s32 2048, 2048
          %4908 = vsyncadd %s4898, %s4907
          %s4909 = smul.addr %s4905, 128
          %s4910 = scalar_lea.hbm %s9, %s4909
          %s4911 = sshll.u32 %s4901, 4
          %s4912 = int_to_ptr.vmem [resolvable:$true] %s4911
          %4917 = dma.vmem_to_hbm [thread:$0]  %s4912, 2048, %s4910, %s4898, 128, 128, 8
        $region92: #{tpu_custom_call.1} parent=55 // pred_fallthru
          _
      $region56: #{tpu_custom_call.1} parent=5 // pred_fallthru
        _
      %p4918 = scmp.le.s32.totalorder 2, %s27
      // Predicated region
      $region93: #{tpu_custom_call.1} parent=5 // pred_check
        %p4919 = pneg %p4918
      $region94: #{tpu_custom_call.1} parent=5 // pred_check_branch
        %4921 = sbr.rel (%p4919) target = $region96
      $region95: #{tpu_custom_call.1} parent=5 // pred_region
        %s4922 = ssub.s32 %s27, 2
        // Predicated region
        $region97: #{tpu_custom_call.1} parent=95 // pred_check
          %p4923 = pneg %p255
        $region98: #{tpu_custom_call.1} parent=95 // pred_check_branch
          %4925 = sbr.rel (%p4923) target = $region100
        $region99: #{tpu_custom_call.1} parent=95 // pred_region
          %s4926 = sand.u32 %s240, 1
          %s4927 = scalar_lea.sflag [#allocation4], %s4926
          %s4928 = sand.u32 %s240, 1
          %s4929 = smul.addr %s4928, 128
          %s4930 = scalar_lea.vmem [#allocation16], %s4929
          %4931 = dma.done %s4927, 2048
        $region100: #{tpu_custom_call.1} parent=95 // pred_fallthru
          _
      $region96: #{tpu_custom_call.1} parent=5 // pred_fallthru
        _
    $region6: #{tpu_custom_call.1} parent=1 // loop_footer
      %s31 = sadd.s32 1, %s27
    $region7: #{tpu_custom_call.1} parent=1 // loop_footer_branch
      %26 = sbr.rel target = $region3
    $region8: #{tpu_custom_call.1} parent=1 // loop_exit
      _
    %4932 = vsyncpa [#allocation3], 1
    %s4933 = scalar_lea.sflag [#allocation3], 1
    %4934 = vsyncpa %s4933, 1
    %4935 = vsyncpa [#allocation6], 1
    %s4936 = scalar_lea.sflag [#allocation6], 1
    %4937 = vsyncpa %s4936, 1
    %4938 = vsyncpa [#allocation9], 1
    %4939 = vsyncpa [#allocation12], 1
    %4940 = vsyncpa [#allocation15], 1
    %4941 = vsyncpa [#allocation4], 1
    %s4942 = scalar_lea.sflag [#allocation4], 1
    %4943 = vsyncpa %s4942, 1

</llo_original>
